<compile_context>
chip_gen: v7x
topology: tpu7x:2x2x1
jax: 0.10.0
libtpu: 0.0.40
codegen_flags: <defaults>
</compile_context>

<pallas_src>
import math

import jax
import jax.numpy as jnp
from jax import lax
from jax.experimental import pallas as pl
from jax.experimental.pallas import tpu as pltpu


# ---------------------------------------------------------------------------
# In-kernel helper: valid stride-(sy,1) conv of a pre-padded VMEM buffer as a
# single im2col matmul.
# ---------------------------------------------------------------------------
def _conv_im2col(x_ref, patch_ref, w_ref, b_ref, *, KH, KW, sy):
    """x_ref: (Hp, Wp, Cin) padded input scratch.
    patch_ref: (Ho*Wo, KH*KW*Cin) im2col scratch.
    w_ref: (KH*KW*Cin, Cout) weight matrix, rows ordered (dy, dx, cin).
    b_ref: (1, Cout).  Returns (Ho*Wo, Cout) f32."""
    Hp, Wp, Cin = x_ref.shape
    Ho = (Hp - KH) // sy + 1
    Wo = Wp - KW + 1
    x = x_ref[...]
    for dy in range(KH):
        if sy == 1:
            rows = x[dy:dy + Ho]                                    # (Ho, Wp, Cin)
        else:
            # stride-sy row selection (split leading dim, take phase 0)
            rows = x[dy:dy + Ho * sy].reshape(Ho, sy, Wp, Cin)[:, 0]
        for dx in range(KW):
            piece = rows[:, dx:dx + Wo, :].reshape(Ho * Wo, Cin)
            c0 = (dy * KW + dx) * Cin
            patch_ref[:, c0:c0 + Cin] = piece
    out = jnp.dot(patch_ref[...], w_ref[...],
                  preferred_element_type=jnp.float32)
    return out + b_ref[...]


# ---------------------------------------------------------------------------
# Fused forward kernel (one batch element per grid step)
# ---------------------------------------------------------------------------
def _degli_fused_kernel(z_ref, w0_ref, b0_ref, w1_ref, b1_ref,
                        wd0_ref, bd0_ref, wd1_ref, bd1_ref, alpha_ref,
                        o_ref,
                        p_e0, p_e1, p_d0, p_d1,
                        c_e0, c_e1, c_d0, c_d1):
    f32 = jnp.float32
    F = z_ref.shape[1]        # n_freq
    T = z_ref.shape[2]        # time frames

    z = z_ref[0]              # (F, T, 6)

    # --- encoder 0: ReplicationPad2d((1,1,1,2)) + Conv2d(6->w, (5,3), stride (2,1))
    # every element of p_e0 is overwritten, so no zero-init is needed.
    p_e0[1:1 + F, 1:1 + T, :] = z
    p_e0[0:1, 1:1 + T, :] = z[0:1]                     # replicate top row once
    p_e0[1 + F:2 + F, 1:1 + T, :] = z[F - 1:F]         # replicate bottom row twice
    p_e0[2 + F:3 + F, 1:1 + T, :] = z[F - 1:F]
    p_e0[:, 0:1, :] = p_e0[:, 1:2, :]                  # replicate left column
    p_e0[:, 1 + T:2 + T, :] = p_e0[:, T:1 + T, :]      # replicate right column
    e0 = _conv_im2col(p_e0, c_e0, w0_ref, b0_ref, KH=5, KW=3, sy=2)
    H0 = (p_e0.shape[0] - 5) // 2 + 1
    Wid = e0.shape[-1]                                 # widening
    e0 = e0.reshape(H0, T, Wid)
    e0r = jnp.maximum(e0, 0.0)                         # relu(e0); reused by the skip

    # --- encoder 1: ReLU -> zero pad (2,2)/(1,1) -> Conv2d(w->2w, (5,3), stride (2,1))
    p_e1[...] = jnp.zeros(p_e1.shape, f32)
    p_e1[2:2 + H0, 1:1 + T, :] = e0r
    e1 = _conv_im2col(p_e1, c_e1, w1_ref, b1_ref, KH=5, KW=3, sy=2)
    H1 = (p_e1.shape[0] - 5) // 2 + 1
    e1r = jnp.maximum(e1.reshape(H1, T, 2 * Wid), 0.0)

    # --- decoder 0: ReLU -> ConvTranspose2d(2w->w, (4,3), stride (2,1), pad (1,1))
    #     == zero-dilate rows by 2, zero-pad rows (2,2) / cols (1,1),
    #        stride-1 conv with flipped weights (weight prepared in wrapper).
    p_d0[...] = jnp.zeros(p_d0.shape, f32)
    for i in range(H1):
        p_d0[2 + 2 * i:3 + 2 * i, 1:1 + T, :] = e1r[i:i + 1]
    d0 = _conv_im2col(p_d0, c_d0, wd0_ref, bd0_ref, KH=4, KW=3, sy=1)
    Hd0 = p_d0.shape[0] - 4 + 1
    d0r = jnp.maximum(d0.reshape(Hd0, T, Wid), 0.0)

    # --- decoder 1 (last): ReLU(cat([d0, e0])) -> ConvTranspose2d(2w->2, (5,3), s(2,1), p(1,1))
    #     the channel concat is realized by writing the two halves into
    #     disjoint channel ranges of the dilated+padded scratch buffer.
    p_d1[...] = jnp.zeros(p_d1.shape, f32)
    for i in range(Hd0):
        p_d1[3 + 2 * i:4 + 2 * i, 1:1 + T, 0:Wid] = d0r[i:i + 1]
        p_d1[3 + 2 * i:4 + 2 * i, 1:1 + T, Wid:2 * Wid] = e0r[i:i + 1]
    d1 = _conv_im2col(p_d1, c_d1, wd1_ref, bd1_ref, KH=5, KW=3, sy=1)  # (F*T, 2)

    # --- linear finalizer (per-frequency scale) fused into the epilogue
    d1 = d1 * alpha_ref[...]                            # (F*T, 2) * (F*T, 1)
    o_ref[0] = d1.reshape(F, T, 2).astype(o_ref.dtype)


# ---------------------------------------------------------------------------
# Wrapper: one pallas_call for the whole DegliED forward
# ---------------------------------------------------------------------------
def degli_ed_forward(params, x, mag_replaced, consistent):
    """Inputs/outputs are NCHW (B, 2, F, T), exactly like the PyTorch module."""
    B, _, F, T = x.shape
    z = jnp.concatenate([x, mag_replaced, consistent], axis=1)      # (B, 6, F, T)
    z = jnp.transpose(z, (0, 2, 3, 1))                              # NHWC (B, F, T, 6)

    Wd = params['enc0_b'].shape[0]                                  # widening

    # im2col weight matrices, rows ordered (dy, dx, cin) to match the kernel.
    w0 = params['enc0_w'].reshape(5 * 3 * 6, Wd)
    w1 = params['enc1_w'].reshape(5 * 3 * Wd, 2 * Wd)
    # ConvTranspose == conv with spatially flipped, channel-swapped weights.
    wd0 = jnp.transpose(params['dec0_wt'][:, :, ::-1, ::-1],
                        (2, 3, 0, 1)).reshape(4 * 3 * 2 * Wd, Wd)
    wd1 = jnp.transpose(params['dec1_wt'][:, :, ::-1, ::-1],
                        (2, 3, 0, 1)).reshape(5 * 3 * 2 * Wd, 2)
    b0 = params['enc0_b'].reshape(1, -1)
    b1 = params['enc1_b'].reshape(1, -1)
    bd0 = params['dec0_b'].reshape(1, -1)
    bd1 = params['dec1_b'].reshape(1, -1)
    alpha = jnp.repeat(params['alpha'], T).reshape(F * T, 1)        # per-(f,t) scale

    # static geometry along the frequency axis
    F0 = F + 3                       # enc0 replication-padded rows (top 1, bottom 2)
    H0 = (F0 - 5) // 2 + 1           # e0 rows
    F1 = H0 + 4                      # enc1 zero-padded rows
    H1 = (F1 - 5) // 2 + 1           # e1 rows
    F2 = (2 * H1 - 1) + 4            # dec0 dilated + padded rows
    H2 = F2 - 4 + 1                  # d0 rows
    F3 = (2 * H2 - 1) + 6            # dec1 dilated + padded rows
    H3 = F3 - 5 + 1                  # output rows
    assert H3 == F and H2 == H0
    Tp = T + 2                       # time axis is padded by (1,1) everywhere

    out_nhwc = pl.pallas_call(
        _degli_fused_kernel,
        out_shape=jax.ShapeDtypeStruct((B, F, T, 2), jnp.float32),
        grid=(B,),
        in_specs=[
            pl.BlockSpec((1, F, T, 6), lambda b: (b, 0, 0, 0)),
            pl.BlockSpec(w0.shape, lambda b: (0, 0)),
            pl.BlockSpec(b0.shape, lambda b: (0, 0)),
            pl.BlockSpec(w1.shape, lambda b: (0, 0)),
            pl.BlockSpec(b1.shape, lambda b: (0, 0)),
            pl.BlockSpec(wd0.shape, lambda b: (0, 0)),
            pl.BlockSpec(bd0.shape, lambda b: (0, 0)),
            pl.BlockSpec(wd1.shape, lambda b: (0, 0)),
            pl.BlockSpec(bd1.shape, lambda b: (0, 0)),
            pl.BlockSpec(alpha.shape, lambda b: (0, 0)),
        ],
        out_specs=pl.BlockSpec((1, F, T, 2), lambda b: (b, 0, 0, 0)),
        scratch_shapes=[
            pltpu.VMEM((F0, Tp, 6), jnp.float32),          # enc0 padded input
            pltpu.VMEM((F1, Tp, Wd), jnp.float32),         # enc1 padded input
            pltpu.VMEM((F2, Tp, 2 * Wd), jnp.float32),     # dec0 dilated+padded input
            pltpu.VMEM((F3, Tp, 2 * Wd), jnp.float32),     # dec1 dilated+padded input
            pltpu.VMEM((H0 * T, 5 * 3 * 6), jnp.float32),      # im2col patches enc0
            pltpu.VMEM((H1 * T, 5 * 3 * Wd), jnp.float32),     # im2col patches enc1
            pltpu.VMEM((H2 * T, 4 * 3 * 2 * Wd), jnp.float32), # im2col patches dec0
            pltpu.VMEM((H3 * T, 5 * 3 * 2 * Wd), jnp.float32), # im2col patches dec1
        ],
        compiler_params=pltpu.CompilerParams(
            dimension_semantics=("parallel",)),
    )(z, w0, b0, w1, b1, wd0, bd0, wd1, bd1, alpha)

    return jnp.transpose(out_nhwc, (0, 3, 1, 2))                    # back to NCHW


# ---------------------------------------------------------------------------
# Deterministic parameters (shapes from DegliED.__init__ with the config above)
# ---------------------------------------------------------------------------
def init_params(key, n_freq=17, widening=8):
    ks = jax.random.split(key, 4)

    def conv_w(k, cout, cin, kh, kw, gain):
        # torch Conv2d weight (Cout, Cin, KH, KW), std = gain / sqrt(Cin*KH*KW)
        std = gain / math.sqrt(cin * kh * kw)
        wt = jax.random.normal(k, (cout, cin, kh, kw), jnp.float32) * std
        return jnp.transpose(wt, (2, 3, 1, 0))          # -> (KH, KW, Cin, Cout)

    def deconv_w(k, cin, cout, kh, kw, gain):
        # torch ConvTranspose2d weight (Cin, Cout, KH, KW), std = gain / sqrt(Cout*KH*KW)
        std = gain / math.sqrt(cout * kh * kw)
        return jax.random.normal(k, (cin, cout, kh, kw), jnp.float32) * std

    gain0 = math.sqrt(2.0)
    gain = math.sqrt(2.0 / (1.0 + 0.0 ** 2)) / math.sqrt(2.0)   # lamb = 0 -> 1.0

    return {
        'enc0_w': conv_w(ks[0], widening, 6, 5, 3, gain0),
        'enc0_b': jnp.full((widening,), 0.01, jnp.float32),
        'enc1_w': conv_w(ks[1], widening * 2, widening, 5, 3, gain),
        'enc1_b': jnp.full((widening * 2,), 0.01, jnp.float32),
        'dec0_wt': deconv_w(ks[2], widening * 2, widening, 4, 3, gain),
        'dec0_b': jnp.full((widening,), 0.01, jnp.float32),
        'dec1_wt': deconv_w(ks[3], widening * 2, 2, 5, 3, gain),
        'dec1_b': jnp.full((2,), 0.01, jnp.float32),
        'alpha': jnp.full((n_freq,), 0.001, jnp.float32),
    }


# ---------------------------------------------------------------------------
# Pure-JAX (XLA) reference of the same forward, used only for validation
# ---------------------------------------------------------------------------
def _reference_forward(params, x, mag_replaced, consistent):
    dn = ('NHWC', 'HWIO', 'NHWC')
    hi = lax.Precision.HIGHEST
    z = jnp.concatenate([x, mag_replaced, consistent], axis=1)
    z = jnp.transpose(z, (0, 2, 3, 1))
    zp = jnp.pad(z, ((0, 0), (1, 2), (1, 1), (0, 0)), mode='edge')
    e0 = lax.conv_general_dilated(zp, params['enc0_w'], (2, 1), 'VALID',
                                  dimension_numbers=dn, precision=hi) + params['enc0_b']
    e1 = lax.conv_general_dilated(jnp.maximum(e0, 0.0), params['enc1_w'], (2, 1),
                                  ((2, 2), (1, 1)), dimension_numbers=dn,
                                  precision=hi) + params['enc1_b']
    wd0 = jnp.transpose(params['dec0_wt'][:, :, ::-1, ::-1], (2, 3, 0, 1))
    d0 = lax.conv_general_dilated(jnp.maximum(e1, 0.0), wd0, (1, 1),
                                  ((2, 2), (1, 1)), lhs_dilation=(2, 1),
                                  dimension_numbers=dn, precision=hi) + params['dec0_b']
    cat = jnp.concatenate([d0, e0], axis=-1)
    wd1 = jnp.transpose(params['dec1_wt'][:, :, ::-1, ::-1], (2, 3, 0, 1))
    d1 = lax.conv_general_dilated(jnp.maximum(cat, 0.0), wd1, (1, 1),
                                  ((3, 3), (1, 1)), lhs_dilation=(2, 1),
                                  dimension_numbers=dn, precision=hi) + params['dec1_b']
    out = d1 * params['alpha'][None, :, None, None]
    return jnp.transpose(out, (0, 3, 1, 2))


# ---------------------------------------------------------------------------
if __name__ == "__main__":
    B, F, T = 2, 17, 8            # n_freq = 17 (like n_fft//2 + 1), 8 time frames
    key = jax.random.PRNGKey(0)
    k1, k2, k3, kp = jax.random.split(key, 4)
    x = jax.random.normal(k1, (B, 2, F, T), jnp.float32)
    mag_replaced = jax.random.normal(k2, (B, 2, F, T), jnp.float32)
    consistent = jax.random.normal(k3, (B, 2, F, T), jnp.float32)
    params = init_params(kp, n_freq=F, widening=8)

    out = jax.jit(degli_ed_forward)(params, x, mag_replaced, consistent)
    jax.block_until_ready(out)
    assert out.shape == (B, 2, F, T), out.shape
    assert out.dtype == jnp.float32

    ref = _reference_forward(params, x, mag_replaced, consistent)
    err = float(jnp.max(jnp.abs(out - ref)))
    tol = 2e-2 * float(jnp.max(jnp.abs(ref))) + 1e-6
    assert err <= tol, f"kernel/reference mismatch: max|diff|={err:.3e} (tol {tol:.3e})"
    print("KERNEL_OK")
</pallas_src>

<mosaic_0001>
module attributes {stable_mosaic.version = 11 : i64} {
  func.func @_degli_fused_kernel(%arg0: i32, %arg1: memref<1x17x8x6xf32, #tpu.memory_space<vmem>>, %arg2: memref<90x8xf32, #tpu.memory_space<vmem>>, %arg3: memref<1x8xf32, #tpu.memory_space<vmem>>, %arg4: memref<120x16xf32, #tpu.memory_space<vmem>>, %arg5: memref<1x16xf32, #tpu.memory_space<vmem>>, %arg6: memref<192x8xf32, #tpu.memory_space<vmem>>, %arg7: memref<1x8xf32, #tpu.memory_space<vmem>>, %arg8: memref<240x2xf32, #tpu.memory_space<vmem>>, %arg9: memref<1x2xf32, #tpu.memory_space<vmem>>, %arg10: memref<136x1xf32, #tpu.memory_space<vmem>>, %arg11: memref<1x17x8x2xf32, #tpu.memory_space<vmem>>, %arg12: memref<20x10x6xf32, #tpu.memory_space<vmem>>, %arg13: memref<12x10x8xf32, #tpu.memory_space<vmem>>, %arg14: memref<11x10x16xf32, #tpu.memory_space<vmem>>, %arg15: memref<21x10x16xf32, #tpu.memory_space<vmem>>, %arg16: memref<64x90xf32, #tpu.memory_space<vmem>>, %arg17: memref<32x120xf32, #tpu.memory_space<vmem>>, %arg18: memref<64x192xf32, #tpu.memory_space<vmem>>, %arg19: memref<136x240xf32, #tpu.memory_space<vmem>>) attributes {dimension_semantics = [#tpu.dimension_semantics<parallel>], iteration_bounds = array<i64: 2>, scalar_prefetch = 0 : i64, scratch_operands = 8 : i64, tpu.core_type = #tpu.core_type<tc>, window_params = [{transform_indices = @transform_0, window_bounds = array<i64: 1, 17, 8, 6>}, {pipeline_mode = #tpu.pipeline_mode<synchronous>, transform_indices = @transform_1, window_bounds = array<i64: 90, 8>}, {pipeline_mode = #tpu.pipeline_mode<synchronous>, transform_indices = @transform_2, window_bounds = array<i64: 1, 8>}, {pipeline_mode = #tpu.pipeline_mode<synchronous>, transform_indices = @transform_3, window_bounds = array<i64: 120, 16>}, {pipeline_mode = #tpu.pipeline_mode<synchronous>, transform_indices = @transform_4, window_bounds = array<i64: 1, 16>}, {pipeline_mode = #tpu.pipeline_mode<synchronous>, transform_indices = @transform_5, window_bounds = array<i64: 192, 8>}, {pipeline_mode = #tpu.pipeline_mode<synchronous>, transform_indices = @transform_6, window_bounds = array<i64: 1, 8>}, {pipeline_mode = #tpu.pipeline_mode<synchronous>, transform_indices = @transform_7, window_bounds = array<i64: 240, 2>}, {pipeline_mode = #tpu.pipeline_mode<synchronous>, transform_indices = @transform_8, window_bounds = array<i64: 1, 2>}, {pipeline_mode = #tpu.pipeline_mode<synchronous>, transform_indices = @transform_9, window_bounds = array<i64: 136, 1>}, {transform_indices = @transform_10, window_bounds = array<i64: 1, 17, 8, 2>}]} {
    %c0 = arith.constant 0 : index
    %c0_0 = arith.constant 0 : index
    %c0_1 = arith.constant 0 : index
    %c0_2 = arith.constant 0 : index
    %0 = vector.load %arg1[%c0, %c0_0, %c0_1, %c0_2] : memref<1x17x8x6xf32, #tpu.memory_space<vmem>>, vector<1x17x8x6xf32>
    %1 = vector.shape_cast %0 : vector<1x17x8x6xf32> to vector<17x8x6xf32>
    %c1 = arith.constant 1 : index
    %c1_3 = arith.constant 1 : index
    %c0_4 = arith.constant 0 : index
    %2 = vector.load %arg12[%c1, %c1_3, %c0_4] : memref<20x10x6xf32, #tpu.memory_space<vmem>>, vector<17x8x6xf32>
    tpu.vector_store %arg12[%c1, %c1_3, %c0_4], %1 {strides = array<i32>} : memref<20x10x6xf32, #tpu.memory_space<vmem>>, vector<17x8x6xf32>,
    %3 = vector.extract_strided_slice %1 {offsets = [0, 0, 0], sizes = [1, 8, 6], strides = [1, 1, 1]} : vector<17x8x6xf32> to vector<1x8x6xf32>
    %c0_5 = arith.constant 0 : index
    %c1_6 = arith.constant 1 : index
    %c0_7 = arith.constant 0 : index
    %4 = vector.load %arg12[%c0_5, %c1_6, %c0_7] : memref<20x10x6xf32, #tpu.memory_space<vmem>>, vector<1x8x6xf32>
    tpu.vector_store %arg12[%c0_5, %c1_6, %c0_7], %3 {strides = array<i32>} : memref<20x10x6xf32, #tpu.memory_space<vmem>>, vector<1x8x6xf32>,
    %5 = vector.extract_strided_slice %1 {offsets = [16, 0, 0], sizes = [1, 8, 6], strides = [1, 1, 1]} : vector<17x8x6xf32> to vector<1x8x6xf32>
    %c18 = arith.constant 18 : index
    %c1_8 = arith.constant 1 : index
    %c0_9 = arith.constant 0 : index
    %6 = vector.load %arg12[%c18, %c1_8, %c0_9] : memref<20x10x6xf32, #tpu.memory_space<vmem>>, vector<1x8x6xf32>
    tpu.vector_store %arg12[%c18, %c1_8, %c0_9], %5 {strides = array<i32>} : memref<20x10x6xf32, #tpu.memory_space<vmem>>, vector<1x8x6xf32>,
    %7 = vector.extract_strided_slice %1 {offsets = [16, 0, 0], sizes = [1, 8, 6], strides = [1, 1, 1]} : vector<17x8x6xf32> to vector<1x8x6xf32>
    %c19 = arith.constant 19 : index
    %c1_10 = arith.constant 1 : index
    %c0_11 = arith.constant 0 : index
    %8 = vector.load %arg12[%c19, %c1_10, %c0_11] : memref<20x10x6xf32, #tpu.memory_space<vmem>>, vector<1x8x6xf32>
    tpu.vector_store %arg12[%c19, %c1_10, %c0_11], %7 {strides = array<i32>} : memref<20x10x6xf32, #tpu.memory_space<vmem>>, vector<1x8x6xf32>,
    %c0_12 = arith.constant 0 : index
    %c1_13 = arith.constant 1 : index
    %c0_14 = arith.constant 0 : index
    %9 = vector.load %arg12[%c0_12, %c1_13, %c0_14] : memref<20x10x6xf32, #tpu.memory_space<vmem>>, vector<20x1x6xf32>
    %c0_15 = arith.constant 0 : index
    %c0_16 = arith.constant 0 : index
    %c0_17 = arith.constant 0 : index
    %10 = vector.load %arg12[%c0_15, %c0_16, %c0_17] : memref<20x10x6xf32, #tpu.memory_space<vmem>>, vector<20x1x6xf32>
    tpu.vector_store %arg12[%c0_15, %c0_16, %c0_17], %9 {strides = array<i32>} : memref<20x10x6xf32, #tpu.memory_space<vmem>>, vector<20x1x6xf32>,
    %c0_18 = arith.constant 0 : index
    %c8 = arith.constant 8 : index
    %c0_19 = arith.constant 0 : index
    %11 = vector.load %arg12[%c0_18, %c8, %c0_19] : memref<20x10x6xf32, #tpu.memory_space<vmem>>, vector<20x1x6xf32>
    %c0_20 = arith.constant 0 : index
    %c9 = arith.constant 9 : index
    %c0_21 = arith.constant 0 : index
    %12 = vector.load %arg12[%c0_20, %c9, %c0_21] : memref<20x10x6xf32, #tpu.memory_space<vmem>>, vector<20x1x6xf32>
    tpu.vector_store %arg12[%c0_20, %c9, %c0_21], %11 {strides = array<i32>} : memref<20x10x6xf32, #tpu.memory_space<vmem>>, vector<20x1x6xf32>,
    %c0_22 = arith.constant 0 : index
    %c0_23 = arith.constant 0 : index
    %c0_24 = arith.constant 0 : index
    %13 = vector.load %arg12[%c0_22, %c0_23, %c0_24] : memref<20x10x6xf32, #tpu.memory_space<vmem>>, vector<20x10x6xf32>
    %14 = vector.extract_strided_slice %13 {offsets = [0, 0, 0], sizes = [16, 10, 6], strides = [1, 1, 1]} : vector<20x10x6xf32> to vector<16x10x6xf32>
    %15 = vector.shape_cast %14 : vector<16x10x6xf32> to vector<8x2x10x6xf32>
    %16 = vector.extract_strided_slice %15 {offsets = [0, 0, 0, 0], sizes = [8, 1, 10, 6], strides = [1, 1, 1, 1]} : vector<8x2x10x6xf32> to vector<8x1x10x6xf32>
    %17 = vector.shape_cast %16 : vector<8x1x10x6xf32> to vector<8x10x6xf32>
    %18 = vector.extract_strided_slice %17 {offsets = [0, 0, 0], sizes = [8, 8, 6], strides = [1, 1, 1]} : vector<8x10x6xf32> to vector<8x8x6xf32>
    %19 = vector.shape_cast %18 : vector<8x8x6xf32> to vector<64x6xf32>
    %c0_25 = arith.constant 0 : index
    %c0_26 = arith.constant 0 : index
    %20 = vector.load %arg16[%c0_25, %c0_26] : memref<64x90xf32, #tpu.memory_space<vmem>>, vector<64x6xf32>
    tpu.vector_store %arg16[%c0_25, %c0_26], %19 {strides = array<i32>} : memref<64x90xf32, #tpu.memory_space<vmem>>, vector<64x6xf32>,
    %21 = vector.extract_strided_slice %17 {offsets = [0, 1, 0], sizes = [8, 8, 6], strides = [1, 1, 1]} : vector<8x10x6xf32> to vector<8x8x6xf32>
    %22 = vector.shape_cast %21 : vector<8x8x6xf32> to vector<64x6xf32>
    %c0_27 = arith.constant 0 : index
    %c6 = arith.constant 6 : index
    %23 = vector.load %arg16[%c0_27, %c6] : memref<64x90xf32, #tpu.memory_space<vmem>>, vector<64x6xf32>
    tpu.vector_store %arg16[%c0_27, %c6], %22 {strides = array<i32>} : memref<64x90xf32, #tpu.memory_space<vmem>>, vector<64x6xf32>,
    %24 = vector.extract_strided_slice %17 {offsets = [0, 2, 0], sizes = [8, 8, 6], strides = [1, 1, 1]} : vector<8x10x6xf32> to vector<8x8x6xf32>
    %25 = vector.shape_cast %24 : vector<8x8x6xf32> to vector<64x6xf32>
    %c0_28 = arith.constant 0 : index
    %c12 = arith.constant 12 : index
    %26 = vector.load %arg16[%c0_28, %c12] : memref<64x90xf32, #tpu.memory_space<vmem>>, vector<64x6xf32>
    tpu.vector_store %arg16[%c0_28, %c12], %25 {strides = array<i32>} : memref<64x90xf32, #tpu.memory_space<vmem>>, vector<64x6xf32>,
    %27 = vector.extract_strided_slice %13 {offsets = [1, 0, 0], sizes = [16, 10, 6], strides = [1, 1, 1]} : vector<20x10x6xf32> to vector<16x10x6xf32>
    %28 = vector.shape_cast %27 : vector<16x10x6xf32> to vector<8x2x10x6xf32>
    %29 = vector.extract_strided_slice %28 {offsets = [0, 0, 0, 0], sizes = [8, 1, 10, 6], strides = [1, 1, 1, 1]} : vector<8x2x10x6xf32> to vector<8x1x10x6xf32>
    %30 = vector.shape_cast %29 : vector<8x1x10x6xf32> to vector<8x10x6xf32>
    %31 = vector.extract_strided_slice %30 {offsets = [0, 0, 0], sizes = [8, 8, 6], strides = [1, 1, 1]} : vector<8x10x6xf32> to vector<8x8x6xf32>
    %32 = vector.shape_cast %31 : vector<8x8x6xf32> to vector<64x6xf32>
    %c0_29 = arith.constant 0 : index
    %c18_30 = arith.constant 18 : index
    %33 = vector.load %arg16[%c0_29, %c18_30] : memref<64x90xf32, #tpu.memory_space<vmem>>, vector<64x6xf32>
    tpu.vector_store %arg16[%c0_29, %c18_30], %32 {strides = array<i32>} : memref<64x90xf32, #tpu.memory_space<vmem>>, vector<64x6xf32>,
    %34 = vector.extract_strided_slice %30 {offsets = [0, 1, 0], sizes = [8, 8, 6], strides = [1, 1, 1]} : vector<8x10x6xf32> to vector<8x8x6xf32>
    %35 = vector.shape_cast %34 : vector<8x8x6xf32> to vector<64x6xf32>
    %c0_31 = arith.constant 0 : index
    %c24 = arith.constant 24 : index
    %36 = vector.load %arg16[%c0_31, %c24] : memref<64x90xf32, #tpu.memory_space<vmem>>, vector<64x6xf32>
    tpu.vector_store %arg16[%c0_31, %c24], %35 {strides = array<i32>} : memref<64x90xf32, #tpu.memory_space<vmem>>, vector<64x6xf32>,
    %37 = vector.extract_strided_slice %30 {offsets = [0, 2, 0], sizes = [8, 8, 6], strides = [1, 1, 1]} : vector<8x10x6xf32> to vector<8x8x6xf32>
    %38 = vector.shape_cast %37 : vector<8x8x6xf32> to vector<64x6xf32>
    %c0_32 = arith.constant 0 : index
    %c30 = arith.constant 30 : index
    %39 = vector.load %arg16[%c0_32, %c30] : memref<64x90xf32, #tpu.memory_space<vmem>>, vector<64x6xf32>
    tpu.vector_store %arg16[%c0_32, %c30], %38 {strides = array<i32>} : memref<64x90xf32, #tpu.memory_space<vmem>>, vector<64x6xf32>,
    %40 = vector.extract_strided_slice %13 {offsets = [2, 0, 0], sizes = [16, 10, 6], strides = [1, 1, 1]} : vector<20x10x6xf32> to vector<16x10x6xf32>
    %41 = vector.shape_cast %40 : vector<16x10x6xf32> to vector<8x2x10x6xf32>
    %42 = vector.extract_strided_slice %41 {offsets = [0, 0, 0, 0], sizes = [8, 1, 10, 6], strides = [1, 1, 1, 1]} : vector<8x2x10x6xf32> to vector<8x1x10x6xf32>
    %43 = vector.shape_cast %42 : vector<8x1x10x6xf32> to vector<8x10x6xf32>
    %44 = vector.extract_strided_slice %43 {offsets = [0, 0, 0], sizes = [8, 8, 6], strides = [1, 1, 1]} : vector<8x10x6xf32> to vector<8x8x6xf32>
    %45 = vector.shape_cast %44 : vector<8x8x6xf32> to vector<64x6xf32>
    %c0_33 = arith.constant 0 : index
    %c36 = arith.constant 36 : index
    %46 = vector.load %arg16[%c0_33, %c36] : memref<64x90xf32, #tpu.memory_space<vmem>>, vector<64x6xf32>
    tpu.vector_store %arg16[%c0_33, %c36], %45 {strides = array<i32>} : memref<64x90xf32, #tpu.memory_space<vmem>>, vector<64x6xf32>,
    %47 = vector.extract_strided_slice %43 {offsets = [0, 1, 0], sizes = [8, 8, 6], strides = [1, 1, 1]} : vector<8x10x6xf32> to vector<8x8x6xf32>
    %48 = vector.shape_cast %47 : vector<8x8x6xf32> to vector<64x6xf32>
    %c0_34 = arith.constant 0 : index
    %c42 = arith.constant 42 : index
    %49 = vector.load %arg16[%c0_34, %c42] : memref<64x90xf32, #tpu.memory_space<vmem>>, vector<64x6xf32>
    tpu.vector_store %arg16[%c0_34, %c42], %48 {strides = array<i32>} : memref<64x90xf32, #tpu.memory_space<vmem>>, vector<64x6xf32>,
    %50 = vector.extract_strided_slice %43 {offsets = [0, 2, 0], sizes = [8, 8, 6], strides = [1, 1, 1]} : vector<8x10x6xf32> to vector<8x8x6xf32>
    %51 = vector.shape_cast %50 : vector<8x8x6xf32> to vector<64x6xf32>
    %c0_35 = arith.constant 0 : index
    %c48 = arith.constant 48 : index
    %52 = vector.load %arg16[%c0_35, %c48] : memref<64x90xf32, #tpu.memory_space<vmem>>, vector<64x6xf32>
    tpu.vector_store %arg16[%c0_35, %c48], %51 {strides = array<i32>} : memref<64x90xf32, #tpu.memory_space<vmem>>, vector<64x6xf32>,
    %53 = vector.extract_strided_slice %13 {offsets = [3, 0, 0], sizes = [16, 10, 6], strides = [1, 1, 1]} : vector<20x10x6xf32> to vector<16x10x6xf32>
    %54 = vector.shape_cast %53 : vector<16x10x6xf32> to vector<8x2x10x6xf32>
    %55 = vector.extract_strided_slice %54 {offsets = [0, 0, 0, 0], sizes = [8, 1, 10, 6], strides = [1, 1, 1, 1]} : vector<8x2x10x6xf32> to vector<8x1x10x6xf32>
    %56 = vector.shape_cast %55 : vector<8x1x10x6xf32> to vector<8x10x6xf32>
    %57 = vector.extract_strided_slice %56 {offsets = [0, 0, 0], sizes = [8, 8, 6], strides = [1, 1, 1]} : vector<8x10x6xf32> to vector<8x8x6xf32>
    %58 = vector.shape_cast %57 : vector<8x8x6xf32> to vector<64x6xf32>
    %c0_36 = arith.constant 0 : index
    %c54 = arith.constant 54 : index
    %59 = vector.load %arg16[%c0_36, %c54] : memref<64x90xf32, #tpu.memory_space<vmem>>, vector<64x6xf32>
    tpu.vector_store %arg16[%c0_36, %c54], %58 {strides = array<i32>} : memref<64x90xf32, #tpu.memory_space<vmem>>, vector<64x6xf32>,
    %60 = vector.extract_strided_slice %56 {offsets = [0, 1, 0], sizes = [8, 8, 6], strides = [1, 1, 1]} : vector<8x10x6xf32> to vector<8x8x6xf32>
    %61 = vector.shape_cast %60 : vector<8x8x6xf32> to vector<64x6xf32>
    %c0_37 = arith.constant 0 : index
    %c60 = arith.constant 60 : index
    %62 = vector.load %arg16[%c0_37, %c60] : memref<64x90xf32, #tpu.memory_space<vmem>>, vector<64x6xf32>
    tpu.vector_store %arg16[%c0_37, %c60], %61 {strides = array<i32>} : memref<64x90xf32, #tpu.memory_space<vmem>>, vector<64x6xf32>,
    %63 = vector.extract_strided_slice %56 {offsets = [0, 2, 0], sizes = [8, 8, 6], strides = [1, 1, 1]} : vector<8x10x6xf32> to vector<8x8x6xf32>
    %64 = vector.shape_cast %63 : vector<8x8x6xf32> to vector<64x6xf32>
    %c0_38 = arith.constant 0 : index
    %c66 = arith.constant 66 : index
    %65 = vector.load %arg16[%c0_38, %c66] : memref<64x90xf32, #tpu.memory_space<vmem>>, vector<64x6xf32>
    tpu.vector_store %arg16[%c0_38, %c66], %64 {strides = array<i32>} : memref<64x90xf32, #tpu.memory_space<vmem>>, vector<64x6xf32>,
    %66 = vector.extract_strided_slice %13 {offsets = [4, 0, 0], sizes = [16, 10, 6], strides = [1, 1, 1]} : vector<20x10x6xf32> to vector<16x10x6xf32>
    %67 = vector.shape_cast %66 : vector<16x10x6xf32> to vector<8x2x10x6xf32>
    %68 = vector.extract_strided_slice %67 {offsets = [0, 0, 0, 0], sizes = [8, 1, 10, 6], strides = [1, 1, 1, 1]} : vector<8x2x10x6xf32> to vector<8x1x10x6xf32>
    %69 = vector.shape_cast %68 : vector<8x1x10x6xf32> to vector<8x10x6xf32>
    %70 = vector.extract_strided_slice %69 {offsets = [0, 0, 0], sizes = [8, 8, 6], strides = [1, 1, 1]} : vector<8x10x6xf32> to vector<8x8x6xf32>
    %71 = vector.shape_cast %70 : vector<8x8x6xf32> to vector<64x6xf32>
    %c0_39 = arith.constant 0 : index
    %c72 = arith.constant 72 : index
    %72 = vector.load %arg16[%c0_39, %c72] : memref<64x90xf32, #tpu.memory_space<vmem>>, vector<64x6xf32>
    tpu.vector_store %arg16[%c0_39, %c72], %71 {strides = array<i32>} : memref<64x90xf32, #tpu.memory_space<vmem>>, vector<64x6xf32>,
    %73 = vector.extract_strided_slice %69 {offsets = [0, 1, 0], sizes = [8, 8, 6], strides = [1, 1, 1]} : vector<8x10x6xf32> to vector<8x8x6xf32>
    %74 = vector.shape_cast %73 : vector<8x8x6xf32> to vector<64x6xf32>
    %c0_40 = arith.constant 0 : index
    %c78 = arith.constant 78 : index
    %75 = vector.load %arg16[%c0_40, %c78] : memref<64x90xf32, #tpu.memory_space<vmem>>, vector<64x6xf32>
    tpu.vector_store %arg16[%c0_40, %c78], %74 {strides = array<i32>} : memref<64x90xf32, #tpu.memory_space<vmem>>, vector<64x6xf32>,
    %76 = vector.extract_strided_slice %69 {offsets = [0, 2, 0], sizes = [8, 8, 6], strides = [1, 1, 1]} : vector<8x10x6xf32> to vector<8x8x6xf32>
    %77 = vector.shape_cast %76 : vector<8x8x6xf32> to vector<64x6xf32>
    %c0_41 = arith.constant 0 : index
    %c84 = arith.constant 84 : index
    %78 = vector.load %arg16[%c0_41, %c84] : memref<64x90xf32, #tpu.memory_space<vmem>>, vector<64x6xf32>
    tpu.vector_store %arg16[%c0_41, %c84], %77 {strides = array<i32>} : memref<64x90xf32, #tpu.memory_space<vmem>>, vector<64x6xf32>,
    %c0_42 = arith.constant 0 : index
    %c0_43 = arith.constant 0 : index
    %79 = vector.load %arg16[%c0_42, %c0_43] : memref<64x90xf32, #tpu.memory_space<vmem>>, vector<64x90xf32>
    %c0_44 = arith.constant 0 : index
    %c0_45 = arith.constant 0 : index
    %80 = vector.load %arg2[%c0_44, %c0_45] : memref<90x8xf32, #tpu.memory_space<vmem>>, vector<90x8xf32>
    %cst = arith.constant dense<0.000000e+00> : vector<64x8xf32>
    %81 = tpu.matmul %79, %80, %cst {dimension_numbers = #tpu.dot_dimension_numbers<[1], [0], [0], [1], [0, 0, 1, 1], [], []>} : vector<64x90xf32>, vector<90x8xf32>, vector<64x8xf32> -> vector<64x8xf32>
    %c0_46 = arith.constant 0 : index
    %c0_47 = arith.constant 0 : index
    %82 = vector.load %arg3[%c0_46, %c0_47] : memref<1x8xf32, #tpu.memory_space<vmem>>, vector<1x8xf32>
    %83 = vector.broadcast %82 : vector<1x8xf32> to vector<64x8xf32>
    %84 = arith.addf %81, %83 : vector<64x8xf32>
    %85 = vector.shape_cast %84 : vector<64x8xf32> to vector<8x8x8xf32>
    %cst_48 = arith.constant 0.000000e+00 : f32
    %86 = vector.broadcast %cst_48 : f32 to vector<8x8x8xf32>
    %87 = arith.maximumf %85, %86 : vector<8x8x8xf32>
    %cst_49 = arith.constant 0.000000e+00 : f32
    %88 = vector.broadcast %cst_49 : f32 to vector<12x10x8xf32>
    %c0_50 = arith.constant 0 : index
    %c0_51 = arith.constant 0 : index
    %c0_52 = arith.constant 0 : index
    %89 = vector.load %arg13[%c0_50, %c0_51, %c0_52] : memref<12x10x8xf32, #tpu.memory_space<vmem>>, vector<12x10x8xf32>
    tpu.vector_store %arg13[%c0_50, %c0_51, %c0_52], %88 {strides = array<i32>} : memref<12x10x8xf32, #tpu.memory_space<vmem>>, vector<12x10x8xf32>,
    %c2 = arith.constant 2 : index
    %c1_53 = arith.constant 1 : index
    %c0_54 = arith.constant 0 : index
    %90 = vector.load %arg13[%c2, %c1_53, %c0_54] : memref<12x10x8xf32, #tpu.memory_space<vmem>>, vector<8x8x8xf32>
    tpu.vector_store %arg13[%c2, %c1_53, %c0_54], %87 {strides = array<i32>} : memref<12x10x8xf32, #tpu.memory_space<vmem>>, vector<8x8x8xf32>,
    %c0_55 = arith.constant 0 : index
    %c0_56 = arith.constant 0 : index
    %c0_57 = arith.constant 0 : index
    %91 = vector.load %arg13[%c0_55, %c0_56, %c0_57] : memref<12x10x8xf32, #tpu.memory_space<vmem>>, vector<12x10x8xf32>
    %92 = vector.extract_strided_slice %91 {offsets = [0, 0, 0], sizes = [8, 10, 8], strides = [1, 1, 1]} : vector<12x10x8xf32> to vector<8x10x8xf32>
    %93 = vector.shape_cast %92 : vector<8x10x8xf32> to vector<4x2x10x8xf32>
    %94 = vector.extract_strided_slice %93 {offsets = [0, 0, 0, 0], sizes = [4, 1, 10, 8], strides = [1, 1, 1, 1]} : vector<4x2x10x8xf32> to vector<4x1x10x8xf32>
    %95 = vector.shape_cast %94 : vector<4x1x10x8xf32> to vector<4x10x8xf32>
    %96 = vector.extract_strided_slice %95 {offsets = [0, 0, 0], sizes = [4, 8, 8], strides = [1, 1, 1]} : vector<4x10x8xf32> to vector<4x8x8xf32>
    %97 = vector.shape_cast %96 : vector<4x8x8xf32> to vector<32x8xf32>
    %c0_58 = arith.constant 0 : index
    %c0_59 = arith.constant 0 : index
    %98 = vector.load %arg17[%c0_58, %c0_59] : memref<32x120xf32, #tpu.memory_space<vmem>>, vector<32x8xf32>
    tpu.vector_store %arg17[%c0_58, %c0_59], %97 {strides = array<i32>} : memref<32x120xf32, #tpu.memory_space<vmem>>, vector<32x8xf32>,
    %99 = vector.extract_strided_slice %95 {offsets = [0, 1, 0], sizes = [4, 8, 8], strides = [1, 1, 1]} : vector<4x10x8xf32> to vector<4x8x8xf32>
    %100 = vector.shape_cast %99 : vector<4x8x8xf32> to vector<32x8xf32>
    %c0_60 = arith.constant 0 : index
    %c8_61 = arith.constant 8 : index
    %101 = vector.load %arg17[%c0_60, %c8_61] : memref<32x120xf32, #tpu.memory_space<vmem>>, vector<32x8xf32>
    tpu.vector_store %arg17[%c0_60, %c8_61], %100 {strides = array<i32>} : memref<32x120xf32, #tpu.memory_space<vmem>>, vector<32x8xf32>,
    %102 = vector.extract_strided_slice %95 {offsets = [0, 2, 0], sizes = [4, 8, 8], strides = [1, 1, 1]} : vector<4x10x8xf32> to vector<4x8x8xf32>
    %103 = vector.shape_cast %102 : vector<4x8x8xf32> to vector<32x8xf32>
    %c0_62 = arith.constant 0 : index
    %c16 = arith.constant 16 : index
    %104 = vector.load %arg17[%c0_62, %c16] : memref<32x120xf32, #tpu.memory_space<vmem>>, vector<32x8xf32>
    tpu.vector_store %arg17[%c0_62, %c16], %103 {strides = array<i32>} : memref<32x120xf32, #tpu.memory_space<vmem>>, vector<32x8xf32>,
    %105 = vector.extract_strided_slice %91 {offsets = [1, 0, 0], sizes = [8, 10, 8], strides = [1, 1, 1]} : vector<12x10x8xf32> to vector<8x10x8xf32>
    %106 = vector.shape_cast %105 : vector<8x10x8xf32> to vector<4x2x10x8xf32>
    %107 = vector.extract_strided_slice %106 {offsets = [0, 0, 0, 0], sizes = [4, 1, 10, 8], strides = [1, 1, 1, 1]} : vector<4x2x10x8xf32> to vector<4x1x10x8xf32>
    %108 = vector.shape_cast %107 : vector<4x1x10x8xf32> to vector<4x10x8xf32>
    %109 = vector.extract_strided_slice %108 {offsets = [0, 0, 0], sizes = [4, 8, 8], strides = [1, 1, 1]} : vector<4x10x8xf32> to vector<4x8x8xf32>
    %110 = vector.shape_cast %109 : vector<4x8x8xf32> to vector<32x8xf32>
    %c0_63 = arith.constant 0 : index
    %c24_64 = arith.constant 24 : index
    %111 = vector.load %arg17[%c0_63, %c24_64] : memref<32x120xf32, #tpu.memory_space<vmem>>, vector<32x8xf32>
    tpu.vector_store %arg17[%c0_63, %c24_64], %110 {strides = array<i32>} : memref<32x120xf32, #tpu.memory_space<vmem>>, vector<32x8xf32>,
    %112 = vector.extract_strided_slice %108 {offsets = [0, 1, 0], sizes = [4, 8, 8], strides = [1, 1, 1]} : vector<4x10x8xf32> to vector<4x8x8xf32>
    %113 = vector.shape_cast %112 : vector<4x8x8xf32> to vector<32x8xf32>
    %c0_65 = arith.constant 0 : index
    %c32 = arith.constant 32 : index
    %114 = vector.load %arg17[%c0_65, %c32] : memref<32x120xf32, #tpu.memory_space<vmem>>, vector<32x8xf32>
    tpu.vector_store %arg17[%c0_65, %c32], %113 {strides = array<i32>} : memref<32x120xf32, #tpu.memory_space<vmem>>, vector<32x8xf32>,
    %115 = vector.extract_strided_slice %108 {offsets = [0, 2, 0], sizes = [4, 8, 8], strides = [1, 1, 1]} : vector<4x10x8xf32> to vector<4x8x8xf32>
    %116 = vector.shape_cast %115 : vector<4x8x8xf32> to vector<32x8xf32>
    %c0_66 = arith.constant 0 : index
    %c40 = arith.constant 40 : index
    %117 = vector.load %arg17[%c0_66, %c40] : memref<32x120xf32, #tpu.memory_space<vmem>>, vector<32x8xf32>
    tpu.vector_store %arg17[%c0_66, %c40], %116 {strides = array<i32>} : memref<32x120xf32, #tpu.memory_space<vmem>>, vector<32x8xf32>,
    %118 = vector.extract_strided_slice %91 {offsets = [2, 0, 0], sizes = [8, 10, 8], strides = [1, 1, 1]} : vector<12x10x8xf32> to vector<8x10x8xf32>
    %119 = vector.shape_cast %118 : vector<8x10x8xf32> to vector<4x2x10x8xf32>
    %120 = vector.extract_strided_slice %119 {offsets = [0, 0, 0, 0], sizes = [4, 1, 10, 8], strides = [1, 1, 1, 1]} : vector<4x2x10x8xf32> to vector<4x1x10x8xf32>
    %121 = vector.shape_cast %120 : vector<4x1x10x8xf32> to vector<4x10x8xf32>
    %122 = vector.extract_strided_slice %121 {offsets = [0, 0, 0], sizes = [4, 8, 8], strides = [1, 1, 1]} : vector<4x10x8xf32> to vector<4x8x8xf32>
    %123 = vector.shape_cast %122 : vector<4x8x8xf32> to vector<32x8xf32>
    %c0_67 = arith.constant 0 : index
    %c48_68 = arith.constant 48 : index
    %124 = vector.load %arg17[%c0_67, %c48_68] : memref<32x120xf32, #tpu.memory_space<vmem>>, vector<32x8xf32>
    tpu.vector_store %arg17[%c0_67, %c48_68], %123 {strides = array<i32>} : memref<32x120xf32, #tpu.memory_space<vmem>>, vector<32x8xf32>,
    %125 = vector.extract_strided_slice %121 {offsets = [0, 1, 0], sizes = [4, 8, 8], strides = [1, 1, 1]} : vector<4x10x8xf32> to vector<4x8x8xf32>
    %126 = vector.shape_cast %125 : vector<4x8x8xf32> to vector<32x8xf32>
    %c0_69 = arith.constant 0 : index
    %c56 = arith.constant 56 : index
    %127 = vector.load %arg17[%c0_69, %c56] : memref<32x120xf32, #tpu.memory_space<vmem>>, vector<32x8xf32>
    tpu.vector_store %arg17[%c0_69, %c56], %126 {strides = array<i32>} : memref<32x120xf32, #tpu.memory_space<vmem>>, vector<32x8xf32>,
    %128 = vector.extract_strided_slice %121 {offsets = [0, 2, 0], sizes = [4, 8, 8], strides = [1, 1, 1]} : vector<4x10x8xf32> to vector<4x8x8xf32>
    %129 = vector.shape_cast %128 : vector<4x8x8xf32> to vector<32x8xf32>
    %c0_70 = arith.constant 0 : index
    %c64 = arith.constant 64 : index
    %130 = vector.load %arg17[%c0_70, %c64] : memref<32x120xf32, #tpu.memory_space<vmem>>, vector<32x8xf32>
    tpu.vector_store %arg17[%c0_70, %c64], %129 {strides = array<i32>} : memref<32x120xf32, #tpu.memory_space<vmem>>, vector<32x8xf32>,
    %131 = vector.extract_strided_slice %91 {offsets = [3, 0, 0], sizes = [8, 10, 8], strides = [1, 1, 1]} : vector<12x10x8xf32> to vector<8x10x8xf32>
    %132 = vector.shape_cast %131 : vector<8x10x8xf32> to vector<4x2x10x8xf32>
    %133 = vector.extract_strided_slice %132 {offsets = [0, 0, 0, 0], sizes = [4, 1, 10, 8], strides = [1, 1, 1, 1]} : vector<4x2x10x8xf32> to vector<4x1x10x8xf32>
    %134 = vector.shape_cast %133 : vector<4x1x10x8xf32> to vector<4x10x8xf32>
    %135 = vector.extract_strided_slice %134 {offsets = [0, 0, 0], sizes = [4, 8, 8], strides = [1, 1, 1]} : vector<4x10x8xf32> to vector<4x8x8xf32>
    %136 = vector.shape_cast %135 : vector<4x8x8xf32> to vector<32x8xf32>
    %c0_71 = arith.constant 0 : index
    %c72_72 = arith.constant 72 : index
    %137 = vector.load %arg17[%c0_71, %c72_72] : memref<32x120xf32, #tpu.memory_space<vmem>>, vector<32x8xf32>
    tpu.vector_store %arg17[%c0_71, %c72_72], %136 {strides = array<i32>} : memref<32x120xf32, #tpu.memory_space<vmem>>, vector<32x8xf32>,
    %138 = vector.extract_strided_slice %134 {offsets = [0, 1, 0], sizes = [4, 8, 8], strides = [1, 1, 1]} : vector<4x10x8xf32> to vector<4x8x8xf32>
    %139 = vector.shape_cast %138 : vector<4x8x8xf32> to vector<32x8xf32>
    %c0_73 = arith.constant 0 : index
    %c80 = arith.constant 80 : index
    %140 = vector.load %arg17[%c0_73, %c80] : memref<32x120xf32, #tpu.memory_space<vmem>>, vector<32x8xf32>
    tpu.vector_store %arg17[%c0_73, %c80], %139 {strides = array<i32>} : memref<32x120xf32, #tpu.memory_space<vmem>>, vector<32x8xf32>,
    %141 = vector.extract_strided_slice %134 {offsets = [0, 2, 0], sizes = [4, 8, 8], strides = [1, 1, 1]} : vector<4x10x8xf32> to vector<4x8x8xf32>
    %142 = vector.shape_cast %141 : vector<4x8x8xf32> to vector<32x8xf32>
    %c0_74 = arith.constant 0 : index
    %c88 = arith.constant 88 : index
    %143 = vector.load %arg17[%c0_74, %c88] : memref<32x120xf32, #tpu.memory_space<vmem>>, vector<32x8xf32>
    tpu.vector_store %arg17[%c0_74, %c88], %142 {strides = array<i32>} : memref<32x120xf32, #tpu.memory_space<vmem>>, vector<32x8xf32>,
    %144 = vector.extract_strided_slice %91 {offsets = [4, 0, 0], sizes = [8, 10, 8], strides = [1, 1, 1]} : vector<12x10x8xf32> to vector<8x10x8xf32>
    %145 = vector.shape_cast %144 : vector<8x10x8xf32> to vector<4x2x10x8xf32>
    %146 = vector.extract_strided_slice %145 {offsets = [0, 0, 0, 0], sizes = [4, 1, 10, 8], strides = [1, 1, 1, 1]} : vector<4x2x10x8xf32> to vector<4x1x10x8xf32>
    %147 = vector.shape_cast %146 : vector<4x1x10x8xf32> to vector<4x10x8xf32>
    %148 = vector.extract_strided_slice %147 {offsets = [0, 0, 0], sizes = [4, 8, 8], strides = [1, 1, 1]} : vector<4x10x8xf32> to vector<4x8x8xf32>
    %149 = vector.shape_cast %148 : vector<4x8x8xf32> to vector<32x8xf32>
    %c0_75 = arith.constant 0 : index
    %c96 = arith.constant 96 : index
    %150 = vector.load %arg17[%c0_75, %c96] : memref<32x120xf32, #tpu.memory_space<vmem>>, vector<32x8xf32>
    tpu.vector_store %arg17[%c0_75, %c96], %149 {strides = array<i32>} : memref<32x120xf32, #tpu.memory_space<vmem>>, vector<32x8xf32>,
    %151 = vector.extract_strided_slice %147 {offsets = [0, 1, 0], sizes = [4, 8, 8], strides = [1, 1, 1]} : vector<4x10x8xf32> to vector<4x8x8xf32>
    %152 = vector.shape_cast %151 : vector<4x8x8xf32> to vector<32x8xf32>
    %c0_76 = arith.constant 0 : index
    %c104 = arith.constant 104 : index
    %153 = vector.load %arg17[%c0_76, %c104] : memref<32x120xf32, #tpu.memory_space<vmem>>, vector<32x8xf32>
    tpu.vector_store %arg17[%c0_76, %c104], %152 {strides = array<i32>} : memref<32x120xf32, #tpu.memory_space<vmem>>, vector<32x8xf32>,
    %154 = vector.extract_strided_slice %147 {offsets = [0, 2, 0], sizes = [4, 8, 8], strides = [1, 1, 1]} : vector<4x10x8xf32> to vector<4x8x8xf32>
    %155 = vector.shape_cast %154 : vector<4x8x8xf32> to vector<32x8xf32>
    %c0_77 = arith.constant 0 : index
    %c112 = arith.constant 112 : index
    %156 = vector.load %arg17[%c0_77, %c112] : memref<32x120xf32, #tpu.memory_space<vmem>>, vector<32x8xf32>
    tpu.vector_store %arg17[%c0_77, %c112], %155 {strides = array<i32>} : memref<32x120xf32, #tpu.memory_space<vmem>>, vector<32x8xf32>,
    %c0_78 = arith.constant 0 : index
    %c0_79 = arith.constant 0 : index
    %157 = vector.load %arg17[%c0_78, %c0_79] : memref<32x120xf32, #tpu.memory_space<vmem>>, vector<32x120xf32>
    %c0_80 = arith.constant 0 : index
    %c0_81 = arith.constant 0 : index
    %158 = vector.load %arg4[%c0_80, %c0_81] : memref<120x16xf32, #tpu.memory_space<vmem>>, vector<120x16xf32>
    %cst_82 = arith.constant dense<0.000000e+00> : vector<32x16xf32>
    %159 = tpu.matmul %157, %158, %cst_82 {dimension_numbers = #tpu.dot_dimension_numbers<[1], [0], [0], [1], [0, 0, 1, 1], [], []>} : vector<32x120xf32>, vector<120x16xf32>, vector<32x16xf32> -> vector<32x16xf32>
    %c0_83 = arith.constant 0 : index
    %c0_84 = arith.constant 0 : index
    %160 = vector.load %arg5[%c0_83, %c0_84] : memref<1x16xf32, #tpu.memory_space<vmem>>, vector<1x16xf32>
    %161 = vector.broadcast %160 : vector<1x16xf32> to vector<32x16xf32>
    %162 = arith.addf %159, %161 : vector<32x16xf32>
    %163 = vector.shape_cast %162 : vector<32x16xf32> to vector<4x8x16xf32>
    %cst_85 = arith.constant 0.000000e+00 : f32
    %164 = vector.broadcast %cst_85 : f32 to vector<4x8x16xf32>
    %165 = arith.maximumf %163, %164 : vector<4x8x16xf32>
    %cst_86 = arith.constant 0.000000e+00 : f32
    %166 = vector.broadcast %cst_86 : f32 to vector<11x10x16xf32>
    %c0_87 = arith.constant 0 : index
    %c0_88 = arith.constant 0 : index
    %c0_89 = arith.constant 0 : index
    %167 = vector.load %arg14[%c0_87, %c0_88, %c0_89] : memref<11x10x16xf32, #tpu.memory_space<vmem>>, vector<11x10x16xf32>
    tpu.vector_store %arg14[%c0_87, %c0_88, %c0_89], %166 {strides = array<i32>} : memref<11x10x16xf32, #tpu.memory_space<vmem>>, vector<11x10x16xf32>,
    %168 = vector.extract_strided_slice %165 {offsets = [0, 0, 0], sizes = [1, 8, 16], strides = [1, 1, 1]} : vector<4x8x16xf32> to vector<1x8x16xf32>
    %c2_90 = arith.constant 2 : index
    %c1_91 = arith.constant 1 : index
    %c0_92 = arith.constant 0 : index
    %169 = vector.load %arg14[%c2_90, %c1_91, %c0_92] : memref<11x10x16xf32, #tpu.memory_space<vmem>>, vector<1x8x16xf32>
    tpu.vector_store %arg14[%c2_90, %c1_91, %c0_92], %168 {strides = array<i32>} : memref<11x10x16xf32, #tpu.memory_space<vmem>>, vector<1x8x16xf32>,
    %170 = vector.extract_strided_slice %165 {offsets = [1, 0, 0], sizes = [1, 8, 16], strides = [1, 1, 1]} : vector<4x8x16xf32> to vector<1x8x16xf32>
    %c4 = arith.constant 4 : index
    %c1_93 = arith.constant 1 : index
    %c0_94 = arith.constant 0 : index
    %171 = vector.load %arg14[%c4, %c1_93, %c0_94] : memref<11x10x16xf32, #tpu.memory_space<vmem>>, vector<1x8x16xf32>
    tpu.vector_store %arg14[%c4, %c1_93, %c0_94], %170 {strides = array<i32>} : memref<11x10x16xf32, #tpu.memory_space<vmem>>, vector<1x8x16xf32>,
    %172 = vector.extract_strided_slice %165 {offsets = [2, 0, 0], sizes = [1, 8, 16], strides = [1, 1, 1]} : vector<4x8x16xf32> to vector<1x8x16xf32>
    %c6_95 = arith.constant 6 : index
    %c1_96 = arith.constant 1 : index
    %c0_97 = arith.constant 0 : index
    %173 = vector.load %arg14[%c6_95, %c1_96, %c0_97] : memref<11x10x16xf32, #tpu.memory_space<vmem>>, vector<1x8x16xf32>
    tpu.vector_store %arg14[%c6_95, %c1_96, %c0_97], %172 {strides = array<i32>} : memref<11x10x16xf32, #tpu.memory_space<vmem>>, vector<1x8x16xf32>,
    %174 = vector.extract_strided_slice %165 {offsets = [3, 0, 0], sizes = [1, 8, 16], strides = [1, 1, 1]} : vector<4x8x16xf32> to vector<1x8x16xf32>
    %c8_98 = arith.constant 8 : index
    %c1_99 = arith.constant 1 : index
    %c0_100 = arith.constant 0 : index
    %175 = vector.load %arg14[%c8_98, %c1_99, %c0_100] : memref<11x10x16xf32, #tpu.memory_space<vmem>>, vector<1x8x16xf32>
    tpu.vector_store %arg14[%c8_98, %c1_99, %c0_100], %174 {strides = array<i32>} : memref<11x10x16xf32, #tpu.memory_space<vmem>>, vector<1x8x16xf32>,
    %c0_101 = arith.constant 0 : index
    %c0_102 = arith.constant 0 : index
    %c0_103 = arith.constant 0 : index
    %176 = vector.load %arg14[%c0_101, %c0_102, %c0_103] : memref<11x10x16xf32, #tpu.memory_space<vmem>>, vector<11x10x16xf32>
    %177 = vector.extract_strided_slice %176 {offsets = [0, 0, 0], sizes = [8, 10, 16], strides = [1, 1, 1]} : vector<11x10x16xf32> to vector<8x10x16xf32>
    %178 = vector.extract_strided_slice %177 {offsets = [0, 0, 0], sizes = [8, 8, 16], strides = [1, 1, 1]} : vector<8x10x16xf32> to vector<8x8x16xf32>
    %179 = vector.shape_cast %178 : vector<8x8x16xf32> to vector<64x16xf32>
    %c0_104 = arith.constant 0 : index
    %c0_105 = arith.constant 0 : index
    %180 = vector.load %arg18[%c0_104, %c0_105] : memref<64x192xf32, #tpu.memory_space<vmem>>, vector<64x16xf32>
    tpu.vector_store %arg18[%c0_104, %c0_105], %179 {strides = array<i32>} : memref<64x192xf32, #tpu.memory_space<vmem>>, vector<64x16xf32>,
    %181 = vector.extract_strided_slice %177 {offsets = [0, 1, 0], sizes = [8, 8, 16], strides = [1, 1, 1]} : vector<8x10x16xf32> to vector<8x8x16xf32>
    %182 = vector.shape_cast %181 : vector<8x8x16xf32> to vector<64x16xf32>
    %c0_106 = arith.constant 0 : index
    %c16_107 = arith.constant 16 : index
    %183 = vector.load %arg18[%c0_106, %c16_107] : memref<64x192xf32, #tpu.memory_space<vmem>>, vector<64x16xf32>
    tpu.vector_store %arg18[%c0_106, %c16_107], %182 {strides = array<i32>} : memref<64x192xf32, #tpu.memory_space<vmem>>, vector<64x16xf32>,
    %184 = vector.extract_strided_slice %177 {offsets = [0, 2, 0], sizes = [8, 8, 16], strides = [1, 1, 1]} : vector<8x10x16xf32> to vector<8x8x16xf32>
    %185 = vector.shape_cast %184 : vector<8x8x16xf32> to vector<64x16xf32>
    %c0_108 = arith.constant 0 : index
    %c32_109 = arith.constant 32 : index
    %186 = vector.load %arg18[%c0_108, %c32_109] : memref<64x192xf32, #tpu.memory_space<vmem>>, vector<64x16xf32>
    tpu.vector_store %arg18[%c0_108, %c32_109], %185 {strides = array<i32>} : memref<64x192xf32, #tpu.memory_space<vmem>>, vector<64x16xf32>,
    %187 = vector.extract_strided_slice %176 {offsets = [1, 0, 0], sizes = [8, 10, 16], strides = [1, 1, 1]} : vector<11x10x16xf32> to vector<8x10x16xf32>
    %188 = vector.extract_strided_slice %187 {offsets = [0, 0, 0], sizes = [8, 8, 16], strides = [1, 1, 1]} : vector<8x10x16xf32> to vector<8x8x16xf32>
    %189 = vector.shape_cast %188 : vector<8x8x16xf32> to vector<64x16xf32>
    %c0_110 = arith.constant 0 : index
    %c48_111 = arith.constant 48 : index
    %190 = vector.load %arg18[%c0_110, %c48_111] : memref<64x192xf32, #tpu.memory_space<vmem>>, vector<64x16xf32>
    tpu.vector_store %arg18[%c0_110, %c48_111], %189 {strides = array<i32>} : memref<64x192xf32, #tpu.memory_space<vmem>>, vector<64x16xf32>,
    %191 = vector.extract_strided_slice %187 {offsets = [0, 1, 0], sizes = [8, 8, 16], strides = [1, 1, 1]} : vector<8x10x16xf32> to vector<8x8x16xf32>
    %192 = vector.shape_cast %191 : vector<8x8x16xf32> to vector<64x16xf32>
    %c0_112 = arith.constant 0 : index
    %c64_113 = arith.constant 64 : index
    %193 = vector.load %arg18[%c0_112, %c64_113] : memref<64x192xf32, #tpu.memory_space<vmem>>, vector<64x16xf32>
    tpu.vector_store %arg18[%c0_112, %c64_113], %192 {strides = array<i32>} : memref<64x192xf32, #tpu.memory_space<vmem>>, vector<64x16xf32>,
    %194 = vector.extract_strided_slice %187 {offsets = [0, 2, 0], sizes = [8, 8, 16], strides = [1, 1, 1]} : vector<8x10x16xf32> to vector<8x8x16xf32>
    %195 = vector.shape_cast %194 : vector<8x8x16xf32> to vector<64x16xf32>
    %c0_114 = arith.constant 0 : index
    %c80_115 = arith.constant 80 : index
    %196 = vector.load %arg18[%c0_114, %c80_115] : memref<64x192xf32, #tpu.memory_space<vmem>>, vector<64x16xf32>
    tpu.vector_store %arg18[%c0_114, %c80_115], %195 {strides = array<i32>} : memref<64x192xf32, #tpu.memory_space<vmem>>, vector<64x16xf32>,
    %197 = vector.extract_strided_slice %176 {offsets = [2, 0, 0], sizes = [8, 10, 16], strides = [1, 1, 1]} : vector<11x10x16xf32> to vector<8x10x16xf32>
    %198 = vector.extract_strided_slice %197 {offsets = [0, 0, 0], sizes = [8, 8, 16], strides = [1, 1, 1]} : vector<8x10x16xf32> to vector<8x8x16xf32>
    %199 = vector.shape_cast %198 : vector<8x8x16xf32> to vector<64x16xf32>
    %c0_116 = arith.constant 0 : index
    %c96_117 = arith.constant 96 : index
    %200 = vector.load %arg18[%c0_116, %c96_117] : memref<64x192xf32, #tpu.memory_space<vmem>>, vector<64x16xf32>
    tpu.vector_store %arg18[%c0_116, %c96_117], %199 {strides = array<i32>} : memref<64x192xf32, #tpu.memory_space<vmem>>, vector<64x16xf32>,
    %201 = vector.extract_strided_slice %197 {offsets = [0, 1, 0], sizes = [8, 8, 16], strides = [1, 1, 1]} : vector<8x10x16xf32> to vector<8x8x16xf32>
    %202 = vector.shape_cast %201 : vector<8x8x16xf32> to vector<64x16xf32>
    %c0_118 = arith.constant 0 : index
    %c112_119 = arith.constant 112 : index
    %203 = vector.load %arg18[%c0_118, %c112_119] : memref<64x192xf32, #tpu.memory_space<vmem>>, vector<64x16xf32>
    tpu.vector_store %arg18[%c0_118, %c112_119], %202 {strides = array<i32>} : memref<64x192xf32, #tpu.memory_space<vmem>>, vector<64x16xf32>,
    %204 = vector.extract_strided_slice %197 {offsets = [0, 2, 0], sizes = [8, 8, 16], strides = [1, 1, 1]} : vector<8x10x16xf32> to vector<8x8x16xf32>
    %205 = vector.shape_cast %204 : vector<8x8x16xf32> to vector<64x16xf32>
    %c0_120 = arith.constant 0 : index
    %c128 = arith.constant 128 : index
    %206 = vector.load %arg18[%c0_120, %c128] : memref<64x192xf32, #tpu.memory_space<vmem>>, vector<64x16xf32>
    tpu.vector_store %arg18[%c0_120, %c128], %205 {strides = array<i32>} : memref<64x192xf32, #tpu.memory_space<vmem>>, vector<64x16xf32>,
    %207 = vector.extract_strided_slice %176 {offsets = [3, 0, 0], sizes = [8, 10, 16], strides = [1, 1, 1]} : vector<11x10x16xf32> to vector<8x10x16xf32>
    %208 = vector.extract_strided_slice %207 {offsets = [0, 0, 0], sizes = [8, 8, 16], strides = [1, 1, 1]} : vector<8x10x16xf32> to vector<8x8x16xf32>
    %209 = vector.shape_cast %208 : vector<8x8x16xf32> to vector<64x16xf32>
    %c0_121 = arith.constant 0 : index
    %c144 = arith.constant 144 : index
    %210 = vector.load %arg18[%c0_121, %c144] : memref<64x192xf32, #tpu.memory_space<vmem>>, vector<64x16xf32>
    tpu.vector_store %arg18[%c0_121, %c144], %209 {strides = array<i32>} : memref<64x192xf32, #tpu.memory_space<vmem>>, vector<64x16xf32>,
    %211 = vector.extract_strided_slice %207 {offsets = [0, 1, 0], sizes = [8, 8, 16], strides = [1, 1, 1]} : vector<8x10x16xf32> to vector<8x8x16xf32>
    %212 = vector.shape_cast %211 : vector<8x8x16xf32> to vector<64x16xf32>
    %c0_122 = arith.constant 0 : index
    %c160 = arith.constant 160 : index
    %213 = vector.load %arg18[%c0_122, %c160] : memref<64x192xf32, #tpu.memory_space<vmem>>, vector<64x16xf32>
    tpu.vector_store %arg18[%c0_122, %c160], %212 {strides = array<i32>} : memref<64x192xf32, #tpu.memory_space<vmem>>, vector<64x16xf32>,
    %214 = vector.extract_strided_slice %207 {offsets = [0, 2, 0], sizes = [8, 8, 16], strides = [1, 1, 1]} : vector<8x10x16xf32> to vector<8x8x16xf32>
    %215 = vector.shape_cast %214 : vector<8x8x16xf32> to vector<64x16xf32>
    %c0_123 = arith.constant 0 : index
    %c176 = arith.constant 176 : index
    %216 = vector.load %arg18[%c0_123, %c176] : memref<64x192xf32, #tpu.memory_space<vmem>>, vector<64x16xf32>
    tpu.vector_store %arg18[%c0_123, %c176], %215 {strides = array<i32>} : memref<64x192xf32, #tpu.memory_space<vmem>>, vector<64x16xf32>,
    %c0_124 = arith.constant 0 : index
    %c0_125 = arith.constant 0 : index
    %217 = vector.load %arg18[%c0_124, %c0_125] : memref<64x192xf32, #tpu.memory_space<vmem>>, vector<64x192xf32>
    %c0_126 = arith.constant 0 : index
    %c0_127 = arith.constant 0 : index
    %218 = vector.load %arg6[%c0_126, %c0_127] : memref<192x8xf32, #tpu.memory_space<vmem>>, vector<192x8xf32>
    %cst_128 = arith.constant dense<0.000000e+00> : vector<64x8xf32>
    %219 = tpu.matmul %217, %218, %cst_128 {dimension_numbers = #tpu.dot_dimension_numbers<[1], [0], [0], [1], [0, 0, 1, 1], [], []>} : vector<64x192xf32>, vector<192x8xf32>, vector<64x8xf32> -> vector<64x8xf32>
    %c0_129 = arith.constant 0 : index
    %c0_130 = arith.constant 0 : index
    %220 = vector.load %arg7[%c0_129, %c0_130] : memref<1x8xf32, #tpu.memory_space<vmem>>, vector<1x8xf32>
    %221 = vector.broadcast %220 : vector<1x8xf32> to vector<64x8xf32>
    %222 = arith.addf %219, %221 : vector<64x8xf32>
    %223 = vector.shape_cast %222 : vector<64x8xf32> to vector<8x8x8xf32>
    %cst_131 = arith.constant 0.000000e+00 : f32
    %224 = vector.broadcast %cst_131 : f32 to vector<8x8x8xf32>
    %225 = arith.maximumf %223, %224 : vector<8x8x8xf32>
    %cst_132 = arith.constant 0.000000e+00 : f32
    %226 = vector.broadcast %cst_132 : f32 to vector<21x10x16xf32>
    %c0_133 = arith.constant 0 : index
    %c0_134 = arith.constant 0 : index
    %c0_135 = arith.constant 0 : index
    %227 = vector.load %arg15[%c0_133, %c0_134, %c0_135] : memref<21x10x16xf32, #tpu.memory_space<vmem>>, vector<21x10x16xf32>
    tpu.vector_store %arg15[%c0_133, %c0_134, %c0_135], %226 {strides = array<i32>} : memref<21x10x16xf32, #tpu.memory_space<vmem>>, vector<21x10x16xf32>,
    %228 = vector.extract_strided_slice %225 {offsets = [0, 0, 0], sizes = [1, 8, 8], strides = [1, 1, 1]} : vector<8x8x8xf32> to vector<1x8x8xf32>
    %c3 = arith.constant 3 : index
    %c1_136 = arith.constant 1 : index
    %c0_137 = arith.constant 0 : index
    %229 = vector.load %arg15[%c3, %c1_136, %c0_137] : memref<21x10x16xf32, #tpu.memory_space<vmem>>, vector<1x8x8xf32>
    tpu.vector_store %arg15[%c3, %c1_136, %c0_137], %228 {strides = array<i32>} : memref<21x10x16xf32, #tpu.memory_space<vmem>>, vector<1x8x8xf32>,
    %230 = vector.extract_strided_slice %87 {offsets = [0, 0, 0], sizes = [1, 8, 8], strides = [1, 1, 1]} : vector<8x8x8xf32> to vector<1x8x8xf32>
    %c3_138 = arith.constant 3 : index
    %c1_139 = arith.constant 1 : index
    %c8_140 = arith.constant 8 : index
    %231 = vector.load %arg15[%c3_138, %c1_139, %c8_140] : memref<21x10x16xf32, #tpu.memory_space<vmem>>, vector<1x8x8xf32>
    tpu.vector_store %arg15[%c3_138, %c1_139, %c8_140], %230 {strides = array<i32>} : memref<21x10x16xf32, #tpu.memory_space<vmem>>, vector<1x8x8xf32>,
    %232 = vector.extract_strided_slice %225 {offsets = [1, 0, 0], sizes = [1, 8, 8], strides = [1, 1, 1]} : vector<8x8x8xf32> to vector<1x8x8xf32>
    %c5 = arith.constant 5 : index
    %c1_141 = arith.constant 1 : index
    %c0_142 = arith.constant 0 : index
    %233 = vector.load %arg15[%c5, %c1_141, %c0_142] : memref<21x10x16xf32, #tpu.memory_space<vmem>>, vector<1x8x8xf32>
    tpu.vector_store %arg15[%c5, %c1_141, %c0_142], %232 {strides = array<i32>} : memref<21x10x16xf32, #tpu.memory_space<vmem>>, vector<1x8x8xf32>,
    %234 = vector.extract_strided_slice %87 {offsets = [1, 0, 0], sizes = [1, 8, 8], strides = [1, 1, 1]} : vector<8x8x8xf32> to vector<1x8x8xf32>
    %c5_143 = arith.constant 5 : index
    %c1_144 = arith.constant 1 : index
    %c8_145 = arith.constant 8 : index
    %235 = vector.load %arg15[%c5_143, %c1_144, %c8_145] : memref<21x10x16xf32, #tpu.memory_space<vmem>>, vector<1x8x8xf32>
    tpu.vector_store %arg15[%c5_143, %c1_144, %c8_145], %234 {strides = array<i32>} : memref<21x10x16xf32, #tpu.memory_space<vmem>>, vector<1x8x8xf32>,
    %236 = vector.extract_strided_slice %225 {offsets = [2, 0, 0], sizes = [1, 8, 8], strides = [1, 1, 1]} : vector<8x8x8xf32> to vector<1x8x8xf32>
    %c7 = arith.constant 7 : index
    %c1_146 = arith.constant 1 : index
    %c0_147 = arith.constant 0 : index
    %237 = vector.load %arg15[%c7, %c1_146, %c0_147] : memref<21x10x16xf32, #tpu.memory_space<vmem>>, vector<1x8x8xf32>
    tpu.vector_store %arg15[%c7, %c1_146, %c0_147], %236 {strides = array<i32>} : memref<21x10x16xf32, #tpu.memory_space<vmem>>, vector<1x8x8xf32>,
    %238 = vector.extract_strided_slice %87 {offsets = [2, 0, 0], sizes = [1, 8, 8], strides = [1, 1, 1]} : vector<8x8x8xf32> to vector<1x8x8xf32>
    %c7_148 = arith.constant 7 : index
    %c1_149 = arith.constant 1 : index
    %c8_150 = arith.constant 8 : index
    %239 = vector.load %arg15[%c7_148, %c1_149, %c8_150] : memref<21x10x16xf32, #tpu.memory_space<vmem>>, vector<1x8x8xf32>
    tpu.vector_store %arg15[%c7_148, %c1_149, %c8_150], %238 {strides = array<i32>} : memref<21x10x16xf32, #tpu.memory_space<vmem>>, vector<1x8x8xf32>,
    %240 = vector.extract_strided_slice %225 {offsets = [3, 0, 0], sizes = [1, 8, 8], strides = [1, 1, 1]} : vector<8x8x8xf32> to vector<1x8x8xf32>
    %c9_151 = arith.constant 9 : index
    %c1_152 = arith.constant 1 : index
    %c0_153 = arith.constant 0 : index
    %241 = vector.load %arg15[%c9_151, %c1_152, %c0_153] : memref<21x10x16xf32, #tpu.memory_space<vmem>>, vector<1x8x8xf32>
    tpu.vector_store %arg15[%c9_151, %c1_152, %c0_153], %240 {strides = array<i32>} : memref<21x10x16xf32, #tpu.memory_space<vmem>>, vector<1x8x8xf32>,
    %242 = vector.extract_strided_slice %87 {offsets = [3, 0, 0], sizes = [1, 8, 8], strides = [1, 1, 1]} : vector<8x8x8xf32> to vector<1x8x8xf32>
    %c9_154 = arith.constant 9 : index
    %c1_155 = arith.constant 1 : index
    %c8_156 = arith.constant 8 : index
    %243 = vector.load %arg15[%c9_154, %c1_155, %c8_156] : memref<21x10x16xf32, #tpu.memory_space<vmem>>, vector<1x8x8xf32>
    tpu.vector_store %arg15[%c9_154, %c1_155, %c8_156], %242 {strides = array<i32>} : memref<21x10x16xf32, #tpu.memory_space<vmem>>, vector<1x8x8xf32>,
    %244 = vector.extract_strided_slice %225 {offsets = [4, 0, 0], sizes = [1, 8, 8], strides = [1, 1, 1]} : vector<8x8x8xf32> to vector<1x8x8xf32>
    %c11 = arith.constant 11 : index
    %c1_157 = arith.constant 1 : index
    %c0_158 = arith.constant 0 : index
    %245 = vector.load %arg15[%c11, %c1_157, %c0_158] : memref<21x10x16xf32, #tpu.memory_space<vmem>>, vector<1x8x8xf32>
    tpu.vector_store %arg15[%c11, %c1_157, %c0_158], %244 {strides = array<i32>} : memref<21x10x16xf32, #tpu.memory_space<vmem>>, vector<1x8x8xf32>,
    %246 = vector.extract_strided_slice %87 {offsets = [4, 0, 0], sizes = [1, 8, 8], strides = [1, 1, 1]} : vector<8x8x8xf32> to vector<1x8x8xf32>
    %c11_159 = arith.constant 11 : index
    %c1_160 = arith.constant 1 : index
    %c8_161 = arith.constant 8 : index
    %247 = vector.load %arg15[%c11_159, %c1_160, %c8_161] : memref<21x10x16xf32, #tpu.memory_space<vmem>>, vector<1x8x8xf32>
    tpu.vector_store %arg15[%c11_159, %c1_160, %c8_161], %246 {strides = array<i32>} : memref<21x10x16xf32, #tpu.memory_space<vmem>>, vector<1x8x8xf32>,
    %248 = vector.extract_strided_slice %225 {offsets = [5, 0, 0], sizes = [1, 8, 8], strides = [1, 1, 1]} : vector<8x8x8xf32> to vector<1x8x8xf32>
    %c13 = arith.constant 13 : index
    %c1_162 = arith.constant 1 : index
    %c0_163 = arith.constant 0 : index
    %249 = vector.load %arg15[%c13, %c1_162, %c0_163] : memref<21x10x16xf32, #tpu.memory_space<vmem>>, vector<1x8x8xf32>
    tpu.vector_store %arg15[%c13, %c1_162, %c0_163], %248 {strides = array<i32>} : memref<21x10x16xf32, #tpu.memory_space<vmem>>, vector<1x8x8xf32>,
    %250 = vector.extract_strided_slice %87 {offsets = [5, 0, 0], sizes = [1, 8, 8], strides = [1, 1, 1]} : vector<8x8x8xf32> to vector<1x8x8xf32>
    %c13_164 = arith.constant 13 : index
    %c1_165 = arith.constant 1 : index
    %c8_166 = arith.constant 8 : index
    %251 = vector.load %arg15[%c13_164, %c1_165, %c8_166] : memref<21x10x16xf32, #tpu.memory_space<vmem>>, vector<1x8x8xf32>
    tpu.vector_store %arg15[%c13_164, %c1_165, %c8_166], %250 {strides = array<i32>} : memref<21x10x16xf32, #tpu.memory_space<vmem>>, vector<1x8x8xf32>,
    %252 = vector.extract_strided_slice %225 {offsets = [6, 0, 0], sizes = [1, 8, 8], strides = [1, 1, 1]} : vector<8x8x8xf32> to vector<1x8x8xf32>
    %c15 = arith.constant 15 : index
    %c1_167 = arith.constant 1 : index
    %c0_168 = arith.constant 0 : index
    %253 = vector.load %arg15[%c15, %c1_167, %c0_168] : memref<21x10x16xf32, #tpu.memory_space<vmem>>, vector<1x8x8xf32>
    tpu.vector_store %arg15[%c15, %c1_167, %c0_168], %252 {strides = array<i32>} : memref<21x10x16xf32, #tpu.memory_space<vmem>>, vector<1x8x8xf32>,
    %254 = vector.extract_strided_slice %87 {offsets = [6, 0, 0], sizes = [1, 8, 8], strides = [1, 1, 1]} : vector<8x8x8xf32> to vector<1x8x8xf32>
    %c15_169 = arith.constant 15 : index
    %c1_170 = arith.constant 1 : index
    %c8_171 = arith.constant 8 : index
    %255 = vector.load %arg15[%c15_169, %c1_170, %c8_171] : memref<21x10x16xf32, #tpu.memory_space<vmem>>, vector<1x8x8xf32>
    tpu.vector_store %arg15[%c15_169, %c1_170, %c8_171], %254 {strides = array<i32>} : memref<21x10x16xf32, #tpu.memory_space<vmem>>, vector<1x8x8xf32>,
    %256 = vector.extract_strided_slice %225 {offsets = [7, 0, 0], sizes = [1, 8, 8], strides = [1, 1, 1]} : vector<8x8x8xf32> to vector<1x8x8xf32>
    %c17 = arith.constant 17 : index
    %c1_172 = arith.constant 1 : index
    %c0_173 = arith.constant 0 : index
    %257 = vector.load %arg15[%c17, %c1_172, %c0_173] : memref<21x10x16xf32, #tpu.memory_space<vmem>>, vector<1x8x8xf32>
    tpu.vector_store %arg15[%c17, %c1_172, %c0_173], %256 {strides = array<i32>} : memref<21x10x16xf32, #tpu.memory_space<vmem>>, vector<1x8x8xf32>,
    %258 = vector.extract_strided_slice %87 {offsets = [7, 0, 0], sizes = [1, 8, 8], strides = [1, 1, 1]} : vector<8x8x8xf32> to vector<1x8x8xf32>
    %c17_174 = arith.constant 17 : index
    %c1_175 = arith.constant 1 : index
    %c8_176 = arith.constant 8 : index
    %259 = vector.load %arg15[%c17_174, %c1_175, %c8_176] : memref<21x10x16xf32, #tpu.memory_space<vmem>>, vector<1x8x8xf32>
    tpu.vector_store %arg15[%c17_174, %c1_175, %c8_176], %258 {strides = array<i32>} : memref<21x10x16xf32, #tpu.memory_space<vmem>>, vector<1x8x8xf32>,
    %c0_177 = arith.constant 0 : index
    %c0_178 = arith.constant 0 : index
    %c0_179 = arith.constant 0 : index
    %260 = vector.load %arg15[%c0_177, %c0_178, %c0_179] : memref<21x10x16xf32, #tpu.memory_space<vmem>>, vector<21x10x16xf32>
    %261 = vector.extract_strided_slice %260 {offsets = [0, 0, 0], sizes = [17, 10, 16], strides = [1, 1, 1]} : vector<21x10x16xf32> to vector<17x10x16xf32>
    %262 = vector.extract_strided_slice %261 {offsets = [0, 0, 0], sizes = [17, 8, 16], strides = [1, 1, 1]} : vector<17x10x16xf32> to vector<17x8x16xf32>
    %263 = vector.shape_cast %262 : vector<17x8x16xf32> to vector<136x16xf32>
    %c0_180 = arith.constant 0 : index
    %c0_181 = arith.constant 0 : index
    %264 = vector.load %arg19[%c0_180, %c0_181] : memref<136x240xf32, #tpu.memory_space<vmem>>, vector<136x16xf32>
    tpu.vector_store %arg19[%c0_180, %c0_181], %263 {strides = array<i32>} : memref<136x240xf32, #tpu.memory_space<vmem>>, vector<136x16xf32>,
    %265 = vector.extract_strided_slice %261 {offsets = [0, 1, 0], sizes = [17, 8, 16], strides = [1, 1, 1]} : vector<17x10x16xf32> to vector<17x8x16xf32>
    %266 = vector.shape_cast %265 : vector<17x8x16xf32> to vector<136x16xf32>
    %c0_182 = arith.constant 0 : index
    %c16_183 = arith.constant 16 : index
    %267 = vector.load %arg19[%c0_182, %c16_183] : memref<136x240xf32, #tpu.memory_space<vmem>>, vector<136x16xf32>
    tpu.vector_store %arg19[%c0_182, %c16_183], %266 {strides = array<i32>} : memref<136x240xf32, #tpu.memory_space<vmem>>, vector<136x16xf32>,
    %268 = vector.extract_strided_slice %261 {offsets = [0, 2, 0], sizes = [17, 8, 16], strides = [1, 1, 1]} : vector<17x10x16xf32> to vector<17x8x16xf32>
    %269 = vector.shape_cast %268 : vector<17x8x16xf32> to vector<136x16xf32>
    %c0_184 = arith.constant 0 : index
    %c32_185 = arith.constant 32 : index
    %270 = vector.load %arg19[%c0_184, %c32_185] : memref<136x240xf32, #tpu.memory_space<vmem>>, vector<136x16xf32>
    tpu.vector_store %arg19[%c0_184, %c32_185], %269 {strides = array<i32>} : memref<136x240xf32, #tpu.memory_space<vmem>>, vector<136x16xf32>,
    %271 = vector.extract_strided_slice %260 {offsets = [1, 0, 0], sizes = [17, 10, 16], strides = [1, 1, 1]} : vector<21x10x16xf32> to vector<17x10x16xf32>
    %272 = vector.extract_strided_slice %271 {offsets = [0, 0, 0], sizes = [17, 8, 16], strides = [1, 1, 1]} : vector<17x10x16xf32> to vector<17x8x16xf32>
    %273 = vector.shape_cast %272 : vector<17x8x16xf32> to vector<136x16xf32>
    %c0_186 = arith.constant 0 : index
    %c48_187 = arith.constant 48 : index
    %274 = vector.load %arg19[%c0_186, %c48_187] : memref<136x240xf32, #tpu.memory_space<vmem>>, vector<136x16xf32>
    tpu.vector_store %arg19[%c0_186, %c48_187], %273 {strides = array<i32>} : memref<136x240xf32, #tpu.memory_space<vmem>>, vector<136x16xf32>,
    %275 = vector.extract_strided_slice %271 {offsets = [0, 1, 0], sizes = [17, 8, 16], strides = [1, 1, 1]} : vector<17x10x16xf32> to vector<17x8x16xf32>
    %276 = vector.shape_cast %275 : vector<17x8x16xf32> to vector<136x16xf32>
    %c0_188 = arith.constant 0 : index
    %c64_189 = arith.constant 64 : index
    %277 = vector.load %arg19[%c0_188, %c64_189] : memref<136x240xf32, #tpu.memory_space<vmem>>, vector<136x16xf32>
    tpu.vector_store %arg19[%c0_188, %c64_189], %276 {strides = array<i32>} : memref<136x240xf32, #tpu.memory_space<vmem>>, vector<136x16xf32>,
    %278 = vector.extract_strided_slice %271 {offsets = [0, 2, 0], sizes = [17, 8, 16], strides = [1, 1, 1]} : vector<17x10x16xf32> to vector<17x8x16xf32>
    %279 = vector.shape_cast %278 : vector<17x8x16xf32> to vector<136x16xf32>
    %c0_190 = arith.constant 0 : index
    %c80_191 = arith.constant 80 : index
    %280 = vector.load %arg19[%c0_190, %c80_191] : memref<136x240xf32, #tpu.memory_space<vmem>>, vector<136x16xf32>
    tpu.vector_store %arg19[%c0_190, %c80_191], %279 {strides = array<i32>} : memref<136x240xf32, #tpu.memory_space<vmem>>, vector<136x16xf32>,
    %281 = vector.extract_strided_slice %260 {offsets = [2, 0, 0], sizes = [17, 10, 16], strides = [1, 1, 1]} : vector<21x10x16xf32> to vector<17x10x16xf32>
    %282 = vector.extract_strided_slice %281 {offsets = [0, 0, 0], sizes = [17, 8, 16], strides = [1, 1, 1]} : vector<17x10x16xf32> to vector<17x8x16xf32>
    %283 = vector.shape_cast %282 : vector<17x8x16xf32> to vector<136x16xf32>
    %c0_192 = arith.constant 0 : index
    %c96_193 = arith.constant 96 : index
    %284 = vector.load %arg19[%c0_192, %c96_193] : memref<136x240xf32, #tpu.memory_space<vmem>>, vector<136x16xf32>
    tpu.vector_store %arg19[%c0_192, %c96_193], %283 {strides = array<i32>} : memref<136x240xf32, #tpu.memory_space<vmem>>, vector<136x16xf32>,
    %285 = vector.extract_strided_slice %281 {offsets = [0, 1, 0], sizes = [17, 8, 16], strides = [1, 1, 1]} : vector<17x10x16xf32> to vector<17x8x16xf32>
    %286 = vector.shape_cast %285 : vector<17x8x16xf32> to vector<136x16xf32>
    %c0_194 = arith.constant 0 : index
    %c112_195 = arith.constant 112 : index
    %287 = vector.load %arg19[%c0_194, %c112_195] : memref<136x240xf32, #tpu.memory_space<vmem>>, vector<136x16xf32>
    tpu.vector_store %arg19[%c0_194, %c112_195], %286 {strides = array<i32>} : memref<136x240xf32, #tpu.memory_space<vmem>>, vector<136x16xf32>,
    %288 = vector.extract_strided_slice %281 {offsets = [0, 2, 0], sizes = [17, 8, 16], strides = [1, 1, 1]} : vector<17x10x16xf32> to vector<17x8x16xf32>
    %289 = vector.shape_cast %288 : vector<17x8x16xf32> to vector<136x16xf32>
    %c0_196 = arith.constant 0 : index
    %c128_197 = arith.constant 128 : index
    %290 = vector.load %arg19[%c0_196, %c128_197] : memref<136x240xf32, #tpu.memory_space<vmem>>, vector<136x16xf32>
    tpu.vector_store %arg19[%c0_196, %c128_197], %289 {strides = array<i32>} : memref<136x240xf32, #tpu.memory_space<vmem>>, vector<136x16xf32>,
    %291 = vector.extract_strided_slice %260 {offsets = [3, 0, 0], sizes = [17, 10, 16], strides = [1, 1, 1]} : vector<21x10x16xf32> to vector<17x10x16xf32>
    %292 = vector.extract_strided_slice %291 {offsets = [0, 0, 0], sizes = [17, 8, 16], strides = [1, 1, 1]} : vector<17x10x16xf32> to vector<17x8x16xf32>
    %293 = vector.shape_cast %292 : vector<17x8x16xf32> to vector<136x16xf32>
    %c0_198 = arith.constant 0 : index
    %c144_199 = arith.constant 144 : index
    %294 = vector.load %arg19[%c0_198, %c144_199] : memref<136x240xf32, #tpu.memory_space<vmem>>, vector<136x16xf32>
    tpu.vector_store %arg19[%c0_198, %c144_199], %293 {strides = array<i32>} : memref<136x240xf32, #tpu.memory_space<vmem>>, vector<136x16xf32>,
    %295 = vector.extract_strided_slice %291 {offsets = [0, 1, 0], sizes = [17, 8, 16], strides = [1, 1, 1]} : vector<17x10x16xf32> to vector<17x8x16xf32>
    %296 = vector.shape_cast %295 : vector<17x8x16xf32> to vector<136x16xf32>
    %c0_200 = arith.constant 0 : index
    %c160_201 = arith.constant 160 : index
    %297 = vector.load %arg19[%c0_200, %c160_201] : memref<136x240xf32, #tpu.memory_space<vmem>>, vector<136x16xf32>
    tpu.vector_store %arg19[%c0_200, %c160_201], %296 {strides = array<i32>} : memref<136x240xf32, #tpu.memory_space<vmem>>, vector<136x16xf32>,
    %298 = vector.extract_strided_slice %291 {offsets = [0, 2, 0], sizes = [17, 8, 16], strides = [1, 1, 1]} : vector<17x10x16xf32> to vector<17x8x16xf32>
    %299 = vector.shape_cast %298 : vector<17x8x16xf32> to vector<136x16xf32>
    %c0_202 = arith.constant 0 : index
    %c176_203 = arith.constant 176 : index
    %300 = vector.load %arg19[%c0_202, %c176_203] : memref<136x240xf32, #tpu.memory_space<vmem>>, vector<136x16xf32>
    tpu.vector_store %arg19[%c0_202, %c176_203], %299 {strides = array<i32>} : memref<136x240xf32, #tpu.memory_space<vmem>>, vector<136x16xf32>,
    %301 = vector.extract_strided_slice %260 {offsets = [4, 0, 0], sizes = [17, 10, 16], strides = [1, 1, 1]} : vector<21x10x16xf32> to vector<17x10x16xf32>
    %302 = vector.extract_strided_slice %301 {offsets = [0, 0, 0], sizes = [17, 8, 16], strides = [1, 1, 1]} : vector<17x10x16xf32> to vector<17x8x16xf32>
    %303 = vector.shape_cast %302 : vector<17x8x16xf32> to vector<136x16xf32>
    %c0_204 = arith.constant 0 : index
    %c192 = arith.constant 192 : index
    %304 = vector.load %arg19[%c0_204, %c192] : memref<136x240xf32, #tpu.memory_space<vmem>>, vector<136x16xf32>
    tpu.vector_store %arg19[%c0_204, %c192], %303 {strides = array<i32>} : memref<136x240xf32, #tpu.memory_space<vmem>>, vector<136x16xf32>,
    %305 = vector.extract_strided_slice %301 {offsets = [0, 1, 0], sizes = [17, 8, 16], strides = [1, 1, 1]} : vector<17x10x16xf32> to vector<17x8x16xf32>
    %306 = vector.shape_cast %305 : vector<17x8x16xf32> to vector<136x16xf32>
    %c0_205 = arith.constant 0 : index
    %c208 = arith.constant 208 : index
    %307 = vector.load %arg19[%c0_205, %c208] : memref<136x240xf32, #tpu.memory_space<vmem>>, vector<136x16xf32>
    tpu.vector_store %arg19[%c0_205, %c208], %306 {strides = array<i32>} : memref<136x240xf32, #tpu.memory_space<vmem>>, vector<136x16xf32>,
    %308 = vector.extract_strided_slice %301 {offsets = [0, 2, 0], sizes = [17, 8, 16], strides = [1, 1, 1]} : vector<17x10x16xf32> to vector<17x8x16xf32>
    %309 = vector.shape_cast %308 : vector<17x8x16xf32> to vector<136x16xf32>
    %c0_206 = arith.constant 0 : index
    %c224 = arith.constant 224 : index
    %310 = vector.load %arg19[%c0_206, %c224] : memref<136x240xf32, #tpu.memory_space<vmem>>, vector<136x16xf32>
    tpu.vector_store %arg19[%c0_206, %c224], %309 {strides = array<i32>} : memref<136x240xf32, #tpu.memory_space<vmem>>, vector<136x16xf32>,
    %c0_207 = arith.constant 0 : index
    %c0_208 = arith.constant 0 : index
    %311 = vector.load %arg19[%c0_207, %c0_208] : memref<136x240xf32, #tpu.memory_space<vmem>>, vector<136x240xf32>
    %c0_209 = arith.constant 0 : index
    %c0_210 = arith.constant 0 : index
    %312 = vector.load %arg8[%c0_209, %c0_210] : memref<240x2xf32, #tpu.memory_space<vmem>>, vector<240x2xf32>
    %cst_211 = arith.constant dense<0.000000e+00> : vector<136x2xf32>
    %313 = tpu.matmul %311, %312, %cst_211 {dimension_numbers = #tpu.dot_dimension_numbers<[1], [0], [0], [1], [0, 0, 1, 1], [], []>} : vector<136x240xf32>, vector<240x2xf32>, vector<136x2xf32> -> vector<136x2xf32>
    %c0_212 = arith.constant 0 : index
    %c0_213 = arith.constant 0 : index
    %314 = vector.load %arg9[%c0_212, %c0_213] : memref<1x2xf32, #tpu.memory_space<vmem>>, vector<1x2xf32>
    %315 = vector.broadcast %314 : vector<1x2xf32> to vector<136x2xf32>
    %316 = arith.addf %313, %315 : vector<136x2xf32>
    %c0_214 = arith.constant 0 : index
    %c0_215 = arith.constant 0 : index
    %317 = vector.load %arg10[%c0_214, %c0_215] : memref<136x1xf32, #tpu.memory_space<vmem>>, vector<136x1xf32>
    %318 = vector.broadcast %317 : vector<136x1xf32> to vector<136x2xf32>
    %319 = arith.mulf %316, %318 : vector<136x2xf32>
    %320 = vector.shape_cast %319 : vector<136x2xf32> to vector<17x8x2xf32>
    %c0_216 = arith.constant 0 : index
    %c0_217 = arith.constant 0 : index
    %c0_218 = arith.constant 0 : index
    %c0_219 = arith.constant 0 : index
    %321 = vector.load %arg11[%c0_216, %c0_217, %c0_218, %c0_219] : memref<1x17x8x2xf32, #tpu.memory_space<vmem>>, vector<1x17x8x2xf32>
    %322 = vector.shape_cast %321 : vector<1x17x8x2xf32> to vector<17x8x2xf32>
    %323 = vector.shape_cast %320 : vector<17x8x2xf32> to vector<1x17x8x2xf32>
    tpu.vector_store %arg11[%c0_216, %c0_217, %c0_218, %c0_219], %323 {strides = array<i32>} : memref<1x17x8x2xf32, #tpu.memory_space<vmem>>, vector<1x17x8x2xf32>,
    return
  }
  func.func @transform_0(%arg0: i32) -> (i32, i32, i32, i32) {
    %c0_i32 = arith.constant 0 : i32
    %c0_i32_0 = arith.constant 0 : i32
    %c0_i32_1 = arith.constant 0 : i32
    %c0_i32_2 = arith.constant 0 : i32
    return %arg0, %c0_i32, %c0_i32_0, %c0_i32_1 : i32, i32, i32, i32
  }
  func.func @transform_1(%arg0: i32) -> (i32, i32) {
    %c0_i32 = arith.constant 0 : i32
    %c0_i32_0 = arith.constant 0 : i32
    %c0_i32_1 = arith.constant 0 : i32
    return %c0_i32, %c0_i32_0 : i32, i32
  }
  func.func @transform_2(%arg0: i32) -> (i32, i32) {
    %c0_i32 = arith.constant 0 : i32
    %c0_i32_0 = arith.constant 0 : i32
    %c0_i32_1 = arith.constant 0 : i32
    return %c0_i32, %c0_i32_0 : i32, i32
  }
  func.func @transform_3(%arg0: i32) -> (i32, i32) {
    %c0_i32 = arith.constant 0 : i32
    %c0_i32_0 = arith.constant 0 : i32
    %c0_i32_1 = arith.constant 0 : i32
    return %c0_i32, %c0_i32_0 : i32, i32
  }
  func.func @transform_4(%arg0: i32) -> (i32, i32) {
    %c0_i32 = arith.constant 0 : i32
    %c0_i32_0 = arith.constant 0 : i32
    %c0_i32_1 = arith.constant 0 : i32
    return %c0_i32, %c0_i32_0 : i32, i32
  }
  func.func @transform_5(%arg0: i32) -> (i32, i32) {
    %c0_i32 = arith.constant 0 : i32
    %c0_i32_0 = arith.constant 0 : i32
    %c0_i32_1 = arith.constant 0 : i32
    return %c0_i32, %c0_i32_0 : i32, i32
  }
  func.func @transform_6(%arg0: i32) -> (i32, i32) {
    %c0_i32 = arith.constant 0 : i32
    %c0_i32_0 = arith.constant 0 : i32
    %c0_i32_1 = arith.constant 0 : i32
    return %c0_i32, %c0_i32_0 : i32, i32
  }
  func.func @transform_7(%arg0: i32) -> (i32, i32) {
    %c0_i32 = arith.constant 0 : i32
    %c0_i32_0 = arith.constant 0 : i32
    %c0_i32_1 = arith.constant 0 : i32
    return %c0_i32, %c0_i32_0 : i32, i32
  }
  func.func @transform_8(%arg0: i32) -> (i32, i32) {
    %c0_i32 = arith.constant 0 : i32
    %c0_i32_0 = arith.constant 0 : i32
    %c0_i32_1 = arith.constant 0 : i32
    return %c0_i32, %c0_i32_0 : i32, i32
  }
  func.func @transform_9(%arg0: i32) -> (i32, i32) {
    %c0_i32 = arith.constant 0 : i32
    %c0_i32_0 = arith.constant 0 : i32
    %c0_i32_1 = arith.constant 0 : i32
    return %c0_i32, %c0_i32_0 : i32, i32
  }
  func.func @transform_10(%arg0: i32) -> (i32, i32, i32, i32) {
    %c0_i32 = arith.constant 0 : i32
    %c0_i32_0 = arith.constant 0 : i32
    %c0_i32_1 = arith.constant 0 : i32
    %c0_i32_2 = arith.constant 0 : i32
    return %arg0, %c0_i32, %c0_i32_0, %c0_i32_1 : i32, i32, i32, i32
  }
}

</mosaic_0001>

<llo_original>
// kernel: degli_ed_forward.1
$region0: #{degli_ed_forward.1}
  #allocation0 [shape = 'u32[]', space=smem, size = 0x4, offset = 0x4, fixed_abs, tag = 'smem constant byte address 0x4 - core index']
  #allocation1 [shape = 'u32[144,128]{1,0:T(1,128)}', space=vmem, size = 0x12000, scoped, tag = 'internal scratch']
  #allocation2 [shape = 'f32[20,10,6]{2,1,0:T(8,128)}', space=vmem, size = 0x28000, scoped, tag = 'scratch operand']
  #allocation3 [shape = 'f32[12,10,8]{2,1,0:T(8,128)}', space=vmem, size = 0x18000, scoped, tag = 'scratch operand']
  #allocation4 [shape = 'f32[11,10,16]{2,1,0:T(8,128)}', space=vmem, size = 0x16000, scoped, tag = 'scratch operand']
  #allocation5 [shape = 'f32[21,10,16]{2,1,0:T(8,128)}', space=vmem, size = 0x2a000, scoped, tag = 'scratch operand']
  #allocation6 [shape = 'f32[64,90]{1,0:T(8,128)}', space=vmem, size = 0x8000, scoped, tag = 'scratch operand']
  #allocation7 [shape = 'f32[32,120]{1,0:T(8,128)}', space=vmem, size = 0x4000, scoped, tag = 'scratch operand']
  #allocation8 [shape = 'f32[64,192]{1,0:T(8,128)}', space=vmem, size = 0x10000, scoped, tag = 'scratch operand']
  #allocation9 [shape = 'f32[136,240]{1,0:T(8,128)}', space=vmem, size = 0x22000, scoped, tag = 'scratch operand']
  %s0 = inlined_call_operand.vmem [shape: f32[2,17,8,6], index: 0, kind: input, shape index: {}]
  %s1 = inlined_call_operand.vmem [shape: f32[90,8], index: 1, kind: input, shape index: {}]
  %s2 = inlined_call_operand.vmem [shape: f32[1,8], index: 2, kind: input, shape index: {}]
  %s3 = inlined_call_operand.vmem [shape: f32[120,16], index: 3, kind: input, shape index: {}]
  %s4 = inlined_call_operand.vmem [shape: f32[1,16], index: 4, kind: input, shape index: {}]
  %s5 = inlined_call_operand.vmem [shape: f32[192,8], index: 5, kind: input, shape index: {}]
  %s6 = inlined_call_operand.vmem [shape: f32[1,8], index: 6, kind: input, shape index: {}]
  %s7 = inlined_call_operand.vmem [shape: f32[240,2], index: 7, kind: input, shape index: {}]
  %s8 = inlined_call_operand.vmem [shape: f32[1,2], index: 8, kind: input, shape index: {}]
  %s9 = inlined_call_operand.vmem [shape: f32[136,1], index: 9, kind: input, shape index: {}]
  %s10 = inlined_call_operand.vmem [shape: f32[2,17,8,2], index: 10, kind: output, shape index: {}]
  %s11 = sld [smem:[#allocation0]]
  $region73: #{degli_ed_forward.1} parent=0
    _
  %s13 = ssub.s32 1, %s11
  %s14 = scalar_select 0, %s13, %s11
  loop: start=0, step=1, limit=4
  $region2: #{degli_ed_forward.1} parent=0 // loop_pre_header
    _
  $region3: #{degli_ed_forward.1} parent=0 // loop_header
    %s16 = sphi 0, %s20
    %p17 = scmp.ge.s32.totalorder %s16, 4
    %s26 = sphi 0, %s28
    %s29 = sphi 0, %s26
    %s30 = sphi 0, %s29
    %s46 = sphi 0, %s30
    %s50 = sphi 0, %s50
    %s52 = sphi 0, %s50
    %s53 = sphi 0, %s52
    %s67 = sphi 0, %s53
    %s71 = sphi 0, %s71
    %s73 = sphi 0, %s71
    %s74 = sphi 0, %s73
    %s88 = sphi 0, %s74
    %s92 = sphi 0, %s92
    %s94 = sphi 0, %s92
    %s95 = sphi 0, %s94
    %s109 = sphi 0, %s95
    %s113 = sphi 0, %s113
    %s115 = sphi 0, %s113
    %s116 = sphi 0, %s115
    %s130 = sphi 0, %s116
    %s134 = sphi 0, %s134
    %s136 = sphi 0, %s134
    %s137 = sphi 0, %s136
    %s151 = sphi 0, %s137
    %s155 = sphi 0, %s155
    %s157 = sphi 0, %s155
    %s158 = sphi 0, %s157
    %s172 = sphi 0, %s158
    %s176 = sphi 0, %s176
    %s178 = sphi 0, %s176
    %s179 = sphi 0, %s178
    %s193 = sphi 0, %s179
    %s197 = sphi 0, %s197
    %s199 = sphi 0, %s197
    %s200 = sphi 0, %s199
    %s214 = sphi 0, %s200
    %s218 = sphi 0, %s218
    %s220 = sphi 0, %s218
    %s221 = sphi 0, %s220
    %s235 = sphi 0, %s221
    %s241 = sphi 0, %s243
    %s244 = sphi 0, %s241
    %s245 = sphi 0, %s244
    %s261 = sphi 0, %s245
  $region4: #{degli_ed_forward.1} parent=0 // loop_header_branch
    %19 = sbr.rel (%p17) target = $region8
  $region5: #{degli_ed_forward.1} parent=0 // loop_body
    %s21 = ssub.s32 %s16, 1
    %s22 = ssub.s32 %s16, 2
    %s23 = sadd.s32 %s16, 1
    %s24 = ssub.s32 %s16, %s23
    %p25 = scmp.eq.s32.totalorder %s24, 0
    %s27 = sadd.s32 %s26, 1
    %s28 = scalar_select %p25, %s26, %s27
    %p31 = pneg %p25
    %p32 = scmp.eq.s32.totalorder %s16, 1
    %p33 = por %p31, %p32
    %p34 = scmp.ne.s32.totalorder %s26, %s29
    %p35 = scmp.eq.s32.totalorder %s16, 0
    %p36 = por %p34, %p35
    %p37 = scmp.ne.s32.totalorder %s26, %s29
    %p38 = scmp.eq.s32.totalorder %s21, 1
    %p39 = por %p37, %p38
    %p40 = scmp.ne.s32.totalorder %s29, %s30
    %p41 = scmp.eq.s32.totalorder %s21, 0
    %p42 = por %p40, %p41
    %p43 = scmp.ne.s32.totalorder %s29, %s30
    %p44 = scmp.eq.s32.totalorder %s22, 1
    %p45 = por %p43, %p44
    %p47 = scmp.ne.s32.totalorder %s30, %s46
    %p48 = scmp.eq.s32.totalorder %s22, 0
    %p49 = por %p47, %p48
    %s51 = sadd.s32 %s50, 1
    %p54 = scmp.eq.s32.totalorder %s16, 1
    %p55 = scmp.ne.s32.totalorder %s50, %s52
    %p56 = scmp.eq.s32.totalorder %s16, 0
    %p57 = por %p55, %p56
    %p58 = scmp.ne.s32.totalorder %s50, %s52
    %p59 = scmp.eq.s32.totalorder %s21, 1
    %p60 = por %p58, %p59
    %p61 = scmp.ne.s32.totalorder %s52, %s53
    %p62 = scmp.eq.s32.totalorder %s21, 0
    %p63 = por %p61, %p62
    %p64 = scmp.ne.s32.totalorder %s52, %s53
    %p65 = scmp.eq.s32.totalorder %s22, 1
    %p66 = por %p64, %p65
    %p68 = scmp.ne.s32.totalorder %s53, %s67
    %p69 = scmp.eq.s32.totalorder %s22, 0
    %p70 = por %p68, %p69
    %s72 = sadd.s32 %s71, 1
    %p75 = scmp.eq.s32.totalorder %s16, 1
    %p76 = scmp.ne.s32.totalorder %s71, %s73
    %p77 = scmp.eq.s32.totalorder %s16, 0
    %p78 = por %p76, %p77
    %p79 = scmp.ne.s32.totalorder %s71, %s73
    %p80 = scmp.eq.s32.totalorder %s21, 1
    %p81 = por %p79, %p80
    %p82 = scmp.ne.s32.totalorder %s73, %s74
    %p83 = scmp.eq.s32.totalorder %s21, 0
    %p84 = por %p82, %p83
    %p85 = scmp.ne.s32.totalorder %s73, %s74
    %p86 = scmp.eq.s32.totalorder %s22, 1
    %p87 = por %p85, %p86
    %p89 = scmp.ne.s32.totalorder %s74, %s88
    %p90 = scmp.eq.s32.totalorder %s22, 0
    %p91 = por %p89, %p90
    %s93 = sadd.s32 %s92, 1
    %p96 = scmp.eq.s32.totalorder %s16, 1
    %p97 = scmp.ne.s32.totalorder %s92, %s94
    %p98 = scmp.eq.s32.totalorder %s16, 0
    %p99 = por %p97, %p98
    %p100 = scmp.ne.s32.totalorder %s92, %s94
    %p101 = scmp.eq.s32.totalorder %s21, 1
    %p102 = por %p100, %p101
    %p103 = scmp.ne.s32.totalorder %s94, %s95
    %p104 = scmp.eq.s32.totalorder %s21, 0
    %p105 = por %p103, %p104
    %p106 = scmp.ne.s32.totalorder %s94, %s95
    %p107 = scmp.eq.s32.totalorder %s22, 1
    %p108 = por %p106, %p107
    %p110 = scmp.ne.s32.totalorder %s95, %s109
    %p111 = scmp.eq.s32.totalorder %s22, 0
    %p112 = por %p110, %p111
    %s114 = sadd.s32 %s113, 1
    %p117 = scmp.eq.s32.totalorder %s16, 1
    %p118 = scmp.ne.s32.totalorder %s113, %s115
    %p119 = scmp.eq.s32.totalorder %s16, 0
    %p120 = por %p118, %p119
    %p121 = scmp.ne.s32.totalorder %s113, %s115
    %p122 = scmp.eq.s32.totalorder %s21, 1
    %p123 = por %p121, %p122
    %p124 = scmp.ne.s32.totalorder %s115, %s116
    %p125 = scmp.eq.s32.totalorder %s21, 0
    %p126 = por %p124, %p125
    %p127 = scmp.ne.s32.totalorder %s115, %s116
    %p128 = scmp.eq.s32.totalorder %s22, 1
    %p129 = por %p127, %p128
    %p131 = scmp.ne.s32.totalorder %s116, %s130
    %p132 = scmp.eq.s32.totalorder %s22, 0
    %p133 = por %p131, %p132
    %s135 = sadd.s32 %s134, 1
    %p138 = scmp.eq.s32.totalorder %s16, 1
    %p139 = scmp.ne.s32.totalorder %s134, %s136
    %p140 = scmp.eq.s32.totalorder %s16, 0
    %p141 = por %p139, %p140
    %p142 = scmp.ne.s32.totalorder %s134, %s136
    %p143 = scmp.eq.s32.totalorder %s21, 1
    %p144 = por %p142, %p143
    %p145 = scmp.ne.s32.totalorder %s136, %s137
    %p146 = scmp.eq.s32.totalorder %s21, 0
    %p147 = por %p145, %p146
    %p148 = scmp.ne.s32.totalorder %s136, %s137
    %p149 = scmp.eq.s32.totalorder %s22, 1
    %p150 = por %p148, %p149
    %p152 = scmp.ne.s32.totalorder %s137, %s151
    %p153 = scmp.eq.s32.totalorder %s22, 0
    %p154 = por %p152, %p153
    %s156 = sadd.s32 %s155, 1
    %p159 = scmp.eq.s32.totalorder %s16, 1
    %p160 = scmp.ne.s32.totalorder %s155, %s157
    %p161 = scmp.eq.s32.totalorder %s16, 0
    %p162 = por %p160, %p161
    %p163 = scmp.ne.s32.totalorder %s155, %s157
    %p164 = scmp.eq.s32.totalorder %s21, 1
    %p165 = por %p163, %p164
    %p166 = scmp.ne.s32.totalorder %s157, %s158
    %p167 = scmp.eq.s32.totalorder %s21, 0
    %p168 = por %p166, %p167
    %p169 = scmp.ne.s32.totalorder %s157, %s158
    %p170 = scmp.eq.s32.totalorder %s22, 1
    %p171 = por %p169, %p170
    %p173 = scmp.ne.s32.totalorder %s158, %s172
    %p174 = scmp.eq.s32.totalorder %s22, 0
    %p175 = por %p173, %p174
    %s177 = sadd.s32 %s176, 1
    %p180 = scmp.eq.s32.totalorder %s16, 1
    %p181 = scmp.ne.s32.totalorder %s176, %s178
    %p182 = scmp.eq.s32.totalorder %s16, 0
    %p183 = por %p181, %p182
    %p184 = scmp.ne.s32.totalorder %s176, %s178
    %p185 = scmp.eq.s32.totalorder %s21, 1
    %p186 = por %p184, %p185
    %p187 = scmp.ne.s32.totalorder %s178, %s179
    %p188 = scmp.eq.s32.totalorder %s21, 0
    %p189 = por %p187, %p188
    %p190 = scmp.ne.s32.totalorder %s178, %s179
    %p191 = scmp.eq.s32.totalorder %s22, 1
    %p192 = por %p190, %p191
    %p194 = scmp.ne.s32.totalorder %s179, %s193
    %p195 = scmp.eq.s32.totalorder %s22, 0
    %p196 = por %p194, %p195
    %s198 = sadd.s32 %s197, 1
    %p201 = scmp.eq.s32.totalorder %s16, 1
    %p202 = scmp.ne.s32.totalorder %s197, %s199
    %p203 = scmp.eq.s32.totalorder %s16, 0
    %p204 = por %p202, %p203
    %p205 = scmp.ne.s32.totalorder %s197, %s199
    %p206 = scmp.eq.s32.totalorder %s21, 1
    %p207 = por %p205, %p206
    %p208 = scmp.ne.s32.totalorder %s199, %s200
    %p209 = scmp.eq.s32.totalorder %s21, 0
    %p210 = por %p208, %p209
    %p211 = scmp.ne.s32.totalorder %s199, %s200
    %p212 = scmp.eq.s32.totalorder %s22, 1
    %p213 = por %p211, %p212
    %p215 = scmp.ne.s32.totalorder %s200, %s214
    %p216 = scmp.eq.s32.totalorder %s22, 0
    %p217 = por %p215, %p216
    %s219 = sadd.s32 %s218, 1
    %p222 = scmp.eq.s32.totalorder %s16, 1
    %p223 = scmp.ne.s32.totalorder %s218, %s220
    %p224 = scmp.eq.s32.totalorder %s16, 0
    %p225 = por %p223, %p224
    %p226 = scmp.ne.s32.totalorder %s218, %s220
    %p227 = scmp.eq.s32.totalorder %s21, 1
    %p228 = por %p226, %p227
    %p229 = scmp.ne.s32.totalorder %s220, %s221
    %p230 = scmp.eq.s32.totalorder %s21, 0
    %p231 = por %p229, %p230
    %p232 = scmp.ne.s32.totalorder %s220, %s221
    %p233 = scmp.eq.s32.totalorder %s22, 1
    %p234 = por %p232, %p233
    %p236 = scmp.ne.s32.totalorder %s221, %s235
    %p237 = scmp.eq.s32.totalorder %s22, 0
    %p238 = por %p236, %p237
    %s239 = ssub.s32 %s16, %s23
    %p240 = scmp.eq.s32.totalorder %s239, 0
    %s242 = sadd.s32 %s241, 1
    %s243 = scalar_select %p240, %s241, %s242
    %p246 = pneg %p240
    %p247 = scmp.eq.s32.totalorder %s16, 1
    %p248 = por %p246, %p247
    %p249 = scmp.ne.s32.totalorder %s241, %s244
    %p250 = scmp.eq.s32.totalorder %s16, 0
    %p251 = por %p249, %p250
    %p252 = scmp.ne.s32.totalorder %s241, %s244
    %p253 = scmp.eq.s32.totalorder %s21, 1
    %p254 = por %p252, %p253
    %p255 = scmp.ne.s32.totalorder %s244, %s245
    %p256 = scmp.eq.s32.totalorder %s21, 0
    %p257 = por %p255, %p256
    %p258 = scmp.ne.s32.totalorder %s244, %s245
    %p259 = scmp.eq.s32.totalorder %s22, 1
    %p260 = por %p258, %p259
    %p262 = scmp.ne.s32.totalorder %s245, %s261
    %p263 = scmp.eq.s32.totalorder %s22, 0
    %p264 = por %p262, %p263
    %p265 = scmp.le.s32.totalorder 1, %s16
    %p266 = scmp.lt.s32.totalorder %s16, 3
    %p267 = pnand %p265, %p266
    %p268 = pneg %p267
    // Predicated region
    $region9: #{degli_ed_forward.1} parent=5 // pred_check
      _
    $region10: #{degli_ed_forward.1} parent=5 // pred_check_branch
      %270 = sbr.rel (%p267) target = $region12
    $region11: #{degli_ed_forward.1} parent=5 // pred_region
      %s271 = ssub.s32 %s16, 1
      // Predicated region
      $region13: #{degli_ed_forward.1} parent=11 // pred_check
        %p272 = pneg %p63
      $region14: #{degli_ed_forward.1} parent=11 // pred_check_branch
        %274 = sbr.rel (%p272) target = $region16
      $region15: #{degli_ed_forward.1} parent=11 // pred_region
        _
      $region16: #{degli_ed_forward.1} parent=11 // pred_fallthru
        _
      // Predicated region
      $region17: #{degli_ed_forward.1} parent=11 // pred_check
        %p275 = pneg %p84
      $region18: #{degli_ed_forward.1} parent=11 // pred_check_branch
        %277 = sbr.rel (%p275) target = $region20
      $region19: #{degli_ed_forward.1} parent=11 // pred_region
        _
      $region20: #{degli_ed_forward.1} parent=11 // pred_fallthru
        _
      // Predicated region
      $region21: #{degli_ed_forward.1} parent=11 // pred_check
        %p278 = pneg %p105
      $region22: #{degli_ed_forward.1} parent=11 // pred_check_branch
        %280 = sbr.rel (%p278) target = $region24
      $region23: #{degli_ed_forward.1} parent=11 // pred_region
        _
      $region24: #{degli_ed_forward.1} parent=11 // pred_fallthru
        _
      // Predicated region
      $region25: #{degli_ed_forward.1} parent=11 // pred_check
        %p281 = pneg %p126
      $region26: #{degli_ed_forward.1} parent=11 // pred_check_branch
        %283 = sbr.rel (%p281) target = $region28
      $region27: #{degli_ed_forward.1} parent=11 // pred_region
        _
      $region28: #{degli_ed_forward.1} parent=11 // pred_fallthru
        _
      // Predicated region
      $region29: #{degli_ed_forward.1} parent=11 // pred_check
        %p284 = pneg %p147
      $region30: #{degli_ed_forward.1} parent=11 // pred_check_branch
        %286 = sbr.rel (%p284) target = $region32
      $region31: #{degli_ed_forward.1} parent=11 // pred_region
        _
      $region32: #{degli_ed_forward.1} parent=11 // pred_fallthru
        _
      // Predicated region
      $region33: #{degli_ed_forward.1} parent=11 // pred_check
        %p287 = pneg %p168
      $region34: #{degli_ed_forward.1} parent=11 // pred_check_branch
        %289 = sbr.rel (%p287) target = $region36
      $region35: #{degli_ed_forward.1} parent=11 // pred_region
        _
      $region36: #{degli_ed_forward.1} parent=11 // pred_fallthru
        _
      // Predicated region
      $region37: #{degli_ed_forward.1} parent=11 // pred_check
        %p290 = pneg %p189
      $region38: #{degli_ed_forward.1} parent=11 // pred_check_branch
        %292 = sbr.rel (%p290) target = $region40
      $region39: #{degli_ed_forward.1} parent=11 // pred_region
        _
      $region40: #{degli_ed_forward.1} parent=11 // pred_fallthru
        _
      // Predicated region
      $region41: #{degli_ed_forward.1} parent=11 // pred_check
        %p293 = pneg %p210
      $region42: #{degli_ed_forward.1} parent=11 // pred_check_branch
        %295 = sbr.rel (%p293) target = $region44
      $region43: #{degli_ed_forward.1} parent=11 // pred_region
        _
      $region44: #{degli_ed_forward.1} parent=11 // pred_fallthru
        _
      // Predicated region
      $region45: #{degli_ed_forward.1} parent=11 // pred_check
        %p296 = pneg %p231
      $region46: #{degli_ed_forward.1} parent=11 // pred_check_branch
        %298 = sbr.rel (%p296) target = $region48
      $region47: #{degli_ed_forward.1} parent=11 // pred_region
        _
      $region48: #{degli_ed_forward.1} parent=11 // pred_fallthru
        _
    $region12: #{degli_ed_forward.1} parent=5 // pred_fallthru
      _
    %p299 = scmp.lt.s32.totalorder %s16, 2
    // Predicated region
    $region49: #{degli_ed_forward.1} parent=5 // pred_check
      %p300 = pneg %p299
    $region50: #{degli_ed_forward.1} parent=5 // pred_check_branch
      %302 = sbr.rel (%p300) target = $region52
    $region51: #{degli_ed_forward.1} parent=5 // pred_region
      // Predicated region
      $region53: #{degli_ed_forward.1} parent=51 // pred_check
        %p303 = pneg %p36
      $region54: #{degli_ed_forward.1} parent=51 // pred_check_branch
        %305 = sbr.rel (%p303) target = $region56
      $region55: #{degli_ed_forward.1} parent=51 // pred_region
        %p306 = scmp.lt.s32.totalorder %s16, 1
        %s307 = scalar_select %p306, %s16, 1
        %s308 = smul.addr %s307, 17
        %s309 = smul.addr %s308, 8
        %s310 = scalar_lea.vmem %s0, %s309
      $region56: #{degli_ed_forward.1} parent=51 // pred_fallthru
        _
    $region52: #{degli_ed_forward.1} parent=5 // pred_fallthru
      _
    %p311 = scmp.le.s32.totalorder 1, %s16
    %p312 = scmp.lt.s32.totalorder %s16, 3
    %p313 = pnand %p311, %p312
    %p314 = pneg %p313
    // Predicated region
    $region57: #{degli_ed_forward.1} parent=5 // pred_check
      _
    $region58: #{degli_ed_forward.1} parent=5 // pred_check_branch
      %316 = sbr.rel (%p313) target = $region60
    $region59: #{degli_ed_forward.1} parent=5 // pred_region
      %s317 = ssub.s32 %s16, 1
      %p318 = scmp.lt.s32.totalorder %s21, 1
      %s319 = scalar_select %p318, %s21, 1
      %s320 = smul.addr %s319, 17
      %s321 = smul.addr %s320, 8
      %s322 = scalar_lea.vmem %s0, %s321
      %p323 = pneg %p42
      %p324 = pneg %p39
      %p325 = pneg %p63
      %p326 = pneg %p60
      %p327 = pneg %p84
      %p328 = pneg %p81
      %p329 = pneg %p105
      %p330 = pneg %p102
      %p331 = pneg %p126
      %p332 = pneg %p123
      %p333 = pneg %p147
      %p334 = pneg %p144
      %p335 = pneg %p168
      %p336 = pneg %p165
      %p337 = pneg %p189
      %p338 = pneg %p186
      %p339 = pneg %p210
      %p340 = pneg %p207
      %p341 = pneg %p231
      %p342 = pneg %p228
      %p343 = pneg %p257
      %p344 = pneg %p254
      %p345 = scmp.lt.s32.totalorder %s21, 1
      %s346 = scalar_select %p345, %s21, 1
      %s347 = smul.addr %s346, 17
      %s348 = smul.addr %s347, 8
      %s349 = scalar_lea.vmem %s10, %s348
      %p350 = scmp.lt.s32.totalorder %s21, 1
      %s351 = scalar_select %p350, %s21, 1
      %s352 = smul.addr %s351, 17
      %s353 = smul.addr %s352, 8
      %s354 = scalar_lea.vmem %s0, %s353
      %p355 = scmp.lt.s32.totalorder %s21, 1
      %s356 = scalar_select %p355, %s21, 1
      %s357 = smul.addr %s356, 17
      %s358 = smul.addr %s357, 8
      %s359 = scalar_lea.vmem %s10, %s358
      %v360 = vld [vmem:[%s354] sm:$0xff]
      %v361 = vld [vmem:[%s354 + $0x8] sm:$0xff]
      %v362 = vld [vmem:[%s354 + $0x10] sm:$0xff]
      %v363 = vld [vmem:[%s354 + $0x18] sm:$0xff]
      %v364 = vld [vmem:[%s354 + $0x20] sm:$0xff]
      %v365 = vld [vmem:[%s354 + $0x28] sm:$0xff]
      %v366 = vld [vmem:[%s354 + $0x30] sm:$0xff]
      %v367 = vld [vmem:[%s354 + $0x38] sm:$0xff]
      %v368 = vld [vmem:[%s354 + $0x40] sm:$0xff]
      %v369 = vld [vmem:[%s354 + $0x48] sm:$0xff]
      %v370 = vld [vmem:[%s354 + $0x50] sm:$0xff]
      %v371 = vld [vmem:[%s354 + $0x58] sm:$0xff]
      %v372 = vld [vmem:[%s354 + $0x60] sm:$0xff]
      %v373 = vld [vmem:[%s354 + $0x68] sm:$0xff]
      %v374 = vld [vmem:[%s354 + $0x70] sm:$0xff]
      %v375 = vld [vmem:[%s354 + $0x78] sm:$0xff]
      %v376 = vld [vmem:[%s354 + $0x80] sm:$0xff]
      %s377 = scalar_lea.vmem [#allocation2], 16
      %vm378 = vcmask 48128
      %379 = vst.msk [vmem:[%s377 + $0x1] sm:$0xff] %vm378, %v360
      %380 = vst.msk [vmem:[%s377 + $0x11] sm:$0xff] %vm378, %v361
      %381 = vst.msk [vmem:[%s377 + $0x21] sm:$0xff] %vm378, %v362
      %382 = vst.msk [vmem:[%s377 + $0x31] sm:$0xff] %vm378, %v363
      %383 = vst.msk [vmem:[%s377 + $0x41] sm:$0xff] %vm378, %v364
      %384 = vst.msk [vmem:[%s377 + $0x51] sm:$0xff] %vm378, %v365
      %385 = vst.msk [vmem:[%s377 + $0x61] sm:$0xff] %vm378, %v366
      %386 = vst.msk [vmem:[%s377 + $0x71] sm:$0xff] %vm378, %v367
      %387 = vst.msk [vmem:[%s377 + $0x81] sm:$0xff] %vm378, %v368
      %388 = vst.msk [vmem:[%s377 + $0x91] sm:$0xff] %vm378, %v369
      %389 = vst.msk [vmem:[%s377 + $0xa1] sm:$0xff] %vm378, %v370
      %390 = vst.msk [vmem:[%s377 + $0xb1] sm:$0xff] %vm378, %v371
      %391 = vst.msk [vmem:[%s377 + $0xc1] sm:$0xff] %vm378, %v372
      %392 = vst.msk [vmem:[%s377 + $0xd1] sm:$0xff] %vm378, %v373
      %393 = vst.msk [vmem:[%s377 + $0xe1] sm:$0xff] %vm378, %v374
      %394 = vst.msk [vmem:[%s377 + $0xf1] sm:$0xff] %vm378, %v375
      %395 = vst.msk [vmem:[%s377 + $0x101] sm:$0xff] %vm378, %v376
      %396 = vst.msk [vmem:[#allocation2 + $0x1] sm:$0xff] %vm378, %v360
      %s397 = scalar_lea.vmem [#allocation2], 288
      %398 = vst.msk [vmem:[%s397 + $0x1] sm:$0xff] %vm378, %v376
      %s399 = scalar_lea.vmem [#allocation2], 304
      %400 = vst.msk [vmem:[%s399 + $0x1] sm:$0xff] %vm378, %v376
      %v401 = vld [vmem:[#allocation2 + $0x1] sm:$0x1]
      %v402 = vld [vmem:[#allocation2 + $0x11] sm:$0x1]
      %v403 = vld [vmem:[#allocation2 + $0x21] sm:$0x1]
      %v404 = vld [vmem:[#allocation2 + $0x31] sm:$0x1]
      %v405 = vld [vmem:[#allocation2 + $0x41] sm:$0x1]
      %v406 = vld [vmem:[#allocation2 + $0x51] sm:$0x1]
      %v407 = vld [vmem:[#allocation2 + $0x61] sm:$0x1]
      %v408 = vld [vmem:[#allocation2 + $0x71] sm:$0x1]
      %v409 = vld [vmem:[#allocation2 + $0x81] sm:$0x1]
      %v410 = vld [vmem:[#allocation2 + $0x91] sm:$0x1]
      %v411 = vld [vmem:[#allocation2 + $0xa1] sm:$0x1]
      %v412 = vld [vmem:[#allocation2 + $0xb1] sm:$0x1]
      %v413 = vld [vmem:[#allocation2 + $0xc1] sm:$0x1]
      %v414 = vld [vmem:[#allocation2 + $0xd1] sm:$0x1]
      %v415 = vld [vmem:[#allocation2 + $0xe1] sm:$0x1]
      %v416 = vld [vmem:[#allocation2 + $0xf1] sm:$0x1]
      %v417 = vld [vmem:[#allocation2 + $0x101] sm:$0x1]
      %v418 = vld [vmem:[#allocation2 + $0x111] sm:$0x1]
      %v419 = vld [vmem:[#allocation2 + $0x121] sm:$0x1]
      %v420 = vld [vmem:[#allocation2 + $0x131] sm:$0x1]
      %vm421 = vcmask 40960
      %422 = vst.msk [vmem:[#allocation2] sm:$0x1] %vm421, %v401
      %423 = vst.msk [vmem:[#allocation2 + $0x10] sm:$0x1] %vm421, %v402
      %424 = vst.msk [vmem:[#allocation2 + $0x20] sm:$0x1] %vm421, %v403
      %425 = vst.msk [vmem:[#allocation2 + $0x30] sm:$0x1] %vm421, %v404
      %426 = vst.msk [vmem:[#allocation2 + $0x40] sm:$0x1] %vm421, %v405
      %427 = vst.msk [vmem:[#allocation2 + $0x50] sm:$0x1] %vm421, %v406
      %428 = vst.msk [vmem:[#allocation2 + $0x60] sm:$0x1] %vm421, %v407
      %429 = vst.msk [vmem:[#allocation2 + $0x70] sm:$0x1] %vm421, %v408
      %430 = vst.msk [vmem:[#allocation2 + $0x80] sm:$0x1] %vm421, %v409
      %431 = vst.msk [vmem:[#allocation2 + $0x90] sm:$0x1] %vm421, %v410
      %432 = vst.msk [vmem:[#allocation2 + $0xa0] sm:$0x1] %vm421, %v411
      %433 = vst.msk [vmem:[#allocation2 + $0xb0] sm:$0x1] %vm421, %v412
      %434 = vst.msk [vmem:[#allocation2 + $0xc0] sm:$0x1] %vm421, %v413
      %435 = vst.msk [vmem:[#allocation2 + $0xd0] sm:$0x1] %vm421, %v414
      %436 = vst.msk [vmem:[#allocation2 + $0xe0] sm:$0x1] %vm421, %v415
      %437 = vst.msk [vmem:[#allocation2 + $0xf0] sm:$0x1] %vm421, %v416
      %438 = vst.msk [vmem:[#allocation2 + $0x100] sm:$0x1] %vm421, %v417
      %439 = vst.msk [vmem:[#allocation2 + $0x110] sm:$0x1] %vm421, %v418
      %440 = vst.msk [vmem:[#allocation2 + $0x120] sm:$0x1] %vm421, %v419
      %441 = vst.msk [vmem:[#allocation2 + $0x130] sm:$0x1] %vm421, %v420
      %v442 = vld [vmem:[#allocation2 + $0x8] sm:$0x1]
      %v443 = vld [vmem:[#allocation2 + $0x18] sm:$0x1]
      %v444 = vld [vmem:[#allocation2 + $0x28] sm:$0x1]
      %v445 = vld [vmem:[#allocation2 + $0x38] sm:$0x1]
      %v446 = vld [vmem:[#allocation2 + $0x48] sm:$0x1]
      %v447 = vld [vmem:[#allocation2 + $0x58] sm:$0x1]
      %v448 = vld [vmem:[#allocation2 + $0x68] sm:$0x1]
      %v449 = vld [vmem:[#allocation2 + $0x78] sm:$0x1]
      %v450 = vld [vmem:[#allocation2 + $0x88] sm:$0x1]
      %v451 = vld [vmem:[#allocation2 + $0x98] sm:$0x1]
      %v452 = vld [vmem:[#allocation2 + $0xa8] sm:$0x1]
      %v453 = vld [vmem:[#allocation2 + $0xb8] sm:$0x1]
      %v454 = vld [vmem:[#allocation2 + $0xc8] sm:$0x1]
      %v455 = vld [vmem:[#allocation2 + $0xd8] sm:$0x1]
      %v456 = vld [vmem:[#allocation2 + $0xe8] sm:$0x1]
      %v457 = vld [vmem:[#allocation2 + $0xf8] sm:$0x1]
      %v458 = vld [vmem:[#allocation2 + $0x108] sm:$0x1]
      %v459 = vld [vmem:[#allocation2 + $0x118] sm:$0x1]
      %v460 = vld [vmem:[#allocation2 + $0x128] sm:$0x1]
      %v461 = vld [vmem:[#allocation2 + $0x138] sm:$0x1]
      %462 = vst.msk [vmem:[#allocation2 + $0x9] sm:$0x1] %vm421, %v442
      %463 = vst.msk [vmem:[#allocation2 + $0x19] sm:$0x1] %vm421, %v443
      %464 = vst.msk [vmem:[#allocation2 + $0x29] sm:$0x1] %vm421, %v444
      %465 = vst.msk [vmem:[#allocation2 + $0x39] sm:$0x1] %vm421, %v445
      %466 = vst.msk [vmem:[#allocation2 + $0x49] sm:$0x1] %vm421, %v446
      %467 = vst.msk [vmem:[#allocation2 + $0x59] sm:$0x1] %vm421, %v447
      %468 = vst.msk [vmem:[#allocation2 + $0x69] sm:$0x1] %vm421, %v448
      %469 = vst.msk [vmem:[#allocation2 + $0x79] sm:$0x1] %vm421, %v449
      %470 = vst.msk [vmem:[#allocation2 + $0x89] sm:$0x1] %vm421, %v450
      %471 = vst.msk [vmem:[#allocation2 + $0x99] sm:$0x1] %vm421, %v451
      %472 = vst.msk [vmem:[#allocation2 + $0xa9] sm:$0x1] %vm421, %v452
      %473 = vst.msk [vmem:[#allocation2 + $0xb9] sm:$0x1] %vm421, %v453
      %474 = vst.msk [vmem:[#allocation2 + $0xc9] sm:$0x1] %vm421, %v454
      %475 = vst.msk [vmem:[#allocation2 + $0xd9] sm:$0x1] %vm421, %v455
      %476 = vst.msk [vmem:[#allocation2 + $0xe9] sm:$0x1] %vm421, %v456
      %477 = vst.msk [vmem:[#allocation2 + $0xf9] sm:$0x1] %vm421, %v457
      %478 = vst.msk [vmem:[#allocation2 + $0x109] sm:$0x1] %vm421, %v458
      %479 = vst.msk [vmem:[#allocation2 + $0x119] sm:$0x1] %vm421, %v459
      %480 = vst.msk [vmem:[#allocation2 + $0x129] sm:$0x1] %vm421, %v460
      %481 = vst.msk [vmem:[#allocation2 + $0x139] sm:$0x1] %vm421, %v461
      %v482 = vld [vmem:[#allocation2] sm:$0xff]
      %v483 = vld [vmem:[#allocation2 + $0x8] sm:$0x3]
      %v484 = vld [vmem:[#allocation2 + $0x10] sm:$0xff]
      %v485 = vld [vmem:[#allocation2 + $0x18] sm:$0x3]
      %v486 = vld [vmem:[#allocation2 + $0x20] sm:$0xff]
      %v487 = vld [vmem:[#allocation2 + $0x28] sm:$0x3]
      %v488 = vld [vmem:[#allocation2 + $0x30] sm:$0xff]
      %v489 = vld [vmem:[#allocation2 + $0x38] sm:$0x3]
      %v490 = vld [vmem:[#allocation2 + $0x40] sm:$0xff]
      %v491 = vld [vmem:[#allocation2 + $0x48] sm:$0x3]
      %v492 = vld [vmem:[#allocation2 + $0x50] sm:$0xff]
      %v493 = vld [vmem:[#allocation2 + $0x58] sm:$0x3]
      %v494 = vld [vmem:[#allocation2 + $0x60] sm:$0xff]
      %v495 = vld [vmem:[#allocation2 + $0x68] sm:$0x3]
      %v496 = vld [vmem:[#allocation2 + $0x70] sm:$0xff]
      %v497 = vld [vmem:[#allocation2 + $0x78] sm:$0x3]
      %v498 = vld [vmem:[#allocation2 + $0x80] sm:$0xff]
      %v499 = vld [vmem:[#allocation2 + $0x88] sm:$0x3]
      %v500 = vld [vmem:[#allocation2 + $0x90] sm:$0xff]
      %v501 = vld [vmem:[#allocation2 + $0x98] sm:$0x3]
      %v502 = vld [vmem:[#allocation2 + $0xa0] sm:$0xff]
      %v503 = vld [vmem:[#allocation2 + $0xa8] sm:$0x3]
      %v504 = vld [vmem:[#allocation2 + $0xb0] sm:$0xff]
      %v505 = vld [vmem:[#allocation2 + $0xb8] sm:$0x3]
      %v506 = vld [vmem:[#allocation2 + $0xc0] sm:$0xff]
      %v507 = vld [vmem:[#allocation2 + $0xc8] sm:$0x3]
      %v508 = vld [vmem:[#allocation2 + $0xd0] sm:$0xff]
      %v509 = vld [vmem:[#allocation2 + $0xd8] sm:$0x3]
      %v510 = vld [vmem:[#allocation2 + $0xe0] sm:$0xff]
      %v511 = vld [vmem:[#allocation2 + $0xe8] sm:$0x3]
      %v512 = vld [vmem:[#allocation2 + $0xf0] sm:$0xff]
      %v513 = vld [vmem:[#allocation2 + $0xf8] sm:$0x3]
      %v514 = vld [vmem:[#allocation2 + $0x100] sm:$0xff]
      %v515 = vld [vmem:[#allocation2 + $0x108] sm:$0x3]
      %v516 = vld [vmem:[#allocation2 + $0x110] sm:$0xff]
      %v517 = vld [vmem:[#allocation2 + $0x118] sm:$0x3]
      %v518 = vld [vmem:[#allocation2 + $0x120] sm:$0xff]
      %v519 = vld [vmem:[#allocation2 + $0x128] sm:$0x3]
      %520 = vst.msk [vmem:[#allocation6] sm:$0xff] %vm378, %v482
      %521 = vst.msk [vmem:[#allocation6 + $0x8] sm:$0xff] %vm378, %v486
      %522 = vst.msk [vmem:[#allocation6 + $0x10] sm:$0xff] %vm378, %v490
      %523 = vst.msk [vmem:[#allocation6 + $0x18] sm:$0xff] %vm378, %v494
      %524 = vst.msk [vmem:[#allocation6 + $0x20] sm:$0xff] %vm378, %v498
      %525 = vst.msk [vmem:[#allocation6 + $0x28] sm:$0xff] %vm378, %v502
      %526 = vst.msk [vmem:[#allocation6 + $0x30] sm:$0xff] %vm378, %v506
      %527 = vst.msk [vmem:[#allocation6 + $0x38] sm:$0xff] %vm378, %v510
      %vm544 = vcmask 1046528
      %v545 = vrot.slane %v482, 1
      %v546 = vrot.slane %v483, 1
      %v547 = vsel %vm544, %v545, %v546
      %v548 = vrot.slane %v486, 1
      %v549 = vrot.slane %v487, 1
      %v550 = vsel %vm544, %v548, %v549
      %v551 = vrot.slane %v490, 1
      %v552 = vrot.slane %v491, 1
      %v553 = vsel %vm544, %v551, %v552
      %v554 = vrot.slane %v494, 1
      %v555 = vrot.slane %v495, 1
      %v556 = vsel %vm544, %v554, %v555
      %v557 = vrot.slane %v498, 1
      %v558 = vrot.slane %v499, 1
      %v559 = vsel %vm544, %v557, %v558
      %v560 = vrot.slane %v502, 1
      %v561 = vrot.slane %v503, 1
      %v562 = vsel %vm544, %v560, %v561
      %v563 = vrot.slane %v506, 1
      %v564 = vrot.slane %v507, 1
      %v565 = vsel %vm544, %v563, %v564
      %v566 = vrot.slane %v510, 1
      %v567 = vrot.slane %v511, 1
      %v568 = vsel %vm544, %v566, %v567
      %569 = vrot.lane.b32.xlu0 %v547, 6
      %v570 = vpop.permute.xlu0 %569
      %571 = vrot.lane.b32.xlu0 %v550, 6
      %v572 = vpop.permute.xlu0 %571
      %573 = vrot.lane.b32.xlu0 %v553, 6
      %v574 = vpop.permute.xlu0 %573
      %575 = vrot.lane.b32.xlu0 %v556, 6
      %v576 = vpop.permute.xlu0 %575
      %577 = vrot.lane.b32.xlu0 %v559, 6
      %v578 = vpop.permute.xlu0 %577
      %579 = vrot.lane.b32.xlu0 %v562, 6
      %v580 = vpop.permute.xlu0 %579
      %581 = vrot.lane.b32.xlu0 %v565, 6
      %v582 = vpop.permute.xlu0 %581
      %583 = vrot.lane.b32.xlu0 %v568, 6
      %v584 = vpop.permute.xlu0 %583
      %vm593 = vcmask 97328
      %594 = vst.msk [vmem:[#allocation6] sm:$0xff] %vm593, %v570
      %595 = vst.msk [vmem:[#allocation6 + $0x8] sm:$0xff] %vm593, %v572
      %596 = vst.msk [vmem:[#allocation6 + $0x10] sm:$0xff] %vm593, %v574
      %597 = vst.msk [vmem:[#allocation6 + $0x18] sm:$0xff] %vm593, %v576
      %598 = vst.msk [vmem:[#allocation6 + $0x20] sm:$0xff] %vm593, %v578
      %599 = vst.msk [vmem:[#allocation6 + $0x28] sm:$0xff] %vm593, %v580
      %600 = vst.msk [vmem:[#allocation6 + $0x30] sm:$0xff] %vm593, %v582
      %601 = vst.msk [vmem:[#allocation6 + $0x38] sm:$0xff] %vm593, %v584
      %vm602 = vcmask 1045504
      %v603 = vrot.slane %v482, 2
      %v604 = vrot.slane %v483, 2
      %v605 = vsel %vm602, %v603, %v604
      %v606 = vrot.slane %v486, 2
      %v607 = vrot.slane %v487, 2
      %v608 = vsel %vm602, %v606, %v607
      %v609 = vrot.slane %v490, 2
      %v610 = vrot.slane %v491, 2
      %v611 = vsel %vm602, %v609, %v610
      %v612 = vrot.slane %v494, 2
      %v613 = vrot.slane %v495, 2
      %v614 = vsel %vm602, %v612, %v613
      %v615 = vrot.slane %v498, 2
      %v616 = vrot.slane %v499, 2
      %v617 = vsel %vm602, %v615, %v616
      %v618 = vrot.slane %v502, 2
      %v619 = vrot.slane %v503, 2
      %v620 = vsel %vm602, %v618, %v619
      %v621 = vrot.slane %v506, 2
      %v622 = vrot.slane %v507, 2
      %v623 = vsel %vm602, %v621, %v622
      %v624 = vrot.slane %v510, 2
      %v625 = vrot.slane %v511, 2
      %v626 = vsel %vm602, %v624, %v625
      %627 = vrot.lane.b32.xlu0 %v605, 12
      %v628 = vpop.permute.xlu0 %627
      %629 = vrot.lane.b32.xlu0 %v608, 12
      %v630 = vpop.permute.xlu0 %629
      %631 = vrot.lane.b32.xlu0 %v611, 12
      %v632 = vpop.permute.xlu0 %631
      %633 = vrot.lane.b32.xlu0 %v614, 12
      %v634 = vpop.permute.xlu0 %633
      %635 = vrot.lane.b32.xlu0 %v617, 12
      %v636 = vpop.permute.xlu0 %635
      %637 = vrot.lane.b32.xlu0 %v620, 12
      %v638 = vpop.permute.xlu0 %637
      %639 = vrot.lane.b32.xlu0 %v623, 12
      %v640 = vpop.permute.xlu0 %639
      %641 = vrot.lane.b32.xlu0 %v626, 12
      %v642 = vpop.permute.xlu0 %641
      %vm651 = vcmask 146528
      %652 = vst.msk [vmem:[#allocation6] sm:$0xff] %vm651, %v628
      %653 = vst.msk [vmem:[#allocation6 + $0x8] sm:$0xff] %vm651, %v630
      %654 = vst.msk [vmem:[#allocation6 + $0x10] sm:$0xff] %vm651, %v632
      %655 = vst.msk [vmem:[#allocation6 + $0x18] sm:$0xff] %vm651, %v634
      %656 = vst.msk [vmem:[#allocation6 + $0x20] sm:$0xff] %vm651, %v636
      %657 = vst.msk [vmem:[#allocation6 + $0x28] sm:$0xff] %vm651, %v638
      %658 = vst.msk [vmem:[#allocation6 + $0x30] sm:$0xff] %vm651, %v640
      %659 = vst.msk [vmem:[#allocation6 + $0x38] sm:$0xff] %vm651, %v642
      %668 = vrot.lane.b32.xlu0 %v484, 18
      %v669 = vpop.permute.xlu0 %668
      %670 = vrot.lane.b32.xlu0 %v488, 18
      %v671 = vpop.permute.xlu0 %670
      %672 = vrot.lane.b32.xlu0 %v492, 18
      %v673 = vpop.permute.xlu0 %672
      %674 = vrot.lane.b32.xlu0 %v496, 18
      %v675 = vpop.permute.xlu0 %674
      %676 = vrot.lane.b32.xlu0 %v500, 18
      %v677 = vpop.permute.xlu0 %676
      %678 = vrot.lane.b32.xlu0 %v504, 18
      %v679 = vpop.permute.xlu0 %678
      %680 = vrot.lane.b32.xlu0 %v508, 18
      %v681 = vpop.permute.xlu0 %680
      %682 = vrot.lane.b32.xlu0 %v512, 18
      %v683 = vpop.permute.xlu0 %682
      %vm692 = vcmask 195728
      %693 = vst.msk [vmem:[#allocation6] sm:$0xff] %vm692, %v669
      %694 = vst.msk [vmem:[#allocation6 + $0x8] sm:$0xff] %vm692, %v671
      %695 = vst.msk [vmem:[#allocation6 + $0x10] sm:$0xff] %vm692, %v673
      %696 = vst.msk [vmem:[#allocation6 + $0x18] sm:$0xff] %vm692, %v675
      %697 = vst.msk [vmem:[#allocation6 + $0x20] sm:$0xff] %vm692, %v677
      %698 = vst.msk [vmem:[#allocation6 + $0x28] sm:$0xff] %vm692, %v679
      %699 = vst.msk [vmem:[#allocation6 + $0x30] sm:$0xff] %vm692, %v681
      %700 = vst.msk [vmem:[#allocation6 + $0x38] sm:$0xff] %vm692, %v683
      %v709 = vrot.slane %v484, 1
      %v710 = vrot.slane %v485, 1
      %v711 = vsel %vm544, %v709, %v710
      %v712 = vrot.slane %v488, 1
      %v713 = vrot.slane %v489, 1
      %v714 = vsel %vm544, %v712, %v713
      %v715 = vrot.slane %v492, 1
      %v716 = vrot.slane %v493, 1
      %v717 = vsel %vm544, %v715, %v716
      %v718 = vrot.slane %v496, 1
      %v719 = vrot.slane %v497, 1
      %v720 = vsel %vm544, %v718, %v719
      %v721 = vrot.slane %v500, 1
      %v722 = vrot.slane %v501, 1
      %v723 = vsel %vm544, %v721, %v722
      %v724 = vrot.slane %v504, 1
      %v725 = vrot.slane %v505, 1
      %v726 = vsel %vm544, %v724, %v725
      %v727 = vrot.slane %v508, 1
      %v728 = vrot.slane %v509, 1
      %v729 = vsel %vm544, %v727, %v728
      %v730 = vrot.slane %v512, 1
      %v731 = vrot.slane %v513, 1
      %v732 = vsel %vm544, %v730, %v731
      %733 = vrot.lane.b32.xlu0 %v711, 24
      %v734 = vpop.permute.xlu0 %733
      %735 = vrot.lane.b32.xlu0 %v714, 24
      %v736 = vpop.permute.xlu0 %735
      %737 = vrot.lane.b32.xlu0 %v717, 24
      %v738 = vpop.permute.xlu0 %737
      %739 = vrot.lane.b32.xlu0 %v720, 24
      %v740 = vpop.permute.xlu0 %739
      %741 = vrot.lane.b32.xlu0 %v723, 24
      %v742 = vpop.permute.xlu0 %741
      %743 = vrot.lane.b32.xlu0 %v726, 24
      %v744 = vpop.permute.xlu0 %743
      %745 = vrot.lane.b32.xlu0 %v729, 24
      %v746 = vpop.permute.xlu0 %745
      %747 = vrot.lane.b32.xlu0 %v732, 24
      %v748 = vpop.permute.xlu0 %747
      %vm757 = vcmask 244928
      %758 = vst.msk [vmem:[#allocation6] sm:$0xff] %vm757, %v734
      %759 = vst.msk [vmem:[#allocation6 + $0x8] sm:$0xff] %vm757, %v736
      %760 = vst.msk [vmem:[#allocation6 + $0x10] sm:$0xff] %vm757, %v738
      %761 = vst.msk [vmem:[#allocation6 + $0x18] sm:$0xff] %vm757, %v740
      %762 = vst.msk [vmem:[#allocation6 + $0x20] sm:$0xff] %vm757, %v742
      %763 = vst.msk [vmem:[#allocation6 + $0x28] sm:$0xff] %vm757, %v744
      %764 = vst.msk [vmem:[#allocation6 + $0x30] sm:$0xff] %vm757, %v746
      %765 = vst.msk [vmem:[#allocation6 + $0x38] sm:$0xff] %vm757, %v748
      %v766 = vrot.slane %v484, 2
      %v767 = vrot.slane %v485, 2
      %v768 = vsel %vm602, %v766, %v767
      %v769 = vrot.slane %v488, 2
      %v770 = vrot.slane %v489, 2
      %v771 = vsel %vm602, %v769, %v770
      %v772 = vrot.slane %v492, 2
      %v773 = vrot.slane %v493, 2
      %v774 = vsel %vm602, %v772, %v773
      %v775 = vrot.slane %v496, 2
      %v776 = vrot.slane %v497, 2
      %v777 = vsel %vm602, %v775, %v776
      %v778 = vrot.slane %v500, 2
      %v779 = vrot.slane %v501, 2
      %v780 = vsel %vm602, %v778, %v779
      %v781 = vrot.slane %v504, 2
      %v782 = vrot.slane %v505, 2
      %v783 = vsel %vm602, %v781, %v782
      %v784 = vrot.slane %v508, 2
      %v785 = vrot.slane %v509, 2
      %v786 = vsel %vm602, %v784, %v785
      %v787 = vrot.slane %v512, 2
      %v788 = vrot.slane %v513, 2
      %v789 = vsel %vm602, %v787, %v788
      %790 = vrot.lane.b32.xlu0 %v768, 30
      %v791 = vpop.permute.xlu0 %790
      %792 = vrot.lane.b32.xlu0 %v771, 30
      %v793 = vpop.permute.xlu0 %792
      %794 = vrot.lane.b32.xlu0 %v774, 30
      %v795 = vpop.permute.xlu0 %794
      %796 = vrot.lane.b32.xlu0 %v777, 30
      %v797 = vpop.permute.xlu0 %796
      %798 = vrot.lane.b32.xlu0 %v780, 30
      %v799 = vpop.permute.xlu0 %798
      %800 = vrot.lane.b32.xlu0 %v783, 30
      %v801 = vpop.permute.xlu0 %800
      %802 = vrot.lane.b32.xlu0 %v786, 30
      %v803 = vpop.permute.xlu0 %802
      %804 = vrot.lane.b32.xlu0 %v789, 30
      %v805 = vpop.permute.xlu0 %804
      %vm814 = vcmask 294128
      %815 = vst.msk [vmem:[#allocation6] sm:$0xff] %vm814, %v791
      %816 = vst.msk [vmem:[#allocation6 + $0x8] sm:$0xff] %vm814, %v793
      %817 = vst.msk [vmem:[#allocation6 + $0x10] sm:$0xff] %vm814, %v795
      %818 = vst.msk [vmem:[#allocation6 + $0x18] sm:$0xff] %vm814, %v797
      %819 = vst.msk [vmem:[#allocation6 + $0x20] sm:$0xff] %vm814, %v799
      %820 = vst.msk [vmem:[#allocation6 + $0x28] sm:$0xff] %vm814, %v801
      %821 = vst.msk [vmem:[#allocation6 + $0x30] sm:$0xff] %vm814, %v803
      %822 = vst.msk [vmem:[#allocation6 + $0x38] sm:$0xff] %vm814, %v805
      %824 = vrot.lane.b32.xlu0 %v486, 36
      %v825 = vpop.permute.xlu0 %824
      %826 = vrot.lane.b32.xlu0 %v490, 36
      %v827 = vpop.permute.xlu0 %826
      %828 = vrot.lane.b32.xlu0 %v494, 36
      %v829 = vpop.permute.xlu0 %828
      %830 = vrot.lane.b32.xlu0 %v498, 36
      %v831 = vpop.permute.xlu0 %830
      %832 = vrot.lane.b32.xlu0 %v502, 36
      %v833 = vpop.permute.xlu0 %832
      %834 = vrot.lane.b32.xlu0 %v506, 36
      %v835 = vpop.permute.xlu0 %834
      %836 = vrot.lane.b32.xlu0 %v510, 36
      %v837 = vpop.permute.xlu0 %836
      %838 = vrot.lane.b32.xlu0 %v514, 36
      %v839 = vpop.permute.xlu0 %838
      %vm848 = vcmask 343328
      %849 = vst.msk [vmem:[#allocation6] sm:$0xff] %vm848, %v825
      %850 = vst.msk [vmem:[#allocation6 + $0x8] sm:$0xff] %vm848, %v827
      %851 = vst.msk [vmem:[#allocation6 + $0x10] sm:$0xff] %vm848, %v829
      %852 = vst.msk [vmem:[#allocation6 + $0x18] sm:$0xff] %vm848, %v831
      %853 = vst.msk [vmem:[#allocation6 + $0x20] sm:$0xff] %vm848, %v833
      %854 = vst.msk [vmem:[#allocation6 + $0x28] sm:$0xff] %vm848, %v835
      %855 = vst.msk [vmem:[#allocation6 + $0x30] sm:$0xff] %vm848, %v837
      %856 = vst.msk [vmem:[#allocation6 + $0x38] sm:$0xff] %vm848, %v839
      %v858 = vrot.slane %v514, 1
      %v859 = vrot.slane %v515, 1
      %v860 = vsel %vm544, %v858, %v859
      %861 = vrot.lane.b32.xlu0 %v550, 42
      %v862 = vpop.permute.xlu0 %861
      %863 = vrot.lane.b32.xlu0 %v553, 42
      %v864 = vpop.permute.xlu0 %863
      %865 = vrot.lane.b32.xlu0 %v556, 42
      %v866 = vpop.permute.xlu0 %865
      %867 = vrot.lane.b32.xlu0 %v559, 42
      %v868 = vpop.permute.xlu0 %867
      %869 = vrot.lane.b32.xlu0 %v562, 42
      %v870 = vpop.permute.xlu0 %869
      %871 = vrot.lane.b32.xlu0 %v565, 42
      %v872 = vpop.permute.xlu0 %871
      %873 = vrot.lane.b32.xlu0 %v568, 42
      %v874 = vpop.permute.xlu0 %873
      %875 = vrot.lane.b32.xlu0 %v860, 42
      %v876 = vpop.permute.xlu0 %875
      %vm885 = vcmask 392528
      %886 = vst.msk [vmem:[#allocation6] sm:$0xff] %vm885, %v862
      %887 = vst.msk [vmem:[#allocation6 + $0x8] sm:$0xff] %vm885, %v864
      %888 = vst.msk [vmem:[#allocation6 + $0x10] sm:$0xff] %vm885, %v866
      %889 = vst.msk [vmem:[#allocation6 + $0x18] sm:$0xff] %vm885, %v868
      %890 = vst.msk [vmem:[#allocation6 + $0x20] sm:$0xff] %vm885, %v870
      %891 = vst.msk [vmem:[#allocation6 + $0x28] sm:$0xff] %vm885, %v872
      %892 = vst.msk [vmem:[#allocation6 + $0x30] sm:$0xff] %vm885, %v874
      %893 = vst.msk [vmem:[#allocation6 + $0x38] sm:$0xff] %vm885, %v876
      %v894 = vrot.slane %v514, 2
      %v895 = vrot.slane %v515, 2
      %v896 = vsel %vm602, %v894, %v895
      %897 = vrot.lane.b32.xlu0 %v608, 48
      %v898 = vpop.permute.xlu0 %897
      %899 = vrot.lane.b32.xlu0 %v611, 48
      %v900 = vpop.permute.xlu0 %899
      %901 = vrot.lane.b32.xlu0 %v614, 48
      %v902 = vpop.permute.xlu0 %901
      %903 = vrot.lane.b32.xlu0 %v617, 48
      %v904 = vpop.permute.xlu0 %903
      %905 = vrot.lane.b32.xlu0 %v620, 48
      %v906 = vpop.permute.xlu0 %905
      %907 = vrot.lane.b32.xlu0 %v623, 48
      %v908 = vpop.permute.xlu0 %907
      %909 = vrot.lane.b32.xlu0 %v626, 48
      %v910 = vpop.permute.xlu0 %909
      %911 = vrot.lane.b32.xlu0 %v896, 48
      %v912 = vpop.permute.xlu0 %911
      %vm921 = vcmask 441728
      %922 = vst.msk [vmem:[#allocation6] sm:$0xff] %vm921, %v898
      %923 = vst.msk [vmem:[#allocation6 + $0x8] sm:$0xff] %vm921, %v900
      %924 = vst.msk [vmem:[#allocation6 + $0x10] sm:$0xff] %vm921, %v902
      %925 = vst.msk [vmem:[#allocation6 + $0x18] sm:$0xff] %vm921, %v904
      %926 = vst.msk [vmem:[#allocation6 + $0x20] sm:$0xff] %vm921, %v906
      %927 = vst.msk [vmem:[#allocation6 + $0x28] sm:$0xff] %vm921, %v908
      %928 = vst.msk [vmem:[#allocation6 + $0x30] sm:$0xff] %vm921, %v910
      %929 = vst.msk [vmem:[#allocation6 + $0x38] sm:$0xff] %vm921, %v912
      %931 = vrot.lane.b32.xlu0 %v488, 54
      %v932 = vpop.permute.xlu0 %931
      %933 = vrot.lane.b32.xlu0 %v492, 54
      %v934 = vpop.permute.xlu0 %933
      %935 = vrot.lane.b32.xlu0 %v496, 54
      %v936 = vpop.permute.xlu0 %935
      %937 = vrot.lane.b32.xlu0 %v500, 54
      %v938 = vpop.permute.xlu0 %937
      %939 = vrot.lane.b32.xlu0 %v504, 54
      %v940 = vpop.permute.xlu0 %939
      %941 = vrot.lane.b32.xlu0 %v508, 54
      %v942 = vpop.permute.xlu0 %941
      %943 = vrot.lane.b32.xlu0 %v512, 54
      %v944 = vpop.permute.xlu0 %943
      %945 = vrot.lane.b32.xlu0 %v516, 54
      %v946 = vpop.permute.xlu0 %945
      %vm955 = vcmask 490928
      %956 = vst.msk [vmem:[#allocation6] sm:$0xff] %vm955, %v932
      %957 = vst.msk [vmem:[#allocation6 + $0x8] sm:$0xff] %vm955, %v934
      %958 = vst.msk [vmem:[#allocation6 + $0x10] sm:$0xff] %vm955, %v936
      %959 = vst.msk [vmem:[#allocation6 + $0x18] sm:$0xff] %vm955, %v938
      %960 = vst.msk [vmem:[#allocation6 + $0x20] sm:$0xff] %vm955, %v940
      %961 = vst.msk [vmem:[#allocation6 + $0x28] sm:$0xff] %vm955, %v942
      %962 = vst.msk [vmem:[#allocation6 + $0x30] sm:$0xff] %vm955, %v944
      %963 = vst.msk [vmem:[#allocation6 + $0x38] sm:$0xff] %vm955, %v946
      %v965 = vrot.slane %v516, 1
      %v966 = vrot.slane %v517, 1
      %v967 = vsel %vm544, %v965, %v966
      %968 = vrot.lane.b32.xlu0 %v714, 60
      %v969 = vpop.permute.xlu0 %968
      %970 = vrot.lane.b32.xlu0 %v717, 60
      %v971 = vpop.permute.xlu0 %970
      %972 = vrot.lane.b32.xlu0 %v720, 60
      %v973 = vpop.permute.xlu0 %972
      %974 = vrot.lane.b32.xlu0 %v723, 60
      %v975 = vpop.permute.xlu0 %974
      %976 = vrot.lane.b32.xlu0 %v726, 60
      %v977 = vpop.permute.xlu0 %976
      %978 = vrot.lane.b32.xlu0 %v729, 60
      %v979 = vpop.permute.xlu0 %978
      %980 = vrot.lane.b32.xlu0 %v732, 60
      %v981 = vpop.permute.xlu0 %980
      %982 = vrot.lane.b32.xlu0 %v967, 60
      %v983 = vpop.permute.xlu0 %982
      %vm992 = vcmask 540128
      %993 = vst.msk [vmem:[#allocation6] sm:$0xff] %vm992, %v969
      %994 = vst.msk [vmem:[#allocation6 + $0x8] sm:$0xff] %vm992, %v971
      %995 = vst.msk [vmem:[#allocation6 + $0x10] sm:$0xff] %vm992, %v973
      %996 = vst.msk [vmem:[#allocation6 + $0x18] sm:$0xff] %vm992, %v975
      %997 = vst.msk [vmem:[#allocation6 + $0x20] sm:$0xff] %vm992, %v977
      %998 = vst.msk [vmem:[#allocation6 + $0x28] sm:$0xff] %vm992, %v979
      %999 = vst.msk [vmem:[#allocation6 + $0x30] sm:$0xff] %vm992, %v981
      %1000 = vst.msk [vmem:[#allocation6 + $0x38] sm:$0xff] %vm992, %v983
      %v1001 = vrot.slane %v516, 2
      %v1002 = vrot.slane %v517, 2
      %v1003 = vsel %vm602, %v1001, %v1002
      %1004 = vrot.lane.b32.xlu0 %v771, 66
      %v1005 = vpop.permute.xlu0 %1004
      %1006 = vrot.lane.b32.xlu0 %v774, 66
      %v1007 = vpop.permute.xlu0 %1006
      %1008 = vrot.lane.b32.xlu0 %v777, 66
      %v1009 = vpop.permute.xlu0 %1008
      %1010 = vrot.lane.b32.xlu0 %v780, 66
      %v1011 = vpop.permute.xlu0 %1010
      %1012 = vrot.lane.b32.xlu0 %v783, 66
      %v1013 = vpop.permute.xlu0 %1012
      %1014 = vrot.lane.b32.xlu0 %v786, 66
      %v1015 = vpop.permute.xlu0 %1014
      %1016 = vrot.lane.b32.xlu0 %v789, 66
      %v1017 = vpop.permute.xlu0 %1016
      %1018 = vrot.lane.b32.xlu0 %v1003, 66
      %v1019 = vpop.permute.xlu0 %1018
      %vm1028 = vcmask 589328
      %1029 = vst.msk [vmem:[#allocation6] sm:$0xff] %vm1028, %v1005
      %1030 = vst.msk [vmem:[#allocation6 + $0x8] sm:$0xff] %vm1028, %v1007
      %1031 = vst.msk [vmem:[#allocation6 + $0x10] sm:$0xff] %vm1028, %v1009
      %1032 = vst.msk [vmem:[#allocation6 + $0x18] sm:$0xff] %vm1028, %v1011
      %1033 = vst.msk [vmem:[#allocation6 + $0x20] sm:$0xff] %vm1028, %v1013
      %1034 = vst.msk [vmem:[#allocation6 + $0x28] sm:$0xff] %vm1028, %v1015
      %1035 = vst.msk [vmem:[#allocation6 + $0x30] sm:$0xff] %vm1028, %v1017
      %1036 = vst.msk [vmem:[#allocation6 + $0x38] sm:$0xff] %vm1028, %v1019
      %1038 = vrot.lane.b32.xlu0 %v490, 72
      %v1039 = vpop.permute.xlu0 %1038
      %1040 = vrot.lane.b32.xlu0 %v494, 72
      %v1041 = vpop.permute.xlu0 %1040
      %1042 = vrot.lane.b32.xlu0 %v498, 72
      %v1043 = vpop.permute.xlu0 %1042
      %1044 = vrot.lane.b32.xlu0 %v502, 72
      %v1045 = vpop.permute.xlu0 %1044
      %1046 = vrot.lane.b32.xlu0 %v506, 72
      %v1047 = vpop.permute.xlu0 %1046
      %1048 = vrot.lane.b32.xlu0 %v510, 72
      %v1049 = vpop.permute.xlu0 %1048
      %1050 = vrot.lane.b32.xlu0 %v514, 72
      %v1051 = vpop.permute.xlu0 %1050
      %1052 = vrot.lane.b32.xlu0 %v518, 72
      %v1053 = vpop.permute.xlu0 %1052
      %vm1062 = vcmask 638528
      %1063 = vst.msk [vmem:[#allocation6] sm:$0xff] %vm1062, %v1039
      %1064 = vst.msk [vmem:[#allocation6 + $0x8] sm:$0xff] %vm1062, %v1041
      %1065 = vst.msk [vmem:[#allocation6 + $0x10] sm:$0xff] %vm1062, %v1043
      %1066 = vst.msk [vmem:[#allocation6 + $0x18] sm:$0xff] %vm1062, %v1045
      %1067 = vst.msk [vmem:[#allocation6 + $0x20] sm:$0xff] %vm1062, %v1047
      %1068 = vst.msk [vmem:[#allocation6 + $0x28] sm:$0xff] %vm1062, %v1049
      %1069 = vst.msk [vmem:[#allocation6 + $0x30] sm:$0xff] %vm1062, %v1051
      %1070 = vst.msk [vmem:[#allocation6 + $0x38] sm:$0xff] %vm1062, %v1053
      %v1072 = vrot.slane %v518, 1
      %v1073 = vrot.slane %v519, 1
      %v1074 = vsel %vm544, %v1072, %v1073
      %1075 = vrot.lane.b32.xlu0 %v553, 78
      %v1076 = vpop.permute.xlu0 %1075
      %1077 = vrot.lane.b32.xlu0 %v556, 78
      %v1078 = vpop.permute.xlu0 %1077
      %1079 = vrot.lane.b32.xlu0 %v559, 78
      %v1080 = vpop.permute.xlu0 %1079
      %1081 = vrot.lane.b32.xlu0 %v562, 78
      %v1082 = vpop.permute.xlu0 %1081
      %1083 = vrot.lane.b32.xlu0 %v565, 78
      %v1084 = vpop.permute.xlu0 %1083
      %1085 = vrot.lane.b32.xlu0 %v568, 78
      %v1086 = vpop.permute.xlu0 %1085
      %1087 = vrot.lane.b32.xlu0 %v860, 78
      %v1088 = vpop.permute.xlu0 %1087
      %1089 = vrot.lane.b32.xlu0 %v1074, 78
      %v1090 = vpop.permute.xlu0 %1089
      %vm1099 = vcmask 687728
      %1100 = vst.msk [vmem:[#allocation6] sm:$0xff] %vm1099, %v1076
      %1101 = vst.msk [vmem:[#allocation6 + $0x8] sm:$0xff] %vm1099, %v1078
      %1102 = vst.msk [vmem:[#allocation6 + $0x10] sm:$0xff] %vm1099, %v1080
      %1103 = vst.msk [vmem:[#allocation6 + $0x18] sm:$0xff] %vm1099, %v1082
      %1104 = vst.msk [vmem:[#allocation6 + $0x20] sm:$0xff] %vm1099, %v1084
      %1105 = vst.msk [vmem:[#allocation6 + $0x28] sm:$0xff] %vm1099, %v1086
      %1106 = vst.msk [vmem:[#allocation6 + $0x30] sm:$0xff] %vm1099, %v1088
      %1107 = vst.msk [vmem:[#allocation6 + $0x38] sm:$0xff] %vm1099, %v1090
      %v1108 = vrot.slane %v518, 2
      %v1109 = vrot.slane %v519, 2
      %v1110 = vsel %vm602, %v1108, %v1109
      %1111 = vrot.lane.b32.xlu0 %v611, 84
      %v1112 = vpop.permute.xlu0 %1111
      %1113 = vrot.lane.b32.xlu0 %v614, 84
      %v1114 = vpop.permute.xlu0 %1113
      %1115 = vrot.lane.b32.xlu0 %v617, 84
      %v1116 = vpop.permute.xlu0 %1115
      %1117 = vrot.lane.b32.xlu0 %v620, 84
      %v1118 = vpop.permute.xlu0 %1117
      %1119 = vrot.lane.b32.xlu0 %v623, 84
      %v1120 = vpop.permute.xlu0 %1119
      %1121 = vrot.lane.b32.xlu0 %v626, 84
      %v1122 = vpop.permute.xlu0 %1121
      %1123 = vrot.lane.b32.xlu0 %v896, 84
      %v1124 = vpop.permute.xlu0 %1123
      %1125 = vrot.lane.b32.xlu0 %v1110, 84
      %v1126 = vpop.permute.xlu0 %1125
      %vm1135 = vcmask 736928
      %1136 = vst.msk [vmem:[#allocation6] sm:$0xff] %vm1135, %v1112
      %1137 = vst.msk [vmem:[#allocation6 + $0x8] sm:$0xff] %vm1135, %v1114
      %1138 = vst.msk [vmem:[#allocation6 + $0x10] sm:$0xff] %vm1135, %v1116
      %1139 = vst.msk [vmem:[#allocation6 + $0x18] sm:$0xff] %vm1135, %v1118
      %1140 = vst.msk [vmem:[#allocation6 + $0x20] sm:$0xff] %vm1135, %v1120
      %1141 = vst.msk [vmem:[#allocation6 + $0x28] sm:$0xff] %vm1135, %v1122
      %1142 = vst.msk [vmem:[#allocation6 + $0x30] sm:$0xff] %vm1135, %v1124
      %1143 = vst.msk [vmem:[#allocation6 + $0x38] sm:$0xff] %vm1135, %v1126
      %v1144 = vld [vmem:[#allocation6] sm:$0xff]
      %v1145 = vld [vmem:[#allocation6 + $0x8] sm:$0xff]
      %v1146 = vld [vmem:[#allocation6 + $0x10] sm:$0xff]
      %v1147 = vld [vmem:[#allocation6 + $0x18] sm:$0xff]
      %v1148 = vld [vmem:[#allocation6 + $0x20] sm:$0xff]
      %v1149 = vld [vmem:[#allocation6 + $0x28] sm:$0xff]
      %v1150 = vld [vmem:[#allocation6 + $0x30] sm:$0xff]
      %v1151 = vld [vmem:[#allocation6 + $0x38] sm:$0xff]
      %v1152 = vld [vmem:[%s1] sm:$0xff]
      %v1153 = vld [vmem:[%s1 + $0x8] sm:$0xff]
      %v1154 = vld [vmem:[%s1 + $0x10] sm:$0xff]
      %v1155 = vld [vmem:[%s1 + $0x18] sm:$0xff]
      %v1156 = vld [vmem:[%s1 + $0x20] sm:$0xff]
      %v1157 = vld [vmem:[%s1 + $0x28] sm:$0xff]
      %v1158 = vld [vmem:[%s1 + $0x30] sm:$0xff]
      %v1159 = vld [vmem:[%s1 + $0x38] sm:$0xff]
      %v1160 = vld [vmem:[%s1 + $0x40] sm:$0xff]
      %v1161 = vld [vmem:[%s1 + $0x48] sm:$0xff]
      %v1162 = vld [vmem:[%s1 + $0x50] sm:$0xff]
      %v1163 = vld [vmem:[%s1 + $0x58] sm:$0x3]
      %v1164 = vld [vmem:[%s2] sm:$0x1]
      %v1166 = vlaneseq
      %v1167 = vshrl.u32 %v1166, 7
      %v1168 = vsub.s32 0, %v1167
      %v1169 = vrot.slane %v1164, %v1168
      %vm1171 = vcmask 736256
      %v1173 = vsel %vm1171, %v1144, 0
      %v1176 = vsel %vm1171, %v1145, 0
      %v1179 = vsel %vm1171, %v1146, 0
      %v1182 = vsel %vm1171, %v1147, 0
      %v1185 = vsel %vm1171, %v1148, 0
      %v1188 = vsel %vm1171, %v1149, 0
      %v1191 = vsel %vm1171, %v1150, 0
      %v1194 = vsel %vm1171, %v1151, 0
      %vm1196 = vcmask 1041408
      %v1198 = vsel %vm1196, %v1163, 0
      %1200 = vmatprep.subr.mxu0 0.0
      %1201 = vmatpush1.msra.mxu0 %v1152
      %1202 = vmatprep.subr.mxu0 0.0
      %1203 = vmatpush1.msra.mxu0 %v1153
      %1204 = vmatprep.subr.mxu0 0.0
      %1205 = vmatpush1.msra.mxu0 %v1154
      %1206 = vmatprep.subr.mxu0 0.0
      %1207 = vmatpush1.msra.mxu0 %v1155
      %1208 = vmatprep.subr.mxu0 0.0
      %1209 = vmatpush1.msra.mxu0 %v1156
      %1210 = vmatprep.subr.mxu0 0.0
      %1211 = vmatpush1.msra.mxu0 %v1157
      %1212 = vmatprep.subr.mxu0 0.0
      %1213 = vmatpush1.msra.mxu0 %v1158
      %1214 = vmatprep.subr.mxu0 0.0
      %1215 = vmatpush1.msra.mxu0 %v1159
      %1216 = vmatprep.subr.mxu0 0.0
      %1217 = vmatpush1.msra.mxu0 %v1160
      %1218 = vmatprep.subr.mxu0 0.0
      %1219 = vmatpush1.msra.mxu0 %v1161
      %1220 = vmatprep.subr.mxu0 0.0
      %1221 = vmatpush1.msra.mxu0 %v1162
      %1222 = vmatprep.subr.mxu0 0.0
      %1223 = vmatpush1.msra.mxu0 %v1198
      %1224 = vmatprep.subr.mxu0 0.0
      %1225 = vmatpush1.msra.mxu0 0.0
      %1226 = vmatprep.subr.mxu0 0.0
      %1227 = vmatpush1.msra.mxu0 0.0
      %1228 = vmatprep.subr.mxu0 0.0
      %1229 = vmatpush1.msra.mxu0 0.0
      %1230 = vmatprep.subr.mxu0 0.0
      %1231 = vmatpush1.msra.mxu0 0.0
      %1232 = vmatprep.subr.mxu0 0.0
      %1233 = vmatpush1.msra.mxu0 0.0
      %1234 = vmatprep.subr.mxu0 0.0
      %1235 = vmatpush1.msra.mxu0 0.0
      %1236 = vmatprep.subr.mxu0 0.0
      %1237 = vmatpush1.msra.mxu0 0.0
      %1238 = vmatprep.subr.mxu0 0.0
      %1239 = vmatpush1.msra.mxu0 0.0
      %1240 = vmatprep.subr.mxu0 0.0
      %1241 = vmatpush1.msra.mxu0 0.0
      %1242 = vmatprep.subr.mxu0 0.0
      %1243 = vmatpush1.msra.mxu0 0.0
      %1244 = vmatprep.subr.mxu0 0.0
      %1245 = vmatpush1.msra.mxu0 0.0
      %1246 = vmatprep.subr.mxu0 0.0
      %1247 = vmatpush1.msra.mxu0 0.0
      %1248 = vmatprep.subr.mxu0 0.0
      %1249 = vmatpush1.msra.mxu0 0.0
      %1250 = vmatprep.subr.mxu0 0.0
      %1251 = vmatpush1.msra.mxu0 0.0
      %1252 = vmatprep.subr.mxu0 0.0
      %1253 = vmatpush1.msra.mxu0 0.0
      %1254 = vmatprep.subr.mxu0 0.0
      %1255 = vmatpush1.msra.mxu0 0.0
      %1256 = vmatprep.subr.mxu0 0.0
      %1257 = vmatpush1.msra.mxu0 0.0
      %1258 = vmatprep.subr.mxu0 0.0
      %1259 = vmatpush1.msra.mxu0 0.0
      %1260 = vmatprep.subr.mxu0 0.0
      %1261 = vmatpush1.msra.mxu0 0.0
      %1262 = vmatprep.subr.mxu0 0.0
      %1263 = vmatpush1.msra.mxu0 0.0
      %1264 = vmatprep.mubr.f32.mxu0 0.0
      %1265 = vmatmul.mubr.f32.gmra.mrb[0].mxu0 %v1173
      %v1266 = vpop.f32.mrb[0].mxu0
      %v1267 = vadd.f32 %v1169, %v1266
      %v1268 = vpop.f32.mrb[0].mxu0
      %1269 = vmatprep.mubr.f32.mxu0 0.0
      %1270 = vmatmul.mubr.f32.gmra.mrb[0].mxu0 %v1176
      %v1271 = vpop.f32.mrb[0].mxu0
      %v1272 = vadd.f32 %v1169, %v1271
      %v1273 = vpop.f32.mrb[0].mxu0
      %1274 = vmatprep.mubr.f32.mxu0 0.0
      %1275 = vmatmul.mubr.f32.gmra.mrb[0].mxu0 %v1179
      %v1276 = vpop.f32.mrb[0].mxu0
      %v1277 = vadd.f32 %v1169, %v1276
      %v1278 = vpop.f32.mrb[0].mxu0
      %1279 = vmatprep.mubr.f32.mxu0 0.0
      %1280 = vmatmul.mubr.f32.gmra.mrb[0].mxu0 %v1182
      %v1281 = vpop.f32.mrb[0].mxu0
      %v1282 = vadd.f32 %v1169, %v1281
      %v1283 = vpop.f32.mrb[0].mxu0
      %1284 = vmatprep.mubr.f32.mxu0 0.0
      %1285 = vmatmul.mubr.f32.gmra.mrb[0].mxu0 %v1185
      %v1286 = vpop.f32.mrb[0].mxu0
      %v1287 = vadd.f32 %v1169, %v1286
      %v1288 = vpop.f32.mrb[0].mxu0
      %1289 = vmatprep.mubr.f32.mxu0 0.0
      %1290 = vmatmul.mubr.f32.gmra.mrb[0].mxu0 %v1188
      %v1291 = vpop.f32.mrb[0].mxu0
      %v1292 = vadd.f32 %v1169, %v1291
      %v1293 = vpop.f32.mrb[0].mxu0
      %1294 = vmatprep.mubr.f32.mxu0 0.0
      %1295 = vmatmul.mubr.f32.gmra.mrb[0].mxu0 %v1191
      %v1296 = vpop.f32.mrb[0].mxu0
      %v1297 = vadd.f32 %v1169, %v1296
      %v1298 = vpop.f32.mrb[0].mxu0
      %1299 = vmatprep.mubr.f32.mxu0 0.0
      %1300 = vmatmul.mubr.f32.gmra.mrb[0].mxu0 %v1194
      %v1301 = vpop.f32.mrb[0].mxu0
      %v1302 = vadd.f32 %v1169, %v1301
      %v1303 = vpop.f32.mrb[0].mxu0
      %1304 = vdwg.mxu0
      %v1305 = vmax.f32 %v1267, 0.0
      %v1306 = vmax.f32 %v1272, 0.0
      %v1307 = vmax.f32 %v1277, 0.0
      %v1308 = vmax.f32 %v1282, 0.0
      %v1309 = vmax.f32 %v1287, 0.0
      %v1310 = vmax.f32 %v1292, 0.0
      %v1311 = vmax.f32 %v1297, 0.0
      %v1312 = vmax.f32 %v1302, 0.0
      %vm1313 = vcmask 64512
      %1314 = vst.msk [vmem:[#allocation3] sm:$0xff] %vm1313, 0.0
      %vm1315 = vcmask 58368
      %1316 = vst.msk [vmem:[#allocation3 + $0x8] sm:$0x3] %vm1315, 0.0
      %1317 = vst.msk [vmem:[#allocation3 + $0x10] sm:$0xff] %vm1313, 0.0
      %1318 = vst.msk [vmem:[#allocation3 + $0x18] sm:$0x3] %vm1315, 0.0
      %1319 = vst.msk [vmem:[#allocation3 + $0x20] sm:$0xff] %vm1313, 0.0
      %1320 = vst.msk [vmem:[#allocation3 + $0x28] sm:$0x3] %vm1315, 0.0
      %1321 = vst.msk [vmem:[#allocation3 + $0x30] sm:$0xff] %vm1313, 0.0
      %1322 = vst.msk [vmem:[#allocation3 + $0x38] sm:$0x3] %vm1315, 0.0
      %1323 = vst.msk [vmem:[#allocation3 + $0x40] sm:$0xff] %vm1313, 0.0
      %1324 = vst.msk [vmem:[#allocation3 + $0x48] sm:$0x3] %vm1315, 0.0
      %1325 = vst.msk [vmem:[#allocation3 + $0x50] sm:$0xff] %vm1313, 0.0
      %1326 = vst.msk [vmem:[#allocation3 + $0x58] sm:$0x3] %vm1315, 0.0
      %1327 = vst.msk [vmem:[#allocation3 + $0x60] sm:$0xff] %vm1313, 0.0
      %1328 = vst.msk [vmem:[#allocation3 + $0x68] sm:$0x3] %vm1315, 0.0
      %1329 = vst.msk [vmem:[#allocation3 + $0x70] sm:$0xff] %vm1313, 0.0
      %1330 = vst.msk [vmem:[#allocation3 + $0x78] sm:$0x3] %vm1315, 0.0
      %1331 = vst.msk [vmem:[#allocation3 + $0x80] sm:$0xff] %vm1313, 0.0
      %1332 = vst.msk [vmem:[#allocation3 + $0x88] sm:$0x3] %vm1315, 0.0
      %1333 = vst.msk [vmem:[#allocation3 + $0x90] sm:$0xff] %vm1313, 0.0
      %1334 = vst.msk [vmem:[#allocation3 + $0x98] sm:$0x3] %vm1315, 0.0
      %1335 = vst.msk [vmem:[#allocation3 + $0xa0] sm:$0xff] %vm1313, 0.0
      %1336 = vst.msk [vmem:[#allocation3 + $0xa8] sm:$0x3] %vm1315, 0.0
      %1337 = vst.msk [vmem:[#allocation3 + $0xb0] sm:$0xff] %vm1313, 0.0
      %1338 = vst.msk [vmem:[#allocation3 + $0xb8] sm:$0x3] %vm1315, 0.0
      %s1339 = scalar_lea.vmem [#allocation3], 32
      %1340 = vst.msk [vmem:[%s1339 + $0x1] sm:$0xff] %vm1313, %v1305
      %1341 = vst.msk [vmem:[%s1339 + $0x11] sm:$0xff] %vm1313, %v1306
      %1342 = vst.msk [vmem:[%s1339 + $0x21] sm:$0xff] %vm1313, %v1307
      %1343 = vst.msk [vmem:[%s1339 + $0x31] sm:$0xff] %vm1313, %v1308
      %1344 = vst.msk [vmem:[%s1339 + $0x41] sm:$0xff] %vm1313, %v1309
      %1345 = vst.msk [vmem:[%s1339 + $0x51] sm:$0xff] %vm1313, %v1310
      %1346 = vst.msk [vmem:[%s1339 + $0x61] sm:$0xff] %vm1313, %v1311
      %1347 = vst.msk [vmem:[%s1339 + $0x71] sm:$0xff] %vm1313, %v1312
      %v1348 = vld [vmem:[#allocation3] sm:$0xff]
      %v1349 = vld [vmem:[#allocation3 + $0x8] sm:$0x3]
      %v1350 = vld [vmem:[#allocation3 + $0x10] sm:$0xff]
      %v1351 = vld [vmem:[#allocation3 + $0x18] sm:$0x3]
      %v1352 = vld [vmem:[#allocation3 + $0x20] sm:$0xff]
      %v1353 = vld [vmem:[#allocation3 + $0x28] sm:$0x3]
      %v1354 = vld [vmem:[#allocation3 + $0x30] sm:$0xff]
      %v1355 = vld [vmem:[#allocation3 + $0x38] sm:$0x3]
      %v1356 = vld [vmem:[#allocation3 + $0x40] sm:$0xff]
      %v1357 = vld [vmem:[#allocation3 + $0x48] sm:$0x3]
      %v1358 = vld [vmem:[#allocation3 + $0x50] sm:$0xff]
      %v1359 = vld [vmem:[#allocation3 + $0x58] sm:$0x3]
      %v1360 = vld [vmem:[#allocation3 + $0x60] sm:$0xff]
      %v1361 = vld [vmem:[#allocation3 + $0x68] sm:$0x3]
      %v1362 = vld [vmem:[#allocation3 + $0x70] sm:$0xff]
      %v1363 = vld [vmem:[#allocation3 + $0x78] sm:$0x3]
      %v1364 = vld [vmem:[#allocation3 + $0x80] sm:$0xff]
      %v1365 = vld [vmem:[#allocation3 + $0x88] sm:$0x3]
      %v1366 = vld [vmem:[#allocation3 + $0x90] sm:$0xff]
      %v1367 = vld [vmem:[#allocation3 + $0x98] sm:$0x3]
      %v1368 = vld [vmem:[#allocation3 + $0xa0] sm:$0xff]
      %v1369 = vld [vmem:[#allocation3 + $0xa8] sm:$0x3]
      %1370 = vst.msk [vmem:[#allocation7] sm:$0xff] %vm1313, %v1348
      %1371 = vst.msk [vmem:[#allocation7 + $0x8] sm:$0xff] %vm1313, %v1352
      %1372 = vst.msk [vmem:[#allocation7 + $0x10] sm:$0xff] %vm1313, %v1356
      %1373 = vst.msk [vmem:[#allocation7 + $0x18] sm:$0xff] %vm1313, %v1360
      %v1382 = vrot.slane %v1348, 1
      %v1383 = vrot.slane %v1349, 1
      %v1384 = vsel %vm544, %v1382, %v1383
      %v1385 = vrot.slane %v1352, 1
      %v1386 = vrot.slane %v1353, 1
      %v1387 = vsel %vm544, %v1385, %v1386
      %v1388 = vrot.slane %v1356, 1
      %v1389 = vrot.slane %v1357, 1
      %v1390 = vsel %vm544, %v1388, %v1389
      %v1391 = vrot.slane %v1360, 1
      %v1392 = vrot.slane %v1361, 1
      %v1393 = vsel %vm544, %v1391, %v1392
      %1394 = vrot.lane.b32.xlu0 %v1384, 8
      %v1395 = vpop.permute.xlu0 %1394
      %1396 = vrot.lane.b32.xlu0 %v1387, 8
      %v1397 = vpop.permute.xlu0 %1396
      %1398 = vrot.lane.b32.xlu0 %v1390, 8
      %v1399 = vpop.permute.xlu0 %1398
      %1400 = vrot.lane.b32.xlu0 %v1393, 8
      %v1401 = vpop.permute.xlu0 %1400
      %vm1406 = vcmask 130112
      %1407 = vst.msk [vmem:[#allocation7] sm:$0xff] %vm1406, %v1395
      %1408 = vst.msk [vmem:[#allocation7 + $0x8] sm:$0xff] %vm1406, %v1397
      %1409 = vst.msk [vmem:[#allocation7 + $0x10] sm:$0xff] %vm1406, %v1399
      %1410 = vst.msk [vmem:[#allocation7 + $0x18] sm:$0xff] %vm1406, %v1401
      %v1411 = vrot.slane %v1348, 2
      %v1412 = vrot.slane %v1349, 2
      %v1413 = vsel %vm602, %v1411, %v1412
      %v1414 = vrot.slane %v1352, 2
      %v1415 = vrot.slane %v1353, 2
      %v1416 = vsel %vm602, %v1414, %v1415
      %v1417 = vrot.slane %v1356, 2
      %v1418 = vrot.slane %v1357, 2
      %v1419 = vsel %vm602, %v1417, %v1418
      %v1420 = vrot.slane %v1360, 2
      %v1421 = vrot.slane %v1361, 2
      %v1422 = vsel %vm602, %v1420, %v1421
      %1423 = vrot.lane.b32.xlu0 %v1413, 16
      %v1424 = vpop.permute.xlu0 %1423
      %1425 = vrot.lane.b32.xlu0 %v1416, 16
      %v1426 = vpop.permute.xlu0 %1425
      %1427 = vrot.lane.b32.xlu0 %v1419, 16
      %v1428 = vpop.permute.xlu0 %1427
      %1429 = vrot.lane.b32.xlu0 %v1422, 16
      %v1430 = vpop.permute.xlu0 %1429
      %vm1435 = vcmask 195712
      %1436 = vst.msk [vmem:[#allocation7] sm:$0xff] %vm1435, %v1424
      %1437 = vst.msk [vmem:[#allocation7 + $0x8] sm:$0xff] %vm1435, %v1426
      %1438 = vst.msk [vmem:[#allocation7 + $0x10] sm:$0xff] %vm1435, %v1428
      %1439 = vst.msk [vmem:[#allocation7 + $0x18] sm:$0xff] %vm1435, %v1430
      %1444 = vrot.lane.b32.xlu0 %v1350, 24
      %v1445 = vpop.permute.xlu0 %1444
      %1446 = vrot.lane.b32.xlu0 %v1354, 24
      %v1447 = vpop.permute.xlu0 %1446
      %1448 = vrot.lane.b32.xlu0 %v1358, 24
      %v1449 = vpop.permute.xlu0 %1448
      %1450 = vrot.lane.b32.xlu0 %v1362, 24
      %v1451 = vpop.permute.xlu0 %1450
      %vm1456 = vcmask 261312
      %1457 = vst.msk [vmem:[#allocation7] sm:$0xff] %vm1456, %v1445
      %1458 = vst.msk [vmem:[#allocation7 + $0x8] sm:$0xff] %vm1456, %v1447
      %1459 = vst.msk [vmem:[#allocation7 + $0x10] sm:$0xff] %vm1456, %v1449
      %1460 = vst.msk [vmem:[#allocation7 + $0x18] sm:$0xff] %vm1456, %v1451
      %v1465 = vrot.slane %v1350, 1
      %v1466 = vrot.slane %v1351, 1
      %v1467 = vsel %vm544, %v1465, %v1466
      %v1468 = vrot.slane %v1354, 1
      %v1469 = vrot.slane %v1355, 1
      %v1470 = vsel %vm544, %v1468, %v1469
      %v1471 = vrot.slane %v1358, 1
      %v1472 = vrot.slane %v1359, 1
      %v1473 = vsel %vm544, %v1471, %v1472
      %v1474 = vrot.slane %v1362, 1
      %v1475 = vrot.slane %v1363, 1
      %v1476 = vsel %vm544, %v1474, %v1475
      %1477 = vrot.lane.b32.xlu0 %v1467, 32
      %v1478 = vpop.permute.xlu0 %1477
      %1479 = vrot.lane.b32.xlu0 %v1470, 32
      %v1480 = vpop.permute.xlu0 %1479
      %1481 = vrot.lane.b32.xlu0 %v1473, 32
      %v1482 = vpop.permute.xlu0 %1481
      %1483 = vrot.lane.b32.xlu0 %v1476, 32
      %v1484 = vpop.permute.xlu0 %1483
      %vm1489 = vcmask 326912
      %1490 = vst.msk [vmem:[#allocation7] sm:$0xff] %vm1489, %v1478
      %1491 = vst.msk [vmem:[#allocation7 + $0x8] sm:$0xff] %vm1489, %v1480
      %1492 = vst.msk [vmem:[#allocation7 + $0x10] sm:$0xff] %vm1489, %v1482
      %1493 = vst.msk [vmem:[#allocation7 + $0x18] sm:$0xff] %vm1489, %v1484
      %v1494 = vrot.slane %v1350, 2
      %v1495 = vrot.slane %v1351, 2
      %v1496 = vsel %vm602, %v1494, %v1495
      %v1497 = vrot.slane %v1354, 2
      %v1498 = vrot.slane %v1355, 2
      %v1499 = vsel %vm602, %v1497, %v1498
      %v1500 = vrot.slane %v1358, 2
      %v1501 = vrot.slane %v1359, 2
      %v1502 = vsel %vm602, %v1500, %v1501
      %v1503 = vrot.slane %v1362, 2
      %v1504 = vrot.slane %v1363, 2
      %v1505 = vsel %vm602, %v1503, %v1504
      %1506 = vrot.lane.b32.xlu0 %v1496, 40
      %v1507 = vpop.permute.xlu0 %1506
      %1508 = vrot.lane.b32.xlu0 %v1499, 40
      %v1509 = vpop.permute.xlu0 %1508
      %1510 = vrot.lane.b32.xlu0 %v1502, 40
      %v1511 = vpop.permute.xlu0 %1510
      %1512 = vrot.lane.b32.xlu0 %v1505, 40
      %v1513 = vpop.permute.xlu0 %1512
      %vm1518 = vcmask 392512
      %1519 = vst.msk [vmem:[#allocation7] sm:$0xff] %vm1518, %v1507
      %1520 = vst.msk [vmem:[#allocation7 + $0x8] sm:$0xff] %vm1518, %v1509
      %1521 = vst.msk [vmem:[#allocation7 + $0x10] sm:$0xff] %vm1518, %v1511
      %1522 = vst.msk [vmem:[#allocation7 + $0x18] sm:$0xff] %vm1518, %v1513
      %1524 = vrot.lane.b32.xlu0 %v1352, 48
      %v1525 = vpop.permute.xlu0 %1524
      %1526 = vrot.lane.b32.xlu0 %v1356, 48
      %v1527 = vpop.permute.xlu0 %1526
      %1528 = vrot.lane.b32.xlu0 %v1360, 48
      %v1529 = vpop.permute.xlu0 %1528
      %1530 = vrot.lane.b32.xlu0 %v1364, 48
      %v1531 = vpop.permute.xlu0 %1530
      %vm1536 = vcmask 458112
      %1537 = vst.msk [vmem:[#allocation7] sm:$0xff] %vm1536, %v1525
      %1538 = vst.msk [vmem:[#allocation7 + $0x8] sm:$0xff] %vm1536, %v1527
      %1539 = vst.msk [vmem:[#allocation7 + $0x10] sm:$0xff] %vm1536, %v1529
      %1540 = vst.msk [vmem:[#allocation7 + $0x18] sm:$0xff] %vm1536, %v1531
      %v1542 = vrot.slane %v1364, 1
      %v1543 = vrot.slane %v1365, 1
      %v1544 = vsel %vm544, %v1542, %v1543
      %1545 = vrot.lane.b32.xlu0 %v1387, 56
      %v1546 = vpop.permute.xlu0 %1545
      %1547 = vrot.lane.b32.xlu0 %v1390, 56
      %v1548 = vpop.permute.xlu0 %1547
      %1549 = vrot.lane.b32.xlu0 %v1393, 56
      %v1550 = vpop.permute.xlu0 %1549
      %1551 = vrot.lane.b32.xlu0 %v1544, 56
      %v1552 = vpop.permute.xlu0 %1551
      %vm1557 = vcmask 523712
      %1558 = vst.msk [vmem:[#allocation7] sm:$0xff] %vm1557, %v1546
      %1559 = vst.msk [vmem:[#allocation7 + $0x8] sm:$0xff] %vm1557, %v1548
      %1560 = vst.msk [vmem:[#allocation7 + $0x10] sm:$0xff] %vm1557, %v1550
      %1561 = vst.msk [vmem:[#allocation7 + $0x18] sm:$0xff] %vm1557, %v1552
      %v1562 = vrot.slane %v1364, 2
      %v1563 = vrot.slane %v1365, 2
      %v1564 = vsel %vm602, %v1562, %v1563
      %1565 = vrot.lane.b32.xlu0 %v1416, 64
      %v1566 = vpop.permute.xlu0 %1565
      %1567 = vrot.lane.b32.xlu0 %v1419, 64
      %v1568 = vpop.permute.xlu0 %1567
      %1569 = vrot.lane.b32.xlu0 %v1422, 64
      %v1570 = vpop.permute.xlu0 %1569
      %1571 = vrot.lane.b32.xlu0 %v1564, 64
      %v1572 = vpop.permute.xlu0 %1571
      %vm1577 = vcmask 589312
      %1578 = vst.msk [vmem:[#allocation7] sm:$0xff] %vm1577, %v1566
      %1579 = vst.msk [vmem:[#allocation7 + $0x8] sm:$0xff] %vm1577, %v1568
      %1580 = vst.msk [vmem:[#allocation7 + $0x10] sm:$0xff] %vm1577, %v1570
      %1581 = vst.msk [vmem:[#allocation7 + $0x18] sm:$0xff] %vm1577, %v1572
      %1583 = vrot.lane.b32.xlu0 %v1354, 72
      %v1584 = vpop.permute.xlu0 %1583
      %1585 = vrot.lane.b32.xlu0 %v1358, 72
      %v1586 = vpop.permute.xlu0 %1585
      %1587 = vrot.lane.b32.xlu0 %v1362, 72
      %v1588 = vpop.permute.xlu0 %1587
      %1589 = vrot.lane.b32.xlu0 %v1366, 72
      %v1590 = vpop.permute.xlu0 %1589
      %vm1595 = vcmask 654912
      %1596 = vst.msk [vmem:[#allocation7] sm:$0xff] %vm1595, %v1584
      %1597 = vst.msk [vmem:[#allocation7 + $0x8] sm:$0xff] %vm1595, %v1586
      %1598 = vst.msk [vmem:[#allocation7 + $0x10] sm:$0xff] %vm1595, %v1588
      %1599 = vst.msk [vmem:[#allocation7 + $0x18] sm:$0xff] %vm1595, %v1590
      %v1601 = vrot.slane %v1366, 1
      %v1602 = vrot.slane %v1367, 1
      %v1603 = vsel %vm544, %v1601, %v1602
      %1604 = vrot.lane.b32.xlu0 %v1470, 80
      %v1605 = vpop.permute.xlu0 %1604
      %1606 = vrot.lane.b32.xlu0 %v1473, 80
      %v1607 = vpop.permute.xlu0 %1606
      %1608 = vrot.lane.b32.xlu0 %v1476, 80
      %v1609 = vpop.permute.xlu0 %1608
      %1610 = vrot.lane.b32.xlu0 %v1603, 80
      %v1611 = vpop.permute.xlu0 %1610
      %vm1616 = vcmask 720512
      %1617 = vst.msk [vmem:[#allocation7] sm:$0xff] %vm1616, %v1605
      %1618 = vst.msk [vmem:[#allocation7 + $0x8] sm:$0xff] %vm1616, %v1607
      %1619 = vst.msk [vmem:[#allocation7 + $0x10] sm:$0xff] %vm1616, %v1609
      %1620 = vst.msk [vmem:[#allocation7 + $0x18] sm:$0xff] %vm1616, %v1611
      %v1621 = vrot.slane %v1366, 2
      %v1622 = vrot.slane %v1367, 2
      %v1623 = vsel %vm602, %v1621, %v1622
      %1624 = vrot.lane.b32.xlu0 %v1499, 88
      %v1625 = vpop.permute.xlu0 %1624
      %1626 = vrot.lane.b32.xlu0 %v1502, 88
      %v1627 = vpop.permute.xlu0 %1626
      %1628 = vrot.lane.b32.xlu0 %v1505, 88
      %v1629 = vpop.permute.xlu0 %1628
      %1630 = vrot.lane.b32.xlu0 %v1623, 88
      %v1631 = vpop.permute.xlu0 %1630
      %vm1636 = vcmask 786112
      %1637 = vst.msk [vmem:[#allocation7] sm:$0xff] %vm1636, %v1625
      %1638 = vst.msk [vmem:[#allocation7 + $0x8] sm:$0xff] %vm1636, %v1627
      %1639 = vst.msk [vmem:[#allocation7 + $0x10] sm:$0xff] %vm1636, %v1629
      %1640 = vst.msk [vmem:[#allocation7 + $0x18] sm:$0xff] %vm1636, %v1631
      %1642 = vrot.lane.b32.xlu0 %v1356, 96
      %v1643 = vpop.permute.xlu0 %1642
      %1644 = vrot.lane.b32.xlu0 %v1360, 96
      %v1645 = vpop.permute.xlu0 %1644
      %1646 = vrot.lane.b32.xlu0 %v1364, 96
      %v1647 = vpop.permute.xlu0 %1646
      %1648 = vrot.lane.b32.xlu0 %v1368, 96
      %v1649 = vpop.permute.xlu0 %1648
      %vm1654 = vcmask 851712
      %1655 = vst.msk [vmem:[#allocation7] sm:$0xff] %vm1654, %v1643
      %1656 = vst.msk [vmem:[#allocation7 + $0x8] sm:$0xff] %vm1654, %v1645
      %1657 = vst.msk [vmem:[#allocation7 + $0x10] sm:$0xff] %vm1654, %v1647
      %1658 = vst.msk [vmem:[#allocation7 + $0x18] sm:$0xff] %vm1654, %v1649
      %v1660 = vrot.slane %v1368, 1
      %v1661 = vrot.slane %v1369, 1
      %v1662 = vsel %vm544, %v1660, %v1661
      %1663 = vrot.lane.b32.xlu0 %v1390, 104
      %v1664 = vpop.permute.xlu0 %1663
      %1665 = vrot.lane.b32.xlu0 %v1393, 104
      %v1666 = vpop.permute.xlu0 %1665
      %1667 = vrot.lane.b32.xlu0 %v1544, 104
      %v1668 = vpop.permute.xlu0 %1667
      %1669 = vrot.lane.b32.xlu0 %v1662, 104
      %v1670 = vpop.permute.xlu0 %1669
      %vm1675 = vcmask 917312
      %1676 = vst.msk [vmem:[#allocation7] sm:$0xff] %vm1675, %v1664
      %1677 = vst.msk [vmem:[#allocation7 + $0x8] sm:$0xff] %vm1675, %v1666
      %1678 = vst.msk [vmem:[#allocation7 + $0x10] sm:$0xff] %vm1675, %v1668
      %1679 = vst.msk [vmem:[#allocation7 + $0x18] sm:$0xff] %vm1675, %v1670
      %v1680 = vrot.slane %v1368, 2
      %v1681 = vrot.slane %v1369, 2
      %v1682 = vsel %vm602, %v1680, %v1681
      %1683 = vrot.lane.b32.xlu0 %v1419, 112
      %v1684 = vpop.permute.xlu0 %1683
      %1685 = vrot.lane.b32.xlu0 %v1422, 112
      %v1686 = vpop.permute.xlu0 %1685
      %1687 = vrot.lane.b32.xlu0 %v1564, 112
      %v1688 = vpop.permute.xlu0 %1687
      %1689 = vrot.lane.b32.xlu0 %v1682, 112
      %v1690 = vpop.permute.xlu0 %1689
      %vm1695 = vcmask 982912
      %1696 = vst.msk [vmem:[#allocation7] sm:$0xff] %vm1695, %v1684
      %1697 = vst.msk [vmem:[#allocation7 + $0x8] sm:$0xff] %vm1695, %v1686
      %1698 = vst.msk [vmem:[#allocation7 + $0x10] sm:$0xff] %vm1695, %v1688
      %1699 = vst.msk [vmem:[#allocation7 + $0x18] sm:$0xff] %vm1695, %v1690
      %v1700 = vld [vmem:[#allocation7] sm:$0xff]
      %v1701 = vld [vmem:[#allocation7 + $0x8] sm:$0xff]
      %v1702 = vld [vmem:[#allocation7 + $0x10] sm:$0xff]
      %v1703 = vld [vmem:[#allocation7 + $0x18] sm:$0xff]
      %v1704 = vld [vmem:[%s3] sm:$0xff]
      %v1705 = vld [vmem:[%s3 + $0x8] sm:$0xff]
      %v1706 = vld [vmem:[%s3 + $0x10] sm:$0xff]
      %v1707 = vld [vmem:[%s3 + $0x18] sm:$0xff]
      %v1708 = vld [vmem:[%s3 + $0x20] sm:$0xff]
      %v1709 = vld [vmem:[%s3 + $0x28] sm:$0xff]
      %v1710 = vld [vmem:[%s3 + $0x30] sm:$0xff]
      %v1711 = vld [vmem:[%s3 + $0x38] sm:$0xff]
      %v1712 = vld [vmem:[%s3 + $0x40] sm:$0xff]
      %v1713 = vld [vmem:[%s3 + $0x48] sm:$0xff]
      %v1714 = vld [vmem:[%s3 + $0x50] sm:$0xff]
      %v1715 = vld [vmem:[%s3 + $0x58] sm:$0xff]
      %v1716 = vld [vmem:[%s3 + $0x60] sm:$0xff]
      %v1717 = vld [vmem:[%s3 + $0x68] sm:$0xff]
      %v1718 = vld [vmem:[%s3 + $0x70] sm:$0xff]
      %v1719 = vld [vmem:[%s4] sm:$0x1]
      %v1721 = vlaneseq
      %v1722 = vshrl.u32 %v1721, 7
      %v1723 = vsub.s32 0, %v1722
      %v1724 = vrot.slane %v1719, %v1723
      %vm1726 = vcmask 982016
      %v1728 = vsel %vm1726, %v1700, 0
      %v1731 = vsel %vm1726, %v1701, 0
      %v1734 = vsel %vm1726, %v1702, 0
      %v1737 = vsel %vm1726, %v1703, 0
      %1739 = vmatprep.subr.mxu0 0.0
      %1740 = vmatpush1.msra.mxu0 %v1704
      %1741 = vmatprep.subr.mxu0 0.0
      %1742 = vmatpush1.msra.mxu0 %v1705
      %1743 = vmatprep.subr.mxu0 0.0
      %1744 = vmatpush1.msra.mxu0 %v1706
      %1745 = vmatprep.subr.mxu0 0.0
      %1746 = vmatpush1.msra.mxu0 %v1707
      %1747 = vmatprep.subr.mxu0 0.0
      %1748 = vmatpush1.msra.mxu0 %v1708
      %1749 = vmatprep.subr.mxu0 0.0
      %1750 = vmatpush1.msra.mxu0 %v1709
      %1751 = vmatprep.subr.mxu0 0.0
      %1752 = vmatpush1.msra.mxu0 %v1710
      %1753 = vmatprep.subr.mxu0 0.0
      %1754 = vmatpush1.msra.mxu0 %v1711
      %1755 = vmatprep.subr.mxu0 0.0
      %1756 = vmatpush1.msra.mxu0 %v1712
      %1757 = vmatprep.subr.mxu0 0.0
      %1758 = vmatpush1.msra.mxu0 %v1713
      %1759 = vmatprep.subr.mxu0 0.0
      %1760 = vmatpush1.msra.mxu0 %v1714
      %1761 = vmatprep.subr.mxu0 0.0
      %1762 = vmatpush1.msra.mxu0 %v1715
      %1763 = vmatprep.subr.mxu0 0.0
      %1764 = vmatpush1.msra.mxu0 %v1716
      %1765 = vmatprep.subr.mxu0 0.0
      %1766 = vmatpush1.msra.mxu0 %v1717
      %1767 = vmatprep.subr.mxu0 0.0
      %1768 = vmatpush1.msra.mxu0 %v1718
      %1769 = vmatprep.subr.mxu0 0.0
      %1770 = vmatpush1.msra.mxu0 0.0
      %1771 = vmatprep.subr.mxu0 0.0
      %1772 = vmatpush1.msra.mxu0 0.0
      %1773 = vmatprep.subr.mxu0 0.0
      %1774 = vmatpush1.msra.mxu0 0.0
      %1775 = vmatprep.subr.mxu0 0.0
      %1776 = vmatpush1.msra.mxu0 0.0
      %1777 = vmatprep.subr.mxu0 0.0
      %1778 = vmatpush1.msra.mxu0 0.0
      %1779 = vmatprep.subr.mxu0 0.0
      %1780 = vmatpush1.msra.mxu0 0.0
      %1781 = vmatprep.subr.mxu0 0.0
      %1782 = vmatpush1.msra.mxu0 0.0
      %1783 = vmatprep.subr.mxu0 0.0
      %1784 = vmatpush1.msra.mxu0 0.0
      %1785 = vmatprep.subr.mxu0 0.0
      %1786 = vmatpush1.msra.mxu0 0.0
      %1787 = vmatprep.subr.mxu0 0.0
      %1788 = vmatpush1.msra.mxu0 0.0
      %1789 = vmatprep.subr.mxu0 0.0
      %1790 = vmatpush1.msra.mxu0 0.0
      %1791 = vmatprep.subr.mxu0 0.0
      %1792 = vmatpush1.msra.mxu0 0.0
      %1793 = vmatprep.subr.mxu0 0.0
      %1794 = vmatpush1.msra.mxu0 0.0
      %1795 = vmatprep.subr.mxu0 0.0
      %1796 = vmatpush1.msra.mxu0 0.0
      %1797 = vmatprep.subr.mxu0 0.0
      %1798 = vmatpush1.msra.mxu0 0.0
      %1799 = vmatprep.subr.mxu0 0.0
      %1800 = vmatpush1.msra.mxu0 0.0
      %1801 = vmatprep.subr.mxu0 0.0
      %1802 = vmatpush1.msra.mxu0 0.0
      %1803 = vmatprep.mubr.f32.mxu0 0.0
      %1804 = vmatmul.mubr.f32.gmra.mrb[0].mxu0 %v1728
      %v1805 = vpop.f32.mrb[0].mxu0
      %v1806 = vadd.f32 %v1724, %v1805
      %v1807 = vpop.f32.mrb[0].mxu0
      %1808 = vmatprep.mubr.f32.mxu0 0.0
      %1809 = vmatmul.mubr.f32.gmra.mrb[0].mxu0 %v1731
      %v1810 = vpop.f32.mrb[0].mxu0
      %v1811 = vadd.f32 %v1724, %v1810
      %v1812 = vpop.f32.mrb[0].mxu0
      %1813 = vmatprep.mubr.f32.mxu0 0.0
      %1814 = vmatmul.mubr.f32.gmra.mrb[0].mxu0 %v1734
      %v1815 = vpop.f32.mrb[0].mxu0
      %v1816 = vadd.f32 %v1724, %v1815
      %v1817 = vpop.f32.mrb[0].mxu0
      %1818 = vmatprep.mubr.f32.mxu0 0.0
      %1819 = vmatmul.mubr.f32.gmra.mrb[0].mxu0 %v1737
      %v1820 = vpop.f32.mrb[0].mxu0
      %v1821 = vadd.f32 %v1724, %v1820
      %v1822 = vpop.f32.mrb[0].mxu0
      %1823 = vdwg.mxu0
      %v1824 = vmax.f32 %v1806, 0.0
      %v1825 = vmax.f32 %v1811, 0.0
      %v1826 = vmax.f32 %v1816, 0.0
      %v1827 = vmax.f32 %v1821, 0.0
      %vm1828 = vcmask 130048
      %1829 = vst.msk [vmem:[#allocation4] sm:$0xff] %vm1828, 0.0
      %vm1830 = vcmask 123904
      %1831 = vst.msk [vmem:[#allocation4 + $0x8] sm:$0x3] %vm1830, 0.0
      %1832 = vst.msk [vmem:[#allocation4 + $0x10] sm:$0xff] %vm1828, 0.0
      %1833 = vst.msk [vmem:[#allocation4 + $0x18] sm:$0x3] %vm1830, 0.0
      %1834 = vst.msk [vmem:[#allocation4 + $0x20] sm:$0xff] %vm1828, 0.0
      %1835 = vst.msk [vmem:[#allocation4 + $0x28] sm:$0x3] %vm1830, 0.0
      %1836 = vst.msk [vmem:[#allocation4 + $0x30] sm:$0xff] %vm1828, 0.0
      %1837 = vst.msk [vmem:[#allocation4 + $0x38] sm:$0x3] %vm1830, 0.0
      %1838 = vst.msk [vmem:[#allocation4 + $0x40] sm:$0xff] %vm1828, 0.0
      %1839 = vst.msk [vmem:[#allocation4 + $0x48] sm:$0x3] %vm1830, 0.0
      %1840 = vst.msk [vmem:[#allocation4 + $0x50] sm:$0xff] %vm1828, 0.0
      %1841 = vst.msk [vmem:[#allocation4 + $0x58] sm:$0x3] %vm1830, 0.0
      %1842 = vst.msk [vmem:[#allocation4 + $0x60] sm:$0xff] %vm1828, 0.0
      %1843 = vst.msk [vmem:[#allocation4 + $0x68] sm:$0x3] %vm1830, 0.0
      %1844 = vst.msk [vmem:[#allocation4 + $0x70] sm:$0xff] %vm1828, 0.0
      %1845 = vst.msk [vmem:[#allocation4 + $0x78] sm:$0x3] %vm1830, 0.0
      %1846 = vst.msk [vmem:[#allocation4 + $0x80] sm:$0xff] %vm1828, 0.0
      %1847 = vst.msk [vmem:[#allocation4 + $0x88] sm:$0x3] %vm1830, 0.0
      %1848 = vst.msk [vmem:[#allocation4 + $0x90] sm:$0xff] %vm1828, 0.0
      %1849 = vst.msk [vmem:[#allocation4 + $0x98] sm:$0x3] %vm1830, 0.0
      %1850 = vst.msk [vmem:[#allocation4 + $0xa0] sm:$0xff] %vm1828, 0.0
      %1851 = vst.msk [vmem:[#allocation4 + $0xa8] sm:$0x3] %vm1830, 0.0
      %s1852 = scalar_lea.vmem [#allocation4], 32
      %1853 = vst.msk [vmem:[%s1852 + $0x1] sm:$0xff] %vm1828, %v1824
      %s1854 = scalar_lea.vmem [#allocation4], 64
      %1855 = vst.msk [vmem:[%s1854 + $0x1] sm:$0xff] %vm1828, %v1825
      %s1856 = scalar_lea.vmem [#allocation4], 96
      %1857 = vst.msk [vmem:[%s1856 + $0x1] sm:$0xff] %vm1828, %v1826
      %s1858 = scalar_lea.vmem [#allocation4], 128
      %1859 = vst.msk [vmem:[%s1858 + $0x1] sm:$0xff] %vm1828, %v1827
      %v1860 = vld [vmem:[#allocation4] sm:$0xff]
      %v1861 = vld [vmem:[#allocation4 + $0x8] sm:$0x3]
      %v1862 = vld [vmem:[#allocation4 + $0x10] sm:$0xff]
      %v1863 = vld [vmem:[#allocation4 + $0x18] sm:$0x3]
      %v1864 = vld [vmem:[#allocation4 + $0x20] sm:$0xff]
      %v1865 = vld [vmem:[#allocation4 + $0x28] sm:$0x3]
      %v1866 = vld [vmem:[#allocation4 + $0x30] sm:$0xff]
      %v1867 = vld [vmem:[#allocation4 + $0x38] sm:$0x3]
      %v1868 = vld [vmem:[#allocation4 + $0x40] sm:$0xff]
      %v1869 = vld [vmem:[#allocation4 + $0x48] sm:$0x3]
      %v1870 = vld [vmem:[#allocation4 + $0x50] sm:$0xff]
      %v1871 = vld [vmem:[#allocation4 + $0x58] sm:$0x3]
      %v1872 = vld [vmem:[#allocation4 + $0x60] sm:$0xff]
      %v1873 = vld [vmem:[#allocation4 + $0x68] sm:$0x3]
      %v1874 = vld [vmem:[#allocation4 + $0x70] sm:$0xff]
      %v1875 = vld [vmem:[#allocation4 + $0x78] sm:$0x3]
      %v1876 = vld [vmem:[#allocation4 + $0x80] sm:$0xff]
      %v1877 = vld [vmem:[#allocation4 + $0x88] sm:$0x3]
      %v1878 = vld [vmem:[#allocation4 + $0x90] sm:$0xff]
      %v1879 = vld [vmem:[#allocation4 + $0x98] sm:$0x3]
      %v1880 = vld [vmem:[#allocation4 + $0xa0] sm:$0xff]
      %v1881 = vld [vmem:[#allocation4 + $0xa8] sm:$0x3]
      %1882 = vst.msk [vmem:[#allocation8] sm:$0xff] %vm1828, %v1860
      %1883 = vst.msk [vmem:[#allocation8 + $0x10] sm:$0xff] %vm1828, %v1862
      %1884 = vst.msk [vmem:[#allocation8 + $0x20] sm:$0xff] %vm1828, %v1864
      %1885 = vst.msk [vmem:[#allocation8 + $0x30] sm:$0xff] %vm1828, %v1866
      %1886 = vst.msk [vmem:[#allocation8 + $0x40] sm:$0xff] %vm1828, %v1868
      %1887 = vst.msk [vmem:[#allocation8 + $0x50] sm:$0xff] %vm1828, %v1870
      %1888 = vst.msk [vmem:[#allocation8 + $0x60] sm:$0xff] %vm1828, %v1872
      %1889 = vst.msk [vmem:[#allocation8 + $0x70] sm:$0xff] %vm1828, %v1874
      %v1906 = vrot.slane %v1860, 1
      %v1907 = vrot.slane %v1861, 1
      %v1908 = vsel %vm544, %v1906, %v1907
      %v1909 = vrot.slane %v1862, 1
      %v1910 = vrot.slane %v1863, 1
      %v1911 = vsel %vm544, %v1909, %v1910
      %v1912 = vrot.slane %v1864, 1
      %v1913 = vrot.slane %v1865, 1
      %v1914 = vsel %vm544, %v1912, %v1913
      %v1915 = vrot.slane %v1866, 1
      %v1916 = vrot.slane %v1867, 1
      %v1917 = vsel %vm544, %v1915, %v1916
      %v1918 = vrot.slane %v1868, 1
      %v1919 = vrot.slane %v1869, 1
      %v1920 = vsel %vm544, %v1918, %v1919
      %v1921 = vrot.slane %v1870, 1
      %v1922 = vrot.slane %v1871, 1
      %v1923 = vsel %vm544, %v1921, %v1922
      %v1924 = vrot.slane %v1872, 1
      %v1925 = vrot.slane %v1873, 1
      %v1926 = vsel %vm544, %v1924, %v1925
      %v1927 = vrot.slane %v1874, 1
      %v1928 = vrot.slane %v1875, 1
      %v1929 = vsel %vm544, %v1927, %v1928
      %1930 = vrot.lane.b32.xlu0 %v1908, 16
      %v1931 = vpop.permute.xlu0 %1930
      %1932 = vrot.lane.b32.xlu0 %v1911, 16
      %v1933 = vpop.permute.xlu0 %1932
      %1934 = vrot.lane.b32.xlu0 %v1914, 16
      %v1935 = vpop.permute.xlu0 %1934
      %1936 = vrot.lane.b32.xlu0 %v1917, 16
      %v1937 = vpop.permute.xlu0 %1936
      %1938 = vrot.lane.b32.xlu0 %v1920, 16
      %v1939 = vpop.permute.xlu0 %1938
      %1940 = vrot.lane.b32.xlu0 %v1923, 16
      %v1941 = vpop.permute.xlu0 %1940
      %1942 = vrot.lane.b32.xlu0 %v1926, 16
      %v1943 = vpop.permute.xlu0 %1942
      %1944 = vrot.lane.b32.xlu0 %v1929, 16
      %v1945 = vpop.permute.xlu0 %1944
      %vm1954 = vcmask 261248
      %1955 = vst.msk [vmem:[#allocation8] sm:$0xff] %vm1954, %v1931
      %1956 = vst.msk [vmem:[#allocation8 + $0x10] sm:$0xff] %vm1954, %v1933
      %1957 = vst.msk [vmem:[#allocation8 + $0x20] sm:$0xff] %vm1954, %v1935
      %1958 = vst.msk [vmem:[#allocation8 + $0x30] sm:$0xff] %vm1954, %v1937
      %1959 = vst.msk [vmem:[#allocation8 + $0x40] sm:$0xff] %vm1954, %v1939
      %1960 = vst.msk [vmem:[#allocation8 + $0x50] sm:$0xff] %vm1954, %v1941
      %1961 = vst.msk [vmem:[#allocation8 + $0x60] sm:$0xff] %vm1954, %v1943
      %1962 = vst.msk [vmem:[#allocation8 + $0x70] sm:$0xff] %vm1954, %v1945
      %v1963 = vrot.slane %v1860, 2
      %v1964 = vrot.slane %v1861, 2
      %v1965 = vsel %vm602, %v1963, %v1964
      %v1966 = vrot.slane %v1862, 2
      %v1967 = vrot.slane %v1863, 2
      %v1968 = vsel %vm602, %v1966, %v1967
      %v1969 = vrot.slane %v1864, 2
      %v1970 = vrot.slane %v1865, 2
      %v1971 = vsel %vm602, %v1969, %v1970
      %v1972 = vrot.slane %v1866, 2
      %v1973 = vrot.slane %v1867, 2
      %v1974 = vsel %vm602, %v1972, %v1973
      %v1975 = vrot.slane %v1868, 2
      %v1976 = vrot.slane %v1869, 2
      %v1977 = vsel %vm602, %v1975, %v1976
      %v1978 = vrot.slane %v1870, 2
      %v1979 = vrot.slane %v1871, 2
      %v1980 = vsel %vm602, %v1978, %v1979
      %v1981 = vrot.slane %v1872, 2
      %v1982 = vrot.slane %v1873, 2
      %v1983 = vsel %vm602, %v1981, %v1982
      %v1984 = vrot.slane %v1874, 2
      %v1985 = vrot.slane %v1875, 2
      %v1986 = vsel %vm602, %v1984, %v1985
      %1987 = vrot.lane.b32.xlu0 %v1965, 32
      %v1988 = vpop.permute.xlu0 %1987
      %1989 = vrot.lane.b32.xlu0 %v1968, 32
      %v1990 = vpop.permute.xlu0 %1989
      %1991 = vrot.lane.b32.xlu0 %v1971, 32
      %v1992 = vpop.permute.xlu0 %1991
      %1993 = vrot.lane.b32.xlu0 %v1974, 32
      %v1994 = vpop.permute.xlu0 %1993
      %1995 = vrot.lane.b32.xlu0 %v1977, 32
      %v1996 = vpop.permute.xlu0 %1995
      %1997 = vrot.lane.b32.xlu0 %v1980, 32
      %v1998 = vpop.permute.xlu0 %1997
      %1999 = vrot.lane.b32.xlu0 %v1983, 32
      %v2000 = vpop.permute.xlu0 %1999
      %2001 = vrot.lane.b32.xlu0 %v1986, 32
      %v2002 = vpop.permute.xlu0 %2001
      %vm2011 = vcmask 392448
      %2012 = vst.msk [vmem:[#allocation8] sm:$0xff] %vm2011, %v1988
      %2013 = vst.msk [vmem:[#allocation8 + $0x10] sm:$0xff] %vm2011, %v1990
      %2014 = vst.msk [vmem:[#allocation8 + $0x20] sm:$0xff] %vm2011, %v1992
      %2015 = vst.msk [vmem:[#allocation8 + $0x30] sm:$0xff] %vm2011, %v1994
      %2016 = vst.msk [vmem:[#allocation8 + $0x40] sm:$0xff] %vm2011, %v1996
      %2017 = vst.msk [vmem:[#allocation8 + $0x50] sm:$0xff] %vm2011, %v1998
      %2018 = vst.msk [vmem:[#allocation8 + $0x60] sm:$0xff] %vm2011, %v2000
      %2019 = vst.msk [vmem:[#allocation8 + $0x70] sm:$0xff] %vm2011, %v2002
      %2021 = vrot.lane.b32.xlu0 %v1862, 48
      %v2022 = vpop.permute.xlu0 %2021
      %2023 = vrot.lane.b32.xlu0 %v1864, 48
      %v2024 = vpop.permute.xlu0 %2023
      %2025 = vrot.lane.b32.xlu0 %v1866, 48
      %v2026 = vpop.permute.xlu0 %2025
      %2027 = vrot.lane.b32.xlu0 %v1868, 48
      %v2028 = vpop.permute.xlu0 %2027
      %2029 = vrot.lane.b32.xlu0 %v1870, 48
      %v2030 = vpop.permute.xlu0 %2029
      %2031 = vrot.lane.b32.xlu0 %v1872, 48
      %v2032 = vpop.permute.xlu0 %2031
      %2033 = vrot.lane.b32.xlu0 %v1874, 48
      %v2034 = vpop.permute.xlu0 %2033
      %2035 = vrot.lane.b32.xlu0 %v1876, 48
      %v2036 = vpop.permute.xlu0 %2035
      %vm2045 = vcmask 523648
      %2046 = vst.msk [vmem:[#allocation8] sm:$0xff] %vm2045, %v2022
      %2047 = vst.msk [vmem:[#allocation8 + $0x10] sm:$0xff] %vm2045, %v2024
      %2048 = vst.msk [vmem:[#allocation8 + $0x20] sm:$0xff] %vm2045, %v2026
      %2049 = vst.msk [vmem:[#allocation8 + $0x30] sm:$0xff] %vm2045, %v2028
      %2050 = vst.msk [vmem:[#allocation8 + $0x40] sm:$0xff] %vm2045, %v2030
      %2051 = vst.msk [vmem:[#allocation8 + $0x50] sm:$0xff] %vm2045, %v2032
      %2052 = vst.msk [vmem:[#allocation8 + $0x60] sm:$0xff] %vm2045, %v2034
      %2053 = vst.msk [vmem:[#allocation8 + $0x70] sm:$0xff] %vm2045, %v2036
      %v2055 = vrot.slane %v1876, 1
      %v2056 = vrot.slane %v1877, 1
      %v2057 = vsel %vm544, %v2055, %v2056
      %2058 = vrot.lane.b32.xlu0 %v1911, 64
      %v2059 = vpop.permute.xlu0 %2058
      %2060 = vrot.lane.b32.xlu0 %v1914, 64
      %v2061 = vpop.permute.xlu0 %2060
      %2062 = vrot.lane.b32.xlu0 %v1917, 64
      %v2063 = vpop.permute.xlu0 %2062
      %2064 = vrot.lane.b32.xlu0 %v1920, 64
      %v2065 = vpop.permute.xlu0 %2064
      %2066 = vrot.lane.b32.xlu0 %v1923, 64
      %v2067 = vpop.permute.xlu0 %2066
      %2068 = vrot.lane.b32.xlu0 %v1926, 64
      %v2069 = vpop.permute.xlu0 %2068
      %2070 = vrot.lane.b32.xlu0 %v1929, 64
      %v2071 = vpop.permute.xlu0 %2070
      %2072 = vrot.lane.b32.xlu0 %v2057, 64
      %v2073 = vpop.permute.xlu0 %2072
      %vm2082 = vcmask 654848
      %2083 = vst.msk [vmem:[#allocation8] sm:$0xff] %vm2082, %v2059
      %2084 = vst.msk [vmem:[#allocation8 + $0x10] sm:$0xff] %vm2082, %v2061
      %2085 = vst.msk [vmem:[#allocation8 + $0x20] sm:$0xff] %vm2082, %v2063
      %2086 = vst.msk [vmem:[#allocation8 + $0x30] sm:$0xff] %vm2082, %v2065
      %2087 = vst.msk [vmem:[#allocation8 + $0x40] sm:$0xff] %vm2082, %v2067
      %2088 = vst.msk [vmem:[#allocation8 + $0x50] sm:$0xff] %vm2082, %v2069
      %2089 = vst.msk [vmem:[#allocation8 + $0x60] sm:$0xff] %vm2082, %v2071
      %2090 = vst.msk [vmem:[#allocation8 + $0x70] sm:$0xff] %vm2082, %v2073
      %v2091 = vrot.slane %v1876, 2
      %v2092 = vrot.slane %v1877, 2
      %v2093 = vsel %vm602, %v2091, %v2092
      %2094 = vrot.lane.b32.xlu0 %v1968, 80
      %v2095 = vpop.permute.xlu0 %2094
      %2096 = vrot.lane.b32.xlu0 %v1971, 80
      %v2097 = vpop.permute.xlu0 %2096
      %2098 = vrot.lane.b32.xlu0 %v1974, 80
      %v2099 = vpop.permute.xlu0 %2098
      %2100 = vrot.lane.b32.xlu0 %v1977, 80
      %v2101 = vpop.permute.xlu0 %2100
      %2102 = vrot.lane.b32.xlu0 %v1980, 80
      %v2103 = vpop.permute.xlu0 %2102
      %2104 = vrot.lane.b32.xlu0 %v1983, 80
      %v2105 = vpop.permute.xlu0 %2104
      %2106 = vrot.lane.b32.xlu0 %v1986, 80
      %v2107 = vpop.permute.xlu0 %2106
      %2108 = vrot.lane.b32.xlu0 %v2093, 80
      %v2109 = vpop.permute.xlu0 %2108
      %vm2118 = vcmask 786048
      %2119 = vst.msk [vmem:[#allocation8] sm:$0xff] %vm2118, %v2095
      %2120 = vst.msk [vmem:[#allocation8 + $0x10] sm:$0xff] %vm2118, %v2097
      %2121 = vst.msk [vmem:[#allocation8 + $0x20] sm:$0xff] %vm2118, %v2099
      %2122 = vst.msk [vmem:[#allocation8 + $0x30] sm:$0xff] %vm2118, %v2101
      %2123 = vst.msk [vmem:[#allocation8 + $0x40] sm:$0xff] %vm2118, %v2103
      %2124 = vst.msk [vmem:[#allocation8 + $0x50] sm:$0xff] %vm2118, %v2105
      %2125 = vst.msk [vmem:[#allocation8 + $0x60] sm:$0xff] %vm2118, %v2107
      %2126 = vst.msk [vmem:[#allocation8 + $0x70] sm:$0xff] %vm2118, %v2109
      %2128 = vrot.lane.b32.xlu0 %v1864, 96
      %v2129 = vpop.permute.xlu0 %2128
      %2130 = vrot.lane.b32.xlu0 %v1866, 96
      %v2131 = vpop.permute.xlu0 %2130
      %2132 = vrot.lane.b32.xlu0 %v1868, 96
      %v2133 = vpop.permute.xlu0 %2132
      %2134 = vrot.lane.b32.xlu0 %v1870, 96
      %v2135 = vpop.permute.xlu0 %2134
      %2136 = vrot.lane.b32.xlu0 %v1872, 96
      %v2137 = vpop.permute.xlu0 %2136
      %2138 = vrot.lane.b32.xlu0 %v1874, 96
      %v2139 = vpop.permute.xlu0 %2138
      %2140 = vrot.lane.b32.xlu0 %v1876, 96
      %v2141 = vpop.permute.xlu0 %2140
      %2142 = vrot.lane.b32.xlu0 %v1878, 96
      %v2143 = vpop.permute.xlu0 %2142
      %vm2152 = vcmask 917248
      %2153 = vst.msk [vmem:[#allocation8] sm:$0xff] %vm2152, %v2129
      %2154 = vst.msk [vmem:[#allocation8 + $0x10] sm:$0xff] %vm2152, %v2131
      %2155 = vst.msk [vmem:[#allocation8 + $0x20] sm:$0xff] %vm2152, %v2133
      %2156 = vst.msk [vmem:[#allocation8 + $0x30] sm:$0xff] %vm2152, %v2135
      %2157 = vst.msk [vmem:[#allocation8 + $0x40] sm:$0xff] %vm2152, %v2137
      %2158 = vst.msk [vmem:[#allocation8 + $0x50] sm:$0xff] %vm2152, %v2139
      %2159 = vst.msk [vmem:[#allocation8 + $0x60] sm:$0xff] %vm2152, %v2141
      %2160 = vst.msk [vmem:[#allocation8 + $0x70] sm:$0xff] %vm2152, %v2143
      %v2162 = vrot.slane %v1878, 1
      %v2163 = vrot.slane %v1879, 1
      %v2164 = vsel %vm544, %v2162, %v2163
      %2165 = vrot.lane.b32.xlu0 %v1914, 112
      %v2166 = vpop.permute.xlu0 %2165
      %2167 = vrot.lane.b32.xlu0 %v1917, 112
      %v2168 = vpop.permute.xlu0 %2167
      %2169 = vrot.lane.b32.xlu0 %v1920, 112
      %v2170 = vpop.permute.xlu0 %2169
      %2171 = vrot.lane.b32.xlu0 %v1923, 112
      %v2172 = vpop.permute.xlu0 %2171
      %2173 = vrot.lane.b32.xlu0 %v1926, 112
      %v2174 = vpop.permute.xlu0 %2173
      %2175 = vrot.lane.b32.xlu0 %v1929, 112
      %v2176 = vpop.permute.xlu0 %2175
      %2177 = vrot.lane.b32.xlu0 %v2057, 112
      %v2178 = vpop.permute.xlu0 %2177
      %2179 = vrot.lane.b32.xlu0 %v2164, 112
      %v2180 = vpop.permute.xlu0 %2179
      %vm2189 = vcmask 1048448
      %2190 = vst.msk [vmem:[#allocation8] sm:$0xff] %vm2189, %v2166
      %2191 = vst.msk [vmem:[#allocation8 + $0x10] sm:$0xff] %vm2189, %v2168
      %2192 = vst.msk [vmem:[#allocation8 + $0x20] sm:$0xff] %vm2189, %v2170
      %2193 = vst.msk [vmem:[#allocation8 + $0x30] sm:$0xff] %vm2189, %v2172
      %2194 = vst.msk [vmem:[#allocation8 + $0x40] sm:$0xff] %vm2189, %v2174
      %2195 = vst.msk [vmem:[#allocation8 + $0x50] sm:$0xff] %vm2189, %v2176
      %2196 = vst.msk [vmem:[#allocation8 + $0x60] sm:$0xff] %vm2189, %v2178
      %2197 = vst.msk [vmem:[#allocation8 + $0x70] sm:$0xff] %vm2189, %v2180
      %v2198 = vrot.slane %v1878, 2
      %v2199 = vrot.slane %v1879, 2
      %v2200 = vsel %vm602, %v2198, %v2199
      %2209 = vst.msk [vmem:[#allocation8 + $0x8] sm:$0xff] %vm1828, %v1971
      %2210 = vst.msk [vmem:[#allocation8 + $0x18] sm:$0xff] %vm1828, %v1974
      %2211 = vst.msk [vmem:[#allocation8 + $0x28] sm:$0xff] %vm1828, %v1977
      %2212 = vst.msk [vmem:[#allocation8 + $0x38] sm:$0xff] %vm1828, %v1980
      %2213 = vst.msk [vmem:[#allocation8 + $0x48] sm:$0xff] %vm1828, %v1983
      %2214 = vst.msk [vmem:[#allocation8 + $0x58] sm:$0xff] %vm1828, %v1986
      %2215 = vst.msk [vmem:[#allocation8 + $0x68] sm:$0xff] %vm1828, %v2093
      %2216 = vst.msk [vmem:[#allocation8 + $0x78] sm:$0xff] %vm1828, %v2200
      %2218 = vrot.lane.b32.xlu0 %v1866, 16
      %v2219 = vpop.permute.xlu0 %2218
      %2220 = vrot.lane.b32.xlu0 %v1868, 16
      %v2221 = vpop.permute.xlu0 %2220
      %2222 = vrot.lane.b32.xlu0 %v1870, 16
      %v2223 = vpop.permute.xlu0 %2222
      %2224 = vrot.lane.b32.xlu0 %v1872, 16
      %v2225 = vpop.permute.xlu0 %2224
      %2226 = vrot.lane.b32.xlu0 %v1874, 16
      %v2227 = vpop.permute.xlu0 %2226
      %2228 = vrot.lane.b32.xlu0 %v1876, 16
      %v2229 = vpop.permute.xlu0 %2228
      %2230 = vrot.lane.b32.xlu0 %v1878, 16
      %v2231 = vpop.permute.xlu0 %2230
      %2232 = vrot.lane.b32.xlu0 %v1880, 16
      %v2233 = vpop.permute.xlu0 %2232
      %2242 = vst.msk [vmem:[#allocation8 + $0x8] sm:$0xff] %vm1954, %v2219
      %2243 = vst.msk [vmem:[#allocation8 + $0x18] sm:$0xff] %vm1954, %v2221
      %2244 = vst.msk [vmem:[#allocation8 + $0x28] sm:$0xff] %vm1954, %v2223
      %2245 = vst.msk [vmem:[#allocation8 + $0x38] sm:$0xff] %vm1954, %v2225
      %2246 = vst.msk [vmem:[#allocation8 + $0x48] sm:$0xff] %vm1954, %v2227
      %2247 = vst.msk [vmem:[#allocation8 + $0x58] sm:$0xff] %vm1954, %v2229
      %2248 = vst.msk [vmem:[#allocation8 + $0x68] sm:$0xff] %vm1954, %v2231
      %2249 = vst.msk [vmem:[#allocation8 + $0x78] sm:$0xff] %vm1954, %v2233
      %v2251 = vrot.slane %v1880, 1
      %v2252 = vrot.slane %v1881, 1
      %v2253 = vsel %vm544, %v2251, %v2252
      %2254 = vrot.lane.b32.xlu0 %v1917, 32
      %v2255 = vpop.permute.xlu0 %2254
      %2256 = vrot.lane.b32.xlu0 %v1920, 32
      %v2257 = vpop.permute.xlu0 %2256
      %2258 = vrot.lane.b32.xlu0 %v1923, 32
      %v2259 = vpop.permute.xlu0 %2258
      %2260 = vrot.lane.b32.xlu0 %v1926, 32
      %v2261 = vpop.permute.xlu0 %2260
      %2262 = vrot.lane.b32.xlu0 %v1929, 32
      %v2263 = vpop.permute.xlu0 %2262
      %2264 = vrot.lane.b32.xlu0 %v2057, 32
      %v2265 = vpop.permute.xlu0 %2264
      %2266 = vrot.lane.b32.xlu0 %v2164, 32
      %v2267 = vpop.permute.xlu0 %2266
      %2268 = vrot.lane.b32.xlu0 %v2253, 32
      %v2269 = vpop.permute.xlu0 %2268
      %2278 = vst.msk [vmem:[#allocation8 + $0x8] sm:$0xff] %vm2011, %v2255
      %2279 = vst.msk [vmem:[#allocation8 + $0x18] sm:$0xff] %vm2011, %v2257
      %2280 = vst.msk [vmem:[#allocation8 + $0x28] sm:$0xff] %vm2011, %v2259
      %2281 = vst.msk [vmem:[#allocation8 + $0x38] sm:$0xff] %vm2011, %v2261
      %2282 = vst.msk [vmem:[#allocation8 + $0x48] sm:$0xff] %vm2011, %v2263
      %2283 = vst.msk [vmem:[#allocation8 + $0x58] sm:$0xff] %vm2011, %v2265
      %2284 = vst.msk [vmem:[#allocation8 + $0x68] sm:$0xff] %vm2011, %v2267
      %2285 = vst.msk [vmem:[#allocation8 + $0x78] sm:$0xff] %vm2011, %v2269
      %v2286 = vrot.slane %v1880, 2
      %v2287 = vrot.slane %v1881, 2
      %v2288 = vsel %vm602, %v2286, %v2287
      %2289 = vrot.lane.b32.xlu0 %v1974, 48
      %v2290 = vpop.permute.xlu0 %2289
      %2291 = vrot.lane.b32.xlu0 %v1977, 48
      %v2292 = vpop.permute.xlu0 %2291
      %2293 = vrot.lane.b32.xlu0 %v1980, 48
      %v2294 = vpop.permute.xlu0 %2293
      %2295 = vrot.lane.b32.xlu0 %v1983, 48
      %v2296 = vpop.permute.xlu0 %2295
      %2297 = vrot.lane.b32.xlu0 %v1986, 48
      %v2298 = vpop.permute.xlu0 %2297
      %2299 = vrot.lane.b32.xlu0 %v2093, 48
      %v2300 = vpop.permute.xlu0 %2299
      %2301 = vrot.lane.b32.xlu0 %v2200, 48
      %v2302 = vpop.permute.xlu0 %2301
      %2303 = vrot.lane.b32.xlu0 %v2288, 48
      %v2304 = vpop.permute.xlu0 %2303
      %2313 = vst.msk [vmem:[#allocation8 + $0x8] sm:$0xff] %vm2045, %v2290
      %2314 = vst.msk [vmem:[#allocation8 + $0x18] sm:$0xff] %vm2045, %v2292
      %2315 = vst.msk [vmem:[#allocation8 + $0x28] sm:$0xff] %vm2045, %v2294
      %2316 = vst.msk [vmem:[#allocation8 + $0x38] sm:$0xff] %vm2045, %v2296
      %2317 = vst.msk [vmem:[#allocation8 + $0x48] sm:$0xff] %vm2045, %v2298
      %2318 = vst.msk [vmem:[#allocation8 + $0x58] sm:$0xff] %vm2045, %v2300
      %2319 = vst.msk [vmem:[#allocation8 + $0x68] sm:$0xff] %vm2045, %v2302
      %2320 = vst.msk [vmem:[#allocation8 + $0x78] sm:$0xff] %vm2045, %v2304
      %v2321 = vld [vmem:[#allocation8] sm:$0xff]
      %v2322 = vld [vmem:[#allocation8 + $0x8] sm:$0xff]
      %v2323 = vld [vmem:[#allocation8 + $0x10] sm:$0xff]
      %v2324 = vld [vmem:[#allocation8 + $0x18] sm:$0xff]
      %v2325 = vld [vmem:[#allocation8 + $0x20] sm:$0xff]
      %v2326 = vld [vmem:[#allocation8 + $0x28] sm:$0xff]
      %v2327 = vld [vmem:[#allocation8 + $0x30] sm:$0xff]
      %v2328 = vld [vmem:[#allocation8 + $0x38] sm:$0xff]
      %v2329 = vld [vmem:[#allocation8 + $0x40] sm:$0xff]
      %v2330 = vld [vmem:[#allocation8 + $0x48] sm:$0xff]
      %v2331 = vld [vmem:[#allocation8 + $0x50] sm:$0xff]
      %v2332 = vld [vmem:[#allocation8 + $0x58] sm:$0xff]
      %v2333 = vld [vmem:[#allocation8 + $0x60] sm:$0xff]
      %v2334 = vld [vmem:[#allocation8 + $0x68] sm:$0xff]
      %v2335 = vld [vmem:[#allocation8 + $0x70] sm:$0xff]
      %v2336 = vld [vmem:[#allocation8 + $0x78] sm:$0xff]
      %v2337 = vld [vmem:[%s5] sm:$0xff]
      %v2338 = vld [vmem:[%s5 + $0x8] sm:$0xff]
      %v2339 = vld [vmem:[%s5 + $0x10] sm:$0xff]
      %v2340 = vld [vmem:[%s5 + $0x18] sm:$0xff]
      %v2341 = vld [vmem:[%s5 + $0x20] sm:$0xff]
      %v2342 = vld [vmem:[%s5 + $0x28] sm:$0xff]
      %v2343 = vld [vmem:[%s5 + $0x30] sm:$0xff]
      %v2344 = vld [vmem:[%s5 + $0x38] sm:$0xff]
      %v2345 = vld [vmem:[%s5 + $0x40] sm:$0xff]
      %v2346 = vld [vmem:[%s5 + $0x48] sm:$0xff]
      %v2347 = vld [vmem:[%s5 + $0x50] sm:$0xff]
      %v2348 = vld [vmem:[%s5 + $0x58] sm:$0xff]
      %v2349 = vld [vmem:[%s5 + $0x60] sm:$0xff]
      %v2350 = vld [vmem:[%s5 + $0x68] sm:$0xff]
      %v2351 = vld [vmem:[%s5 + $0x70] sm:$0xff]
      %v2352 = vld [vmem:[%s5 + $0x78] sm:$0xff]
      %v2353 = vld [vmem:[%s5 + $0x80] sm:$0xff]
      %v2354 = vld [vmem:[%s5 + $0x88] sm:$0xff]
      %v2355 = vld [vmem:[%s5 + $0x90] sm:$0xff]
      %v2356 = vld [vmem:[%s5 + $0x98] sm:$0xff]
      %v2357 = vld [vmem:[%s5 + $0xa0] sm:$0xff]
      %v2358 = vld [vmem:[%s5 + $0xa8] sm:$0xff]
      %v2359 = vld [vmem:[%s5 + $0xb0] sm:$0xff]
      %v2360 = vld [vmem:[%s5 + $0xb8] sm:$0xff]
      %v2361 = vld [vmem:[%s6] sm:$0x1]
      %v2363 = vlaneseq
      %v2364 = vshrl.u32 %v2363, 7
      %v2365 = vsub.s32 0, %v2364
      %v2366 = vrot.slane %v2361, %v2365
      %vm2368 = vcmask 523264
      %v2370 = vsel %vm2368, %v2322, 0
      %v2373 = vsel %vm2368, %v2324, 0
      %v2376 = vsel %vm2368, %v2326, 0
      %v2379 = vsel %vm2368, %v2328, 0
      %v2382 = vsel %vm2368, %v2330, 0
      %v2385 = vsel %vm2368, %v2332, 0
      %v2388 = vsel %vm2368, %v2334, 0
      %v2391 = vsel %vm2368, %v2336, 0
      %2393 = vmatprep.subr.mxu0 0.0
      %2394 = vmatpush1.msra.mxu0 %v2337
      %2395 = vmatprep.subr.mxu0 0.0
      %2396 = vmatpush1.msra.mxu0 %v2338
      %2397 = vmatprep.subr.mxu0 0.0
      %2398 = vmatpush1.msra.mxu0 %v2339
      %2399 = vmatprep.subr.mxu0 0.0
      %2400 = vmatpush1.msra.mxu0 %v2340
      %2401 = vmatprep.subr.mxu0 0.0
      %2402 = vmatpush1.msra.mxu0 %v2341
      %2403 = vmatprep.subr.mxu0 0.0
      %2404 = vmatpush1.msra.mxu0 %v2342
      %2405 = vmatprep.subr.mxu0 0.0
      %2406 = vmatpush1.msra.mxu0 %v2343
      %2407 = vmatprep.subr.mxu0 0.0
      %2408 = vmatpush1.msra.mxu0 %v2344
      %2409 = vmatprep.subr.mxu0 0.0
      %2410 = vmatpush1.msra.mxu0 %v2345
      %2411 = vmatprep.subr.mxu0 0.0
      %2412 = vmatpush1.msra.mxu0 %v2346
      %2413 = vmatprep.subr.mxu0 0.0
      %2414 = vmatpush1.msra.mxu0 %v2347
      %2415 = vmatprep.subr.mxu0 0.0
      %2416 = vmatpush1.msra.mxu0 %v2348
      %2417 = vmatprep.subr.mxu0 0.0
      %2418 = vmatpush1.msra.mxu0 %v2349
      %2419 = vmatprep.subr.mxu0 0.0
      %2420 = vmatpush1.msra.mxu0 %v2350
      %2421 = vmatprep.subr.mxu0 0.0
      %2422 = vmatpush1.msra.mxu0 %v2351
      %2423 = vmatprep.subr.mxu0 0.0
      %2424 = vmatpush1.msra.mxu0 %v2352
      %2425 = vmatprep.subr.mxu0 0.0
      %2426 = vmatpush1.msra.mxu0 %v2353
      %2427 = vmatprep.subr.mxu0 0.0
      %2428 = vmatpush1.msra.mxu0 %v2354
      %2429 = vmatprep.subr.mxu0 0.0
      %2430 = vmatpush1.msra.mxu0 %v2355
      %2431 = vmatprep.subr.mxu0 0.0
      %2432 = vmatpush1.msra.mxu0 %v2356
      %2433 = vmatprep.subr.mxu0 0.0
      %2434 = vmatpush1.msra.mxu0 %v2357
      %2435 = vmatprep.subr.mxu0 0.0
      %2436 = vmatpush1.msra.mxu0 %v2358
      %2437 = vmatprep.subr.mxu0 0.0
      %2438 = vmatpush1.msra.mxu0 %v2359
      %2439 = vmatprep.subr.mxu0 0.0
      %2440 = vmatpush1.msra.mxu0 %v2360
      %2441 = vmatprep.subr.mxu0 0.0
      %2442 = vmatpush1.msra.mxu0 0.0
      %2443 = vmatprep.subr.mxu0 0.0
      %2444 = vmatpush1.msra.mxu0 0.0
      %2445 = vmatprep.subr.mxu0 0.0
      %2446 = vmatpush1.msra.mxu0 0.0
      %2447 = vmatprep.subr.mxu0 0.0
      %2448 = vmatpush1.msra.mxu0 0.0
      %2449 = vmatprep.subr.mxu0 0.0
      %2450 = vmatpush1.msra.mxu0 0.0
      %2451 = vmatprep.subr.mxu0 0.0
      %2452 = vmatpush1.msra.mxu0 0.0
      %2453 = vmatprep.subr.mxu0 0.0
      %2454 = vmatpush1.msra.mxu0 0.0
      %2455 = vmatprep.subr.mxu0 0.0
      %2456 = vmatpush1.msra.mxu0 0.0
      %2457 = vmatprep.mubr.f32.mxu0 %v2370
      %2458 = vmatmul.mubr.f32.gmra.mrb[0].mxu0 %v2321
      %v2459 = vpop.f32.mrb[0].mxu0
      %v2460 = vadd.f32 %v2366, %v2459
      %v2461 = vpop.f32.mrb[0].mxu0
      %2462 = vmatprep.mubr.f32.mxu0 %v2373
      %2463 = vmatmul.mubr.f32.gmra.mrb[0].mxu0 %v2323
      %v2464 = vpop.f32.mrb[0].mxu0
      %v2465 = vadd.f32 %v2366, %v2464
      %v2466 = vpop.f32.mrb[0].mxu0
      %2467 = vmatprep.mubr.f32.mxu0 %v2376
      %2468 = vmatmul.mubr.f32.gmra.mrb[0].mxu0 %v2325
      %v2469 = vpop.f32.mrb[0].mxu0
      %v2470 = vadd.f32 %v2366, %v2469
      %v2471 = vpop.f32.mrb[0].mxu0
      %2472 = vmatprep.mubr.f32.mxu0 %v2379
      %2473 = vmatmul.mubr.f32.gmra.mrb[0].mxu0 %v2327
      %v2474 = vpop.f32.mrb[0].mxu0
      %v2475 = vadd.f32 %v2366, %v2474
      %v2476 = vpop.f32.mrb[0].mxu0
      %2477 = vmatprep.mubr.f32.mxu0 %v2382
      %2478 = vmatmul.mubr.f32.gmra.mrb[0].mxu0 %v2329
      %v2479 = vpop.f32.mrb[0].mxu0
      %v2480 = vadd.f32 %v2366, %v2479
      %v2481 = vpop.f32.mrb[0].mxu0
      %2482 = vmatprep.mubr.f32.mxu0 %v2385
      %2483 = vmatmul.mubr.f32.gmra.mrb[0].mxu0 %v2331
      %v2484 = vpop.f32.mrb[0].mxu0
      %v2485 = vadd.f32 %v2366, %v2484
      %v2486 = vpop.f32.mrb[0].mxu0
      %2487 = vmatprep.mubr.f32.mxu0 %v2388
      %2488 = vmatmul.mubr.f32.gmra.mrb[0].mxu0 %v2333
      %v2489 = vpop.f32.mrb[0].mxu0
      %v2490 = vadd.f32 %v2366, %v2489
      %v2491 = vpop.f32.mrb[0].mxu0
      %2492 = vmatprep.mubr.f32.mxu0 %v2391
      %2493 = vmatmul.mubr.f32.gmra.mrb[0].mxu0 %v2335
      %v2494 = vpop.f32.mrb[0].mxu0
      %v2495 = vadd.f32 %v2366, %v2494
      %v2496 = vpop.f32.mrb[0].mxu0
      %2497 = vdwg.mxu0
      %v2498 = vmax.f32 %v2460, 0.0
      %v2499 = vmax.f32 %v2465, 0.0
      %v2500 = vmax.f32 %v2470, 0.0
      %v2501 = vmax.f32 %v2475, 0.0
      %v2502 = vmax.f32 %v2480, 0.0
      %v2503 = vmax.f32 %v2485, 0.0
      %v2504 = vmax.f32 %v2490, 0.0
      %v2505 = vmax.f32 %v2495, 0.0
      %2506 = vst.msk [vmem:[#allocation5] sm:$0xff] %vm1828, 0.0
      %2507 = vst.msk [vmem:[#allocation5 + $0x8] sm:$0x3] %vm1830, 0.0
      %2508 = vst.msk [vmem:[#allocation5 + $0x10] sm:$0xff] %vm1828, 0.0
      %2509 = vst.msk [vmem:[#allocation5 + $0x18] sm:$0x3] %vm1830, 0.0
      %2510 = vst.msk [vmem:[#allocation5 + $0x20] sm:$0xff] %vm1828, 0.0
      %2511 = vst.msk [vmem:[#allocation5 + $0x28] sm:$0x3] %vm1830, 0.0
      %2512 = vst.msk [vmem:[#allocation5 + $0x30] sm:$0xff] %vm1828, 0.0
      %2513 = vst.msk [vmem:[#allocation5 + $0x38] sm:$0x3] %vm1830, 0.0
      %2514 = vst.msk [vmem:[#allocation5 + $0x40] sm:$0xff] %vm1828, 0.0
      %2515 = vst.msk [vmem:[#allocation5 + $0x48] sm:$0x3] %vm1830, 0.0
      %2516 = vst.msk [vmem:[#allocation5 + $0x50] sm:$0xff] %vm1828, 0.0
      %2517 = vst.msk [vmem:[#allocation5 + $0x58] sm:$0x3] %vm1830, 0.0
      %2518 = vst.msk [vmem:[#allocation5 + $0x60] sm:$0xff] %vm1828, 0.0
      %2519 = vst.msk [vmem:[#allocation5 + $0x68] sm:$0x3] %vm1830, 0.0
      %2520 = vst.msk [vmem:[#allocation5 + $0x70] sm:$0xff] %vm1828, 0.0
      %2521 = vst.msk [vmem:[#allocation5 + $0x78] sm:$0x3] %vm1830, 0.0
      %2522 = vst.msk [vmem:[#allocation5 + $0x80] sm:$0xff] %vm1828, 0.0
      %2523 = vst.msk [vmem:[#allocation5 + $0x88] sm:$0x3] %vm1830, 0.0
      %2524 = vst.msk [vmem:[#allocation5 + $0x90] sm:$0xff] %vm1828, 0.0
      %2525 = vst.msk [vmem:[#allocation5 + $0x98] sm:$0x3] %vm1830, 0.0
      %2526 = vst.msk [vmem:[#allocation5 + $0xa0] sm:$0xff] %vm1828, 0.0
      %2527 = vst.msk [vmem:[#allocation5 + $0xa8] sm:$0x3] %vm1830, 0.0
      %2528 = vst.msk [vmem:[#allocation5 + $0xb0] sm:$0xff] %vm1828, 0.0
      %2529 = vst.msk [vmem:[#allocation5 + $0xb8] sm:$0x3] %vm1830, 0.0
      %2530 = vst.msk [vmem:[#allocation5 + $0xc0] sm:$0xff] %vm1828, 0.0
      %2531 = vst.msk [vmem:[#allocation5 + $0xc8] sm:$0x3] %vm1830, 0.0
      %2532 = vst.msk [vmem:[#allocation5 + $0xd0] sm:$0xff] %vm1828, 0.0
      %2533 = vst.msk [vmem:[#allocation5 + $0xd8] sm:$0x3] %vm1830, 0.0
      %2534 = vst.msk [vmem:[#allocation5 + $0xe0] sm:$0xff] %vm1828, 0.0
      %2535 = vst.msk [vmem:[#allocation5 + $0xe8] sm:$0x3] %vm1830, 0.0
      %2536 = vst.msk [vmem:[#allocation5 + $0xf0] sm:$0xff] %vm1828, 0.0
      %2537 = vst.msk [vmem:[#allocation5 + $0xf8] sm:$0x3] %vm1830, 0.0
      %2538 = vst.msk [vmem:[#allocation5 + $0x100] sm:$0xff] %vm1828, 0.0
      %2539 = vst.msk [vmem:[#allocation5 + $0x108] sm:$0x3] %vm1830, 0.0
      %2540 = vst.msk [vmem:[#allocation5 + $0x110] sm:$0xff] %vm1828, 0.0
      %2541 = vst.msk [vmem:[#allocation5 + $0x118] sm:$0x3] %vm1830, 0.0
      %2542 = vst.msk [vmem:[#allocation5 + $0x120] sm:$0xff] %vm1828, 0.0
      %2543 = vst.msk [vmem:[#allocation5 + $0x128] sm:$0x3] %vm1830, 0.0
      %2544 = vst.msk [vmem:[#allocation5 + $0x130] sm:$0xff] %vm1828, 0.0
      %2545 = vst.msk [vmem:[#allocation5 + $0x138] sm:$0x3] %vm1830, 0.0
      %2546 = vst.msk [vmem:[#allocation5 + $0x140] sm:$0xff] %vm1828, 0.0
      %2547 = vst.msk [vmem:[#allocation5 + $0x148] sm:$0x3] %vm1830, 0.0
      %s2548 = scalar_lea.vmem [#allocation5], 48
      %2549 = vst.msk [vmem:[%s2548 + $0x1] sm:$0xff] %vm1313, %v2498
      %2551 = vrot.lane.b32.xlu0 %v1305, 8
      %v2552 = vpop.permute.xlu0 %2551
      %2554 = vst.msk [vmem:[%s2548 + $0x1] sm:$0xff] %vm1406, %v2552
      %s2555 = scalar_lea.vmem [#allocation5], 80
      %2556 = vst.msk [vmem:[%s2555 + $0x1] sm:$0xff] %vm1313, %v2499
      %2558 = vrot.lane.b32.xlu0 %v1306, 8
      %v2559 = vpop.permute.xlu0 %2558
      %2561 = vst.msk [vmem:[%s2555 + $0x1] sm:$0xff] %vm1406, %v2559
      %s2562 = scalar_lea.vmem [#allocation5], 112
      %2563 = vst.msk [vmem:[%s2562 + $0x1] sm:$0xff] %vm1313, %v2500
      %2565 = vrot.lane.b32.xlu0 %v1307, 8
      %v2566 = vpop.permute.xlu0 %2565
      %2568 = vst.msk [vmem:[%s2562 + $0x1] sm:$0xff] %vm1406, %v2566
      %s2569 = scalar_lea.vmem [#allocation5], 144
      %2570 = vst.msk [vmem:[%s2569 + $0x1] sm:$0xff] %vm1313, %v2501
      %2572 = vrot.lane.b32.xlu0 %v1308, 8
      %v2573 = vpop.permute.xlu0 %2572
      %2575 = vst.msk [vmem:[%s2569 + $0x1] sm:$0xff] %vm1406, %v2573
      %s2576 = scalar_lea.vmem [#allocation5], 176
      %2577 = vst.msk [vmem:[%s2576 + $0x1] sm:$0xff] %vm1313, %v2502
      %2579 = vrot.lane.b32.xlu0 %v1309, 8
      %v2580 = vpop.permute.xlu0 %2579
      %2582 = vst.msk [vmem:[%s2576 + $0x1] sm:$0xff] %vm1406, %v2580
      %s2583 = scalar_lea.vmem [#allocation5], 208
      %2584 = vst.msk [vmem:[%s2583 + $0x1] sm:$0xff] %vm1313, %v2503
      %2586 = vrot.lane.b32.xlu0 %v1310, 8
      %v2587 = vpop.permute.xlu0 %2586
      %2589 = vst.msk [vmem:[%s2583 + $0x1] sm:$0xff] %vm1406, %v2587
      %s2590 = scalar_lea.vmem [#allocation5], 240
      %2591 = vst.msk [vmem:[%s2590 + $0x1] sm:$0xff] %vm1313, %v2504
      %2593 = vrot.lane.b32.xlu0 %v1311, 8
      %v2594 = vpop.permute.xlu0 %2593
      %2596 = vst.msk [vmem:[%s2590 + $0x1] sm:$0xff] %vm1406, %v2594
      %s2597 = scalar_lea.vmem [#allocation5], 272
      %2598 = vst.msk [vmem:[%s2597 + $0x1] sm:$0xff] %vm1313, %v2505
      %2600 = vrot.lane.b32.xlu0 %v1312, 8
      %v2601 = vpop.permute.xlu0 %2600
      %2603 = vst.msk [vmem:[%s2597 + $0x1] sm:$0xff] %vm1406, %v2601
      %v2604 = vld [vmem:[#allocation5] sm:$0xff]
      %v2605 = vld [vmem:[#allocation5 + $0x8] sm:$0x3]
      %v2606 = vld [vmem:[#allocation5 + $0x10] sm:$0xff]
      %v2607 = vld [vmem:[#allocation5 + $0x18] sm:$0x3]
      %v2608 = vld [vmem:[#allocation5 + $0x20] sm:$0xff]
      %v2609 = vld [vmem:[#allocation5 + $0x28] sm:$0x3]
      %v2610 = vld [vmem:[#allocation5 + $0x30] sm:$0xff]
      %v2611 = vld [vmem:[#allocation5 + $0x38] sm:$0x3]
      %v2612 = vld [vmem:[#allocation5 + $0x40] sm:$0xff]
      %v2613 = vld [vmem:[#allocation5 + $0x48] sm:$0x3]
      %v2614 = vld [vmem:[#allocation5 + $0x50] sm:$0xff]
      %v2615 = vld [vmem:[#allocation5 + $0x58] sm:$0x3]
      %v2616 = vld [vmem:[#allocation5 + $0x60] sm:$0xff]
      %v2617 = vld [vmem:[#allocation5 + $0x68] sm:$0x3]
      %v2618 = vld [vmem:[#allocation5 + $0x70] sm:$0xff]
      %v2619 = vld [vmem:[#allocation5 + $0x78] sm:$0x3]
      %v2620 = vld [vmem:[#allocation5 + $0x80] sm:$0xff]
      %v2621 = vld [vmem:[#allocation5 + $0x88] sm:$0x3]
      %v2622 = vld [vmem:[#allocation5 + $0x90] sm:$0xff]
      %v2623 = vld [vmem:[#allocation5 + $0x98] sm:$0x3]
      %v2624 = vld [vmem:[#allocation5 + $0xa0] sm:$0xff]
      %v2625 = vld [vmem:[#allocation5 + $0xa8] sm:$0x3]
      %v2626 = vld [vmem:[#allocation5 + $0xb0] sm:$0xff]
      %v2627 = vld [vmem:[#allocation5 + $0xb8] sm:$0x3]
      %v2628 = vld [vmem:[#allocation5 + $0xc0] sm:$0xff]
      %v2629 = vld [vmem:[#allocation5 + $0xc8] sm:$0x3]
      %v2630 = vld [vmem:[#allocation5 + $0xd0] sm:$0xff]
      %v2631 = vld [vmem:[#allocation5 + $0xd8] sm:$0x3]
      %v2632 = vld [vmem:[#allocation5 + $0xe0] sm:$0xff]
      %v2633 = vld [vmem:[#allocation5 + $0xe8] sm:$0x3]
      %v2634 = vld [vmem:[#allocation5 + $0xf0] sm:$0xff]
      %v2635 = vld [vmem:[#allocation5 + $0xf8] sm:$0x3]
      %v2636 = vld [vmem:[#allocation5 + $0x100] sm:$0xff]
      %v2637 = vld [vmem:[#allocation5 + $0x108] sm:$0x3]
      %v2638 = vld [vmem:[#allocation5 + $0x110] sm:$0xff]
      %v2639 = vld [vmem:[#allocation5 + $0x118] sm:$0x3]
      %v2640 = vld [vmem:[#allocation5 + $0x120] sm:$0xff]
      %v2641 = vld [vmem:[#allocation5 + $0x128] sm:$0x3]
      %v2642 = vld [vmem:[#allocation5 + $0x130] sm:$0xff]
      %v2643 = vld [vmem:[#allocation5 + $0x138] sm:$0x3]
      %v2644 = vld [vmem:[#allocation5 + $0x140] sm:$0xff]
      %v2645 = vld [vmem:[#allocation5 + $0x148] sm:$0x3]
      %2646 = vst.msk [vmem:[#allocation9] sm:$0xff] %vm1828, %v2604
      %2647 = vst.msk [vmem:[#allocation9 + $0x10] sm:$0xff] %vm1828, %v2606
      %2648 = vst.msk [vmem:[#allocation9 + $0x20] sm:$0xff] %vm1828, %v2608
      %2649 = vst.msk [vmem:[#allocation9 + $0x30] sm:$0xff] %vm1828, %v2610
      %2650 = vst.msk [vmem:[#allocation9 + $0x40] sm:$0xff] %vm1828, %v2612
      %2651 = vst.msk [vmem:[#allocation9 + $0x50] sm:$0xff] %vm1828, %v2614
      %2652 = vst.msk [vmem:[#allocation9 + $0x60] sm:$0xff] %vm1828, %v2616
      %2653 = vst.msk [vmem:[#allocation9 + $0x70] sm:$0xff] %vm1828, %v2618
      %2654 = vst.msk [vmem:[#allocation9 + $0x80] sm:$0xff] %vm1828, %v2620
      %2655 = vst.msk [vmem:[#allocation9 + $0x90] sm:$0xff] %vm1828, %v2622
      %2656 = vst.msk [vmem:[#allocation9 + $0xa0] sm:$0xff] %vm1828, %v2624
      %2657 = vst.msk [vmem:[#allocation9 + $0xb0] sm:$0xff] %vm1828, %v2626
      %2658 = vst.msk [vmem:[#allocation9 + $0xc0] sm:$0xff] %vm1828, %v2628
      %2659 = vst.msk [vmem:[#allocation9 + $0xd0] sm:$0xff] %vm1828, %v2630
      %2660 = vst.msk [vmem:[#allocation9 + $0xe0] sm:$0xff] %vm1828, %v2632
      %2661 = vst.msk [vmem:[#allocation9 + $0xf0] sm:$0xff] %vm1828, %v2634
      %2662 = vst.msk [vmem:[#allocation9 + $0x100] sm:$0xff] %vm1828, %v2636
      %v2697 = vrot.slane %v2604, 1
      %v2698 = vrot.slane %v2605, 1
      %v2699 = vsel %vm544, %v2697, %v2698
      %v2700 = vrot.slane %v2606, 1
      %v2701 = vrot.slane %v2607, 1
      %v2702 = vsel %vm544, %v2700, %v2701
      %v2703 = vrot.slane %v2608, 1
      %v2704 = vrot.slane %v2609, 1
      %v2705 = vsel %vm544, %v2703, %v2704
      %v2706 = vrot.slane %v2610, 1
      %v2707 = vrot.slane %v2611, 1
      %v2708 = vsel %vm544, %v2706, %v2707
      %v2709 = vrot.slane %v2612, 1
      %v2710 = vrot.slane %v2613, 1
      %v2711 = vsel %vm544, %v2709, %v2710
      %v2712 = vrot.slane %v2614, 1
      %v2713 = vrot.slane %v2615, 1
      %v2714 = vsel %vm544, %v2712, %v2713
      %v2715 = vrot.slane %v2616, 1
      %v2716 = vrot.slane %v2617, 1
      %v2717 = vsel %vm544, %v2715, %v2716
      %v2718 = vrot.slane %v2618, 1
      %v2719 = vrot.slane %v2619, 1
      %v2720 = vsel %vm544, %v2718, %v2719
      %v2721 = vrot.slane %v2620, 1
      %v2722 = vrot.slane %v2621, 1
      %v2723 = vsel %vm544, %v2721, %v2722
      %v2724 = vrot.slane %v2622, 1
      %v2725 = vrot.slane %v2623, 1
      %v2726 = vsel %vm544, %v2724, %v2725
      %v2727 = vrot.slane %v2624, 1
      %v2728 = vrot.slane %v2625, 1
      %v2729 = vsel %vm544, %v2727, %v2728
      %v2730 = vrot.slane %v2626, 1
      %v2731 = vrot.slane %v2627, 1
      %v2732 = vsel %vm544, %v2730, %v2731
      %v2733 = vrot.slane %v2628, 1
      %v2734 = vrot.slane %v2629, 1
      %v2735 = vsel %vm544, %v2733, %v2734
      %v2736 = vrot.slane %v2630, 1
      %v2737 = vrot.slane %v2631, 1
      %v2738 = vsel %vm544, %v2736, %v2737
      %v2739 = vrot.slane %v2632, 1
      %v2740 = vrot.slane %v2633, 1
      %v2741 = vsel %vm544, %v2739, %v2740
      %v2742 = vrot.slane %v2634, 1
      %v2743 = vrot.slane %v2635, 1
      %v2744 = vsel %vm544, %v2742, %v2743
      %v2745 = vrot.slane %v2636, 1
      %v2746 = vrot.slane %v2637, 1
      %v2747 = vsel %vm544, %v2745, %v2746
      %2748 = vrot.lane.b32.xlu0 %v2699, 16
      %v2749 = vpop.permute.xlu0 %2748
      %2750 = vrot.lane.b32.xlu0 %v2702, 16
      %v2751 = vpop.permute.xlu0 %2750
      %2752 = vrot.lane.b32.xlu0 %v2705, 16
      %v2753 = vpop.permute.xlu0 %2752
      %2754 = vrot.lane.b32.xlu0 %v2708, 16
      %v2755 = vpop.permute.xlu0 %2754
      %2756 = vrot.lane.b32.xlu0 %v2711, 16
      %v2757 = vpop.permute.xlu0 %2756
      %2758 = vrot.lane.b32.xlu0 %v2714, 16
      %v2759 = vpop.permute.xlu0 %2758
      %2760 = vrot.lane.b32.xlu0 %v2717, 16
      %v2761 = vpop.permute.xlu0 %2760
      %2762 = vrot.lane.b32.xlu0 %v2720, 16
      %v2763 = vpop.permute.xlu0 %2762
      %2764 = vrot.lane.b32.xlu0 %v2723, 16
      %v2765 = vpop.permute.xlu0 %2764
      %2766 = vrot.lane.b32.xlu0 %v2726, 16
      %v2767 = vpop.permute.xlu0 %2766
      %2768 = vrot.lane.b32.xlu0 %v2729, 16
      %v2769 = vpop.permute.xlu0 %2768
      %2770 = vrot.lane.b32.xlu0 %v2732, 16
      %v2771 = vpop.permute.xlu0 %2770
      %2772 = vrot.lane.b32.xlu0 %v2735, 16
      %v2773 = vpop.permute.xlu0 %2772
      %2774 = vrot.lane.b32.xlu0 %v2738, 16
      %v2775 = vpop.permute.xlu0 %2774
      %2776 = vrot.lane.b32.xlu0 %v2741, 16
      %v2777 = vpop.permute.xlu0 %2776
      %2778 = vrot.lane.b32.xlu0 %v2744, 16
      %v2779 = vpop.permute.xlu0 %2778
      %2780 = vrot.lane.b32.xlu0 %v2747, 16
      %v2781 = vpop.permute.xlu0 %2780
      %2799 = vst.msk [vmem:[#allocation9] sm:$0xff] %vm1954, %v2749
      %2800 = vst.msk [vmem:[#allocation9 + $0x10] sm:$0xff] %vm1954, %v2751
      %2801 = vst.msk [vmem:[#allocation9 + $0x20] sm:$0xff] %vm1954, %v2753
      %2802 = vst.msk [vmem:[#allocation9 + $0x30] sm:$0xff] %vm1954, %v2755
      %2803 = vst.msk [vmem:[#allocation9 + $0x40] sm:$0xff] %vm1954, %v2757
      %2804 = vst.msk [vmem:[#allocation9 + $0x50] sm:$0xff] %vm1954, %v2759
      %2805 = vst.msk [vmem:[#allocation9 + $0x60] sm:$0xff] %vm1954, %v2761
      %2806 = vst.msk [vmem:[#allocation9 + $0x70] sm:$0xff] %vm1954, %v2763
      %2807 = vst.msk [vmem:[#allocation9 + $0x80] sm:$0xff] %vm1954, %v2765
      %2808 = vst.msk [vmem:[#allocation9 + $0x90] sm:$0xff] %vm1954, %v2767
      %2809 = vst.msk [vmem:[#allocation9 + $0xa0] sm:$0xff] %vm1954, %v2769
      %2810 = vst.msk [vmem:[#allocation9 + $0xb0] sm:$0xff] %vm1954, %v2771
      %2811 = vst.msk [vmem:[#allocation9 + $0xc0] sm:$0xff] %vm1954, %v2773
      %2812 = vst.msk [vmem:[#allocation9 + $0xd0] sm:$0xff] %vm1954, %v2775
      %2813 = vst.msk [vmem:[#allocation9 + $0xe0] sm:$0xff] %vm1954, %v2777
      %2814 = vst.msk [vmem:[#allocation9 + $0xf0] sm:$0xff] %vm1954, %v2779
      %2815 = vst.msk [vmem:[#allocation9 + $0x100] sm:$0xff] %vm1954, %v2781
      %v2816 = vrot.slane %v2604, 2
      %v2817 = vrot.slane %v2605, 2
      %v2818 = vsel %vm602, %v2816, %v2817
      %v2819 = vrot.slane %v2606, 2
      %v2820 = vrot.slane %v2607, 2
      %v2821 = vsel %vm602, %v2819, %v2820
      %v2822 = vrot.slane %v2608, 2
      %v2823 = vrot.slane %v2609, 2
      %v2824 = vsel %vm602, %v2822, %v2823
      %v2825 = vrot.slane %v2610, 2
      %v2826 = vrot.slane %v2611, 2
      %v2827 = vsel %vm602, %v2825, %v2826
      %v2828 = vrot.slane %v2612, 2
      %v2829 = vrot.slane %v2613, 2
      %v2830 = vsel %vm602, %v2828, %v2829
      %v2831 = vrot.slane %v2614, 2
      %v2832 = vrot.slane %v2615, 2
      %v2833 = vsel %vm602, %v2831, %v2832
      %v2834 = vrot.slane %v2616, 2
      %v2835 = vrot.slane %v2617, 2
      %v2836 = vsel %vm602, %v2834, %v2835
      %v2837 = vrot.slane %v2618, 2
      %v2838 = vrot.slane %v2619, 2
      %v2839 = vsel %vm602, %v2837, %v2838
      %v2840 = vrot.slane %v2620, 2
      %v2841 = vrot.slane %v2621, 2
      %v2842 = vsel %vm602, %v2840, %v2841
      %v2843 = vrot.slane %v2622, 2
      %v2844 = vrot.slane %v2623, 2
      %v2845 = vsel %vm602, %v2843, %v2844
      %v2846 = vrot.slane %v2624, 2
      %v2847 = vrot.slane %v2625, 2
      %v2848 = vsel %vm602, %v2846, %v2847
      %v2849 = vrot.slane %v2626, 2
      %v2850 = vrot.slane %v2627, 2
      %v2851 = vsel %vm602, %v2849, %v2850
      %v2852 = vrot.slane %v2628, 2
      %v2853 = vrot.slane %v2629, 2
      %v2854 = vsel %vm602, %v2852, %v2853
      %v2855 = vrot.slane %v2630, 2
      %v2856 = vrot.slane %v2631, 2
      %v2857 = vsel %vm602, %v2855, %v2856
      %v2858 = vrot.slane %v2632, 2
      %v2859 = vrot.slane %v2633, 2
      %v2860 = vsel %vm602, %v2858, %v2859
      %v2861 = vrot.slane %v2634, 2
      %v2862 = vrot.slane %v2635, 2
      %v2863 = vsel %vm602, %v2861, %v2862
      %v2864 = vrot.slane %v2636, 2
      %v2865 = vrot.slane %v2637, 2
      %v2866 = vsel %vm602, %v2864, %v2865
      %2867 = vrot.lane.b32.xlu0 %v2818, 32
      %v2868 = vpop.permute.xlu0 %2867
      %2869 = vrot.lane.b32.xlu0 %v2821, 32
      %v2870 = vpop.permute.xlu0 %2869
      %2871 = vrot.lane.b32.xlu0 %v2824, 32
      %v2872 = vpop.permute.xlu0 %2871
      %2873 = vrot.lane.b32.xlu0 %v2827, 32
      %v2874 = vpop.permute.xlu0 %2873
      %2875 = vrot.lane.b32.xlu0 %v2830, 32
      %v2876 = vpop.permute.xlu0 %2875
      %2877 = vrot.lane.b32.xlu0 %v2833, 32
      %v2878 = vpop.permute.xlu0 %2877
      %2879 = vrot.lane.b32.xlu0 %v2836, 32
      %v2880 = vpop.permute.xlu0 %2879
      %2881 = vrot.lane.b32.xlu0 %v2839, 32
      %v2882 = vpop.permute.xlu0 %2881
      %2883 = vrot.lane.b32.xlu0 %v2842, 32
      %v2884 = vpop.permute.xlu0 %2883
      %2885 = vrot.lane.b32.xlu0 %v2845, 32
      %v2886 = vpop.permute.xlu0 %2885
      %2887 = vrot.lane.b32.xlu0 %v2848, 32
      %v2888 = vpop.permute.xlu0 %2887
      %2889 = vrot.lane.b32.xlu0 %v2851, 32
      %v2890 = vpop.permute.xlu0 %2889
      %2891 = vrot.lane.b32.xlu0 %v2854, 32
      %v2892 = vpop.permute.xlu0 %2891
      %2893 = vrot.lane.b32.xlu0 %v2857, 32
      %v2894 = vpop.permute.xlu0 %2893
      %2895 = vrot.lane.b32.xlu0 %v2860, 32
      %v2896 = vpop.permute.xlu0 %2895
      %2897 = vrot.lane.b32.xlu0 %v2863, 32
      %v2898 = vpop.permute.xlu0 %2897
      %2899 = vrot.lane.b32.xlu0 %v2866, 32
      %v2900 = vpop.permute.xlu0 %2899
      %2918 = vst.msk [vmem:[#allocation9] sm:$0xff] %vm2011, %v2868
      %2919 = vst.msk [vmem:[#allocation9 + $0x10] sm:$0xff] %vm2011, %v2870
      %2920 = vst.msk [vmem:[#allocation9 + $0x20] sm:$0xff] %vm2011, %v2872
      %2921 = vst.msk [vmem:[#allocation9 + $0x30] sm:$0xff] %vm2011, %v2874
      %2922 = vst.msk [vmem:[#allocation9 + $0x40] sm:$0xff] %vm2011, %v2876
      %2923 = vst.msk [vmem:[#allocation9 + $0x50] sm:$0xff] %vm2011, %v2878
      %2924 = vst.msk [vmem:[#allocation9 + $0x60] sm:$0xff] %vm2011, %v2880
      %2925 = vst.msk [vmem:[#allocation9 + $0x70] sm:$0xff] %vm2011, %v2882
      %2926 = vst.msk [vmem:[#allocation9 + $0x80] sm:$0xff] %vm2011, %v2884
      %2927 = vst.msk [vmem:[#allocation9 + $0x90] sm:$0xff] %vm2011, %v2886
      %2928 = vst.msk [vmem:[#allocation9 + $0xa0] sm:$0xff] %vm2011, %v2888
      %2929 = vst.msk [vmem:[#allocation9 + $0xb0] sm:$0xff] %vm2011, %v2890
      %2930 = vst.msk [vmem:[#allocation9 + $0xc0] sm:$0xff] %vm2011, %v2892
      %2931 = vst.msk [vmem:[#allocation9 + $0xd0] sm:$0xff] %vm2011, %v2894
      %2932 = vst.msk [vmem:[#allocation9 + $0xe0] sm:$0xff] %vm2011, %v2896
      %2933 = vst.msk [vmem:[#allocation9 + $0xf0] sm:$0xff] %vm2011, %v2898
      %2934 = vst.msk [vmem:[#allocation9 + $0x100] sm:$0xff] %vm2011, %v2900
      %2936 = vrot.lane.b32.xlu0 %v2606, 48
      %v2937 = vpop.permute.xlu0 %2936
      %2938 = vrot.lane.b32.xlu0 %v2608, 48
      %v2939 = vpop.permute.xlu0 %2938
      %2940 = vrot.lane.b32.xlu0 %v2610, 48
      %v2941 = vpop.permute.xlu0 %2940
      %2942 = vrot.lane.b32.xlu0 %v2612, 48
      %v2943 = vpop.permute.xlu0 %2942
      %2944 = vrot.lane.b32.xlu0 %v2614, 48
      %v2945 = vpop.permute.xlu0 %2944
      %2946 = vrot.lane.b32.xlu0 %v2616, 48
      %v2947 = vpop.permute.xlu0 %2946
      %2948 = vrot.lane.b32.xlu0 %v2618, 48
      %v2949 = vpop.permute.xlu0 %2948
      %2950 = vrot.lane.b32.xlu0 %v2620, 48
      %v2951 = vpop.permute.xlu0 %2950
      %2952 = vrot.lane.b32.xlu0 %v2622, 48
      %v2953 = vpop.permute.xlu0 %2952
      %2954 = vrot.lane.b32.xlu0 %v2624, 48
      %v2955 = vpop.permute.xlu0 %2954
      %2956 = vrot.lane.b32.xlu0 %v2626, 48
      %v2957 = vpop.permute.xlu0 %2956
      %2958 = vrot.lane.b32.xlu0 %v2628, 48
      %v2959 = vpop.permute.xlu0 %2958
      %2960 = vrot.lane.b32.xlu0 %v2630, 48
      %v2961 = vpop.permute.xlu0 %2960
      %2962 = vrot.lane.b32.xlu0 %v2632, 48
      %v2963 = vpop.permute.xlu0 %2962
      %2964 = vrot.lane.b32.xlu0 %v2634, 48
      %v2965 = vpop.permute.xlu0 %2964
      %2966 = vrot.lane.b32.xlu0 %v2636, 48
      %v2967 = vpop.permute.xlu0 %2966
      %2968 = vrot.lane.b32.xlu0 %v2638, 48
      %v2969 = vpop.permute.xlu0 %2968
      %2987 = vst.msk [vmem:[#allocation9] sm:$0xff] %vm2045, %v2937
      %2988 = vst.msk [vmem:[#allocation9 + $0x10] sm:$0xff] %vm2045, %v2939
      %2989 = vst.msk [vmem:[#allocation9 + $0x20] sm:$0xff] %vm2045, %v2941
      %2990 = vst.msk [vmem:[#allocation9 + $0x30] sm:$0xff] %vm2045, %v2943
      %2991 = vst.msk [vmem:[#allocation9 + $0x40] sm:$0xff] %vm2045, %v2945
      %2992 = vst.msk [vmem:[#allocation9 + $0x50] sm:$0xff] %vm2045, %v2947
      %2993 = vst.msk [vmem:[#allocation9 + $0x60] sm:$0xff] %vm2045, %v2949
      %2994 = vst.msk [vmem:[#allocation9 + $0x70] sm:$0xff] %vm2045, %v2951
      %2995 = vst.msk [vmem:[#allocation9 + $0x80] sm:$0xff] %vm2045, %v2953
      %2996 = vst.msk [vmem:[#allocation9 + $0x90] sm:$0xff] %vm2045, %v2955
      %2997 = vst.msk [vmem:[#allocation9 + $0xa0] sm:$0xff] %vm2045, %v2957
      %2998 = vst.msk [vmem:[#allocation9 + $0xb0] sm:$0xff] %vm2045, %v2959
      %2999 = vst.msk [vmem:[#allocation9 + $0xc0] sm:$0xff] %vm2045, %v2961
      %3000 = vst.msk [vmem:[#allocation9 + $0xd0] sm:$0xff] %vm2045, %v2963
      %3001 = vst.msk [vmem:[#allocation9 + $0xe0] sm:$0xff] %vm2045, %v2965
      %3002 = vst.msk [vmem:[#allocation9 + $0xf0] sm:$0xff] %vm2045, %v2967
      %3003 = vst.msk [vmem:[#allocation9 + $0x100] sm:$0xff] %vm2045, %v2969
      %v3005 = vrot.slane %v2638, 1
      %v3006 = vrot.slane %v2639, 1
      %v3007 = vsel %vm544, %v3005, %v3006
      %3008 = vrot.lane.b32.xlu0 %v2702, 64
      %v3009 = vpop.permute.xlu0 %3008
      %3010 = vrot.lane.b32.xlu0 %v2705, 64
      %v3011 = vpop.permute.xlu0 %3010
      %3012 = vrot.lane.b32.xlu0 %v2708, 64
      %v3013 = vpop.permute.xlu0 %3012
      %3014 = vrot.lane.b32.xlu0 %v2711, 64
      %v3015 = vpop.permute.xlu0 %3014
      %3016 = vrot.lane.b32.xlu0 %v2714, 64
      %v3017 = vpop.permute.xlu0 %3016
      %3018 = vrot.lane.b32.xlu0 %v2717, 64
      %v3019 = vpop.permute.xlu0 %3018
      %3020 = vrot.lane.b32.xlu0 %v2720, 64
      %v3021 = vpop.permute.xlu0 %3020
      %3022 = vrot.lane.b32.xlu0 %v2723, 64
      %v3023 = vpop.permute.xlu0 %3022
      %3024 = vrot.lane.b32.xlu0 %v2726, 64
      %v3025 = vpop.permute.xlu0 %3024
      %3026 = vrot.lane.b32.xlu0 %v2729, 64
      %v3027 = vpop.permute.xlu0 %3026
      %3028 = vrot.lane.b32.xlu0 %v2732, 64
      %v3029 = vpop.permute.xlu0 %3028
      %3030 = vrot.lane.b32.xlu0 %v2735, 64
      %v3031 = vpop.permute.xlu0 %3030
      %3032 = vrot.lane.b32.xlu0 %v2738, 64
      %v3033 = vpop.permute.xlu0 %3032
      %3034 = vrot.lane.b32.xlu0 %v2741, 64
      %v3035 = vpop.permute.xlu0 %3034
      %3036 = vrot.lane.b32.xlu0 %v2744, 64
      %v3037 = vpop.permute.xlu0 %3036
      %3038 = vrot.lane.b32.xlu0 %v2747, 64
      %v3039 = vpop.permute.xlu0 %3038
      %3040 = vrot.lane.b32.xlu0 %v3007, 64
      %v3041 = vpop.permute.xlu0 %3040
      %3059 = vst.msk [vmem:[#allocation9] sm:$0xff] %vm2082, %v3009
      %3060 = vst.msk [vmem:[#allocation9 + $0x10] sm:$0xff] %vm2082, %v3011
      %3061 = vst.msk [vmem:[#allocation9 + $0x20] sm:$0xff] %vm2082, %v3013
      %3062 = vst.msk [vmem:[#allocation9 + $0x30] sm:$0xff] %vm2082, %v3015
      %3063 = vst.msk [vmem:[#allocation9 + $0x40] sm:$0xff] %vm2082, %v3017
      %3064 = vst.msk [vmem:[#allocation9 + $0x50] sm:$0xff] %vm2082, %v3019
      %3065 = vst.msk [vmem:[#allocation9 + $0x60] sm:$0xff] %vm2082, %v3021
      %3066 = vst.msk [vmem:[#allocation9 + $0x70] sm:$0xff] %vm2082, %v3023
      %3067 = vst.msk [vmem:[#allocation9 + $0x80] sm:$0xff] %vm2082, %v3025
      %3068 = vst.msk [vmem:[#allocation9 + $0x90] sm:$0xff] %vm2082, %v3027
      %3069 = vst.msk [vmem:[#allocation9 + $0xa0] sm:$0xff] %vm2082, %v3029
      %3070 = vst.msk [vmem:[#allocation9 + $0xb0] sm:$0xff] %vm2082, %v3031
      %3071 = vst.msk [vmem:[#allocation9 + $0xc0] sm:$0xff] %vm2082, %v3033
      %3072 = vst.msk [vmem:[#allocation9 + $0xd0] sm:$0xff] %vm2082, %v3035
      %3073 = vst.msk [vmem:[#allocation9 + $0xe0] sm:$0xff] %vm2082, %v3037
      %3074 = vst.msk [vmem:[#allocation9 + $0xf0] sm:$0xff] %vm2082, %v3039
      %3075 = vst.msk [vmem:[#allocation9 + $0x100] sm:$0xff] %vm2082, %v3041
      %v3076 = vrot.slane %v2638, 2
      %v3077 = vrot.slane %v2639, 2
      %v3078 = vsel %vm602, %v3076, %v3077
      %3079 = vrot.lane.b32.xlu0 %v2821, 80
      %v3080 = vpop.permute.xlu0 %3079
      %3081 = vrot.lane.b32.xlu0 %v2824, 80
      %v3082 = vpop.permute.xlu0 %3081
      %3083 = vrot.lane.b32.xlu0 %v2827, 80
      %v3084 = vpop.permute.xlu0 %3083
      %3085 = vrot.lane.b32.xlu0 %v2830, 80
      %v3086 = vpop.permute.xlu0 %3085
      %3087 = vrot.lane.b32.xlu0 %v2833, 80
      %v3088 = vpop.permute.xlu0 %3087
      %3089 = vrot.lane.b32.xlu0 %v2836, 80
      %v3090 = vpop.permute.xlu0 %3089
      %3091 = vrot.lane.b32.xlu0 %v2839, 80
      %v3092 = vpop.permute.xlu0 %3091
      %3093 = vrot.lane.b32.xlu0 %v2842, 80
      %v3094 = vpop.permute.xlu0 %3093
      %3095 = vrot.lane.b32.xlu0 %v2845, 80
      %v3096 = vpop.permute.xlu0 %3095
      %3097 = vrot.lane.b32.xlu0 %v2848, 80
      %v3098 = vpop.permute.xlu0 %3097
      %3099 = vrot.lane.b32.xlu0 %v2851, 80
      %v3100 = vpop.permute.xlu0 %3099
      %3101 = vrot.lane.b32.xlu0 %v2854, 80
      %v3102 = vpop.permute.xlu0 %3101
      %3103 = vrot.lane.b32.xlu0 %v2857, 80
      %v3104 = vpop.permute.xlu0 %3103
      %3105 = vrot.lane.b32.xlu0 %v2860, 80
      %v3106 = vpop.permute.xlu0 %3105
      %3107 = vrot.lane.b32.xlu0 %v2863, 80
      %v3108 = vpop.permute.xlu0 %3107
      %3109 = vrot.lane.b32.xlu0 %v2866, 80
      %v3110 = vpop.permute.xlu0 %3109
      %3111 = vrot.lane.b32.xlu0 %v3078, 80
      %v3112 = vpop.permute.xlu0 %3111
      %3130 = vst.msk [vmem:[#allocation9] sm:$0xff] %vm2118, %v3080
      %3131 = vst.msk [vmem:[#allocation9 + $0x10] sm:$0xff] %vm2118, %v3082
      %3132 = vst.msk [vmem:[#allocation9 + $0x20] sm:$0xff] %vm2118, %v3084
      %3133 = vst.msk [vmem:[#allocation9 + $0x30] sm:$0xff] %vm2118, %v3086
      %3134 = vst.msk [vmem:[#allocation9 + $0x40] sm:$0xff] %vm2118, %v3088
      %3135 = vst.msk [vmem:[#allocation9 + $0x50] sm:$0xff] %vm2118, %v3090
      %3136 = vst.msk [vmem:[#allocation9 + $0x60] sm:$0xff] %vm2118, %v3092
      %3137 = vst.msk [vmem:[#allocation9 + $0x70] sm:$0xff] %vm2118, %v3094
      %3138 = vst.msk [vmem:[#allocation9 + $0x80] sm:$0xff] %vm2118, %v3096
      %3139 = vst.msk [vmem:[#allocation9 + $0x90] sm:$0xff] %vm2118, %v3098
      %3140 = vst.msk [vmem:[#allocation9 + $0xa0] sm:$0xff] %vm2118, %v3100
      %3141 = vst.msk [vmem:[#allocation9 + $0xb0] sm:$0xff] %vm2118, %v3102
      %3142 = vst.msk [vmem:[#allocation9 + $0xc0] sm:$0xff] %vm2118, %v3104
      %3143 = vst.msk [vmem:[#allocation9 + $0xd0] sm:$0xff] %vm2118, %v3106
      %3144 = vst.msk [vmem:[#allocation9 + $0xe0] sm:$0xff] %vm2118, %v3108
      %3145 = vst.msk [vmem:[#allocation9 + $0xf0] sm:$0xff] %vm2118, %v3110
      %3146 = vst.msk [vmem:[#allocation9 + $0x100] sm:$0xff] %vm2118, %v3112
      %3148 = vrot.lane.b32.xlu0 %v2608, 96
      %v3149 = vpop.permute.xlu0 %3148
      %3150 = vrot.lane.b32.xlu0 %v2610, 96
      %v3151 = vpop.permute.xlu0 %3150
      %3152 = vrot.lane.b32.xlu0 %v2612, 96
      %v3153 = vpop.permute.xlu0 %3152
      %3154 = vrot.lane.b32.xlu0 %v2614, 96
      %v3155 = vpop.permute.xlu0 %3154
      %3156 = vrot.lane.b32.xlu0 %v2616, 96
      %v3157 = vpop.permute.xlu0 %3156
      %3158 = vrot.lane.b32.xlu0 %v2618, 96
      %v3159 = vpop.permute.xlu0 %3158
      %3160 = vrot.lane.b32.xlu0 %v2620, 96
      %v3161 = vpop.permute.xlu0 %3160
      %3162 = vrot.lane.b32.xlu0 %v2622, 96
      %v3163 = vpop.permute.xlu0 %3162
      %3164 = vrot.lane.b32.xlu0 %v2624, 96
      %v3165 = vpop.permute.xlu0 %3164
      %3166 = vrot.lane.b32.xlu0 %v2626, 96
      %v3167 = vpop.permute.xlu0 %3166
      %3168 = vrot.lane.b32.xlu0 %v2628, 96
      %v3169 = vpop.permute.xlu0 %3168
      %3170 = vrot.lane.b32.xlu0 %v2630, 96
      %v3171 = vpop.permute.xlu0 %3170
      %3172 = vrot.lane.b32.xlu0 %v2632, 96
      %v3173 = vpop.permute.xlu0 %3172
      %3174 = vrot.lane.b32.xlu0 %v2634, 96
      %v3175 = vpop.permute.xlu0 %3174
      %3176 = vrot.lane.b32.xlu0 %v2636, 96
      %v3177 = vpop.permute.xlu0 %3176
      %3178 = vrot.lane.b32.xlu0 %v2638, 96
      %v3179 = vpop.permute.xlu0 %3178
      %3180 = vrot.lane.b32.xlu0 %v2640, 96
      %v3181 = vpop.permute.xlu0 %3180
      %3199 = vst.msk [vmem:[#allocation9] sm:$0xff] %vm2152, %v3149
      %3200 = vst.msk [vmem:[#allocation9 + $0x10] sm:$0xff] %vm2152, %v3151
      %3201 = vst.msk [vmem:[#allocation9 + $0x20] sm:$0xff] %vm2152, %v3153
      %3202 = vst.msk [vmem:[#allocation9 + $0x30] sm:$0xff] %vm2152, %v3155
      %3203 = vst.msk [vmem:[#allocation9 + $0x40] sm:$0xff] %vm2152, %v3157
      %3204 = vst.msk [vmem:[#allocation9 + $0x50] sm:$0xff] %vm2152, %v3159
      %3205 = vst.msk [vmem:[#allocation9 + $0x60] sm:$0xff] %vm2152, %v3161
      %3206 = vst.msk [vmem:[#allocation9 + $0x70] sm:$0xff] %vm2152, %v3163
      %3207 = vst.msk [vmem:[#allocation9 + $0x80] sm:$0xff] %vm2152, %v3165
      %3208 = vst.msk [vmem:[#allocation9 + $0x90] sm:$0xff] %vm2152, %v3167
      %3209 = vst.msk [vmem:[#allocation9 + $0xa0] sm:$0xff] %vm2152, %v3169
      %3210 = vst.msk [vmem:[#allocation9 + $0xb0] sm:$0xff] %vm2152, %v3171
      %3211 = vst.msk [vmem:[#allocation9 + $0xc0] sm:$0xff] %vm2152, %v3173
      %3212 = vst.msk [vmem:[#allocation9 + $0xd0] sm:$0xff] %vm2152, %v3175
      %3213 = vst.msk [vmem:[#allocation9 + $0xe0] sm:$0xff] %vm2152, %v3177
      %3214 = vst.msk [vmem:[#allocation9 + $0xf0] sm:$0xff] %vm2152, %v3179
      %3215 = vst.msk [vmem:[#allocation9 + $0x100] sm:$0xff] %vm2152, %v3181
      %v3217 = vrot.slane %v2640, 1
      %v3218 = vrot.slane %v2641, 1
      %v3219 = vsel %vm544, %v3217, %v3218
      %3220 = vrot.lane.b32.xlu0 %v2705, 112
      %v3221 = vpop.permute.xlu0 %3220
      %3222 = vrot.lane.b32.xlu0 %v2708, 112
      %v3223 = vpop.permute.xlu0 %3222
      %3224 = vrot.lane.b32.xlu0 %v2711, 112
      %v3225 = vpop.permute.xlu0 %3224
      %3226 = vrot.lane.b32.xlu0 %v2714, 112
      %v3227 = vpop.permute.xlu0 %3226
      %3228 = vrot.lane.b32.xlu0 %v2717, 112
      %v3229 = vpop.permute.xlu0 %3228
      %3230 = vrot.lane.b32.xlu0 %v2720, 112
      %v3231 = vpop.permute.xlu0 %3230
      %3232 = vrot.lane.b32.xlu0 %v2723, 112
      %v3233 = vpop.permute.xlu0 %3232
      %3234 = vrot.lane.b32.xlu0 %v2726, 112
      %v3235 = vpop.permute.xlu0 %3234
      %3236 = vrot.lane.b32.xlu0 %v2729, 112
      %v3237 = vpop.permute.xlu0 %3236
      %3238 = vrot.lane.b32.xlu0 %v2732, 112
      %v3239 = vpop.permute.xlu0 %3238
      %3240 = vrot.lane.b32.xlu0 %v2735, 112
      %v3241 = vpop.permute.xlu0 %3240
      %3242 = vrot.lane.b32.xlu0 %v2738, 112
      %v3243 = vpop.permute.xlu0 %3242
      %3244 = vrot.lane.b32.xlu0 %v2741, 112
      %v3245 = vpop.permute.xlu0 %3244
      %3246 = vrot.lane.b32.xlu0 %v2744, 112
      %v3247 = vpop.permute.xlu0 %3246
      %3248 = vrot.lane.b32.xlu0 %v2747, 112
      %v3249 = vpop.permute.xlu0 %3248
      %3250 = vrot.lane.b32.xlu0 %v3007, 112
      %v3251 = vpop.permute.xlu0 %3250
      %3252 = vrot.lane.b32.xlu0 %v3219, 112
      %v3253 = vpop.permute.xlu0 %3252
      %3271 = vst.msk [vmem:[#allocation9] sm:$0xff] %vm2189, %v3221
      %3272 = vst.msk [vmem:[#allocation9 + $0x10] sm:$0xff] %vm2189, %v3223
      %3273 = vst.msk [vmem:[#allocation9 + $0x20] sm:$0xff] %vm2189, %v3225
      %3274 = vst.msk [vmem:[#allocation9 + $0x30] sm:$0xff] %vm2189, %v3227
      %3275 = vst.msk [vmem:[#allocation9 + $0x40] sm:$0xff] %vm2189, %v3229
      %3276 = vst.msk [vmem:[#allocation9 + $0x50] sm:$0xff] %vm2189, %v3231
      %3277 = vst.msk [vmem:[#allocation9 + $0x60] sm:$0xff] %vm2189, %v3233
      %3278 = vst.msk [vmem:[#allocation9 + $0x70] sm:$0xff] %vm2189, %v3235
      %3279 = vst.msk [vmem:[#allocation9 + $0x80] sm:$0xff] %vm2189, %v3237
      %3280 = vst.msk [vmem:[#allocation9 + $0x90] sm:$0xff] %vm2189, %v3239
      %3281 = vst.msk [vmem:[#allocation9 + $0xa0] sm:$0xff] %vm2189, %v3241
      %3282 = vst.msk [vmem:[#allocation9 + $0xb0] sm:$0xff] %vm2189, %v3243
      %3283 = vst.msk [vmem:[#allocation9 + $0xc0] sm:$0xff] %vm2189, %v3245
      %3284 = vst.msk [vmem:[#allocation9 + $0xd0] sm:$0xff] %vm2189, %v3247
      %3285 = vst.msk [vmem:[#allocation9 + $0xe0] sm:$0xff] %vm2189, %v3249
      %3286 = vst.msk [vmem:[#allocation9 + $0xf0] sm:$0xff] %vm2189, %v3251
      %3287 = vst.msk [vmem:[#allocation9 + $0x100] sm:$0xff] %vm2189, %v3253
      %v3288 = vrot.slane %v2640, 2
      %v3289 = vrot.slane %v2641, 2
      %v3290 = vsel %vm602, %v3288, %v3289
      %3308 = vst.msk [vmem:[#allocation9 + $0x8] sm:$0xff] %vm1828, %v2824
      %3309 = vst.msk [vmem:[#allocation9 + $0x18] sm:$0xff] %vm1828, %v2827
      %3310 = vst.msk [vmem:[#allocation9 + $0x28] sm:$0xff] %vm1828, %v2830
      %3311 = vst.msk [vmem:[#allocation9 + $0x38] sm:$0xff] %vm1828, %v2833
      %3312 = vst.msk [vmem:[#allocation9 + $0x48] sm:$0xff] %vm1828, %v2836
      %3313 = vst.msk [vmem:[#allocation9 + $0x58] sm:$0xff] %vm1828, %v2839
      %3314 = vst.msk [vmem:[#allocation9 + $0x68] sm:$0xff] %vm1828, %v2842
      %3315 = vst.msk [vmem:[#allocation9 + $0x78] sm:$0xff] %vm1828, %v2845
      %3316 = vst.msk [vmem:[#allocation9 + $0x88] sm:$0xff] %vm1828, %v2848
      %3317 = vst.msk [vmem:[#allocation9 + $0x98] sm:$0xff] %vm1828, %v2851
      %3318 = vst.msk [vmem:[#allocation9 + $0xa8] sm:$0xff] %vm1828, %v2854
      %3319 = vst.msk [vmem:[#allocation9 + $0xb8] sm:$0xff] %vm1828, %v2857
      %3320 = vst.msk [vmem:[#allocation9 + $0xc8] sm:$0xff] %vm1828, %v2860
      %3321 = vst.msk [vmem:[#allocation9 + $0xd8] sm:$0xff] %vm1828, %v2863
      %3322 = vst.msk [vmem:[#allocation9 + $0xe8] sm:$0xff] %vm1828, %v2866
      %3323 = vst.msk [vmem:[#allocation9 + $0xf8] sm:$0xff] %vm1828, %v3078
      %3324 = vst.msk [vmem:[#allocation9 + $0x108] sm:$0xff] %vm1828, %v3290
      %3326 = vrot.lane.b32.xlu0 %v2610, 16
      %v3327 = vpop.permute.xlu0 %3326
      %3328 = vrot.lane.b32.xlu0 %v2612, 16
      %v3329 = vpop.permute.xlu0 %3328
      %3330 = vrot.lane.b32.xlu0 %v2614, 16
      %v3331 = vpop.permute.xlu0 %3330
      %3332 = vrot.lane.b32.xlu0 %v2616, 16
      %v3333 = vpop.permute.xlu0 %3332
      %3334 = vrot.lane.b32.xlu0 %v2618, 16
      %v3335 = vpop.permute.xlu0 %3334
      %3336 = vrot.lane.b32.xlu0 %v2620, 16
      %v3337 = vpop.permute.xlu0 %3336
      %3338 = vrot.lane.b32.xlu0 %v2622, 16
      %v3339 = vpop.permute.xlu0 %3338
      %3340 = vrot.lane.b32.xlu0 %v2624, 16
      %v3341 = vpop.permute.xlu0 %3340
      %3342 = vrot.lane.b32.xlu0 %v2626, 16
      %v3343 = vpop.permute.xlu0 %3342
      %3344 = vrot.lane.b32.xlu0 %v2628, 16
      %v3345 = vpop.permute.xlu0 %3344
      %3346 = vrot.lane.b32.xlu0 %v2630, 16
      %v3347 = vpop.permute.xlu0 %3346
      %3348 = vrot.lane.b32.xlu0 %v2632, 16
      %v3349 = vpop.permute.xlu0 %3348
      %3350 = vrot.lane.b32.xlu0 %v2634, 16
      %v3351 = vpop.permute.xlu0 %3350
      %3352 = vrot.lane.b32.xlu0 %v2636, 16
      %v3353 = vpop.permute.xlu0 %3352
      %3354 = vrot.lane.b32.xlu0 %v2638, 16
      %v3355 = vpop.permute.xlu0 %3354
      %3356 = vrot.lane.b32.xlu0 %v2640, 16
      %v3357 = vpop.permute.xlu0 %3356
      %3358 = vrot.lane.b32.xlu0 %v2642, 16
      %v3359 = vpop.permute.xlu0 %3358
      %3377 = vst.msk [vmem:[#allocation9 + $0x8] sm:$0xff] %vm1954, %v3327
      %3378 = vst.msk [vmem:[#allocation9 + $0x18] sm:$0xff] %vm1954, %v3329
      %3379 = vst.msk [vmem:[#allocation9 + $0x28] sm:$0xff] %vm1954, %v3331
      %3380 = vst.msk [vmem:[#allocation9 + $0x38] sm:$0xff] %vm1954, %v3333
      %3381 = vst.msk [vmem:[#allocation9 + $0x48] sm:$0xff] %vm1954, %v3335
      %3382 = vst.msk [vmem:[#allocation9 + $0x58] sm:$0xff] %vm1954, %v3337
      %3383 = vst.msk [vmem:[#allocation9 + $0x68] sm:$0xff] %vm1954, %v3339
      %3384 = vst.msk [vmem:[#allocation9 + $0x78] sm:$0xff] %vm1954, %v3341
      %3385 = vst.msk [vmem:[#allocation9 + $0x88] sm:$0xff] %vm1954, %v3343
      %3386 = vst.msk [vmem:[#allocation9 + $0x98] sm:$0xff] %vm1954, %v3345
      %3387 = vst.msk [vmem:[#allocation9 + $0xa8] sm:$0xff] %vm1954, %v3347
      %3388 = vst.msk [vmem:[#allocation9 + $0xb8] sm:$0xff] %vm1954, %v3349
      %3389 = vst.msk [vmem:[#allocation9 + $0xc8] sm:$0xff] %vm1954, %v3351
      %3390 = vst.msk [vmem:[#allocation9 + $0xd8] sm:$0xff] %vm1954, %v3353
      %3391 = vst.msk [vmem:[#allocation9 + $0xe8] sm:$0xff] %vm1954, %v3355
      %3392 = vst.msk [vmem:[#allocation9 + $0xf8] sm:$0xff] %vm1954, %v3357
      %3393 = vst.msk [vmem:[#allocation9 + $0x108] sm:$0xff] %vm1954, %v3359
      %v3395 = vrot.slane %v2642, 1
      %v3396 = vrot.slane %v2643, 1
      %v3397 = vsel %vm544, %v3395, %v3396
      %3398 = vrot.lane.b32.xlu0 %v2708, 32
      %v3399 = vpop.permute.xlu0 %3398
      %3400 = vrot.lane.b32.xlu0 %v2711, 32
      %v3401 = vpop.permute.xlu0 %3400
      %3402 = vrot.lane.b32.xlu0 %v2714, 32
      %v3403 = vpop.permute.xlu0 %3402
      %3404 = vrot.lane.b32.xlu0 %v2717, 32
      %v3405 = vpop.permute.xlu0 %3404
      %3406 = vrot.lane.b32.xlu0 %v2720, 32
      %v3407 = vpop.permute.xlu0 %3406
      %3408 = vrot.lane.b32.xlu0 %v2723, 32
      %v3409 = vpop.permute.xlu0 %3408
      %3410 = vrot.lane.b32.xlu0 %v2726, 32
      %v3411 = vpop.permute.xlu0 %3410
      %3412 = vrot.lane.b32.xlu0 %v2729, 32
      %v3413 = vpop.permute.xlu0 %3412
      %3414 = vrot.lane.b32.xlu0 %v2732, 32
      %v3415 = vpop.permute.xlu0 %3414
      %3416 = vrot.lane.b32.xlu0 %v2735, 32
      %v3417 = vpop.permute.xlu0 %3416
      %3418 = vrot.lane.b32.xlu0 %v2738, 32
      %v3419 = vpop.permute.xlu0 %3418
      %3420 = vrot.lane.b32.xlu0 %v2741, 32
      %v3421 = vpop.permute.xlu0 %3420
      %3422 = vrot.lane.b32.xlu0 %v2744, 32
      %v3423 = vpop.permute.xlu0 %3422
      %3424 = vrot.lane.b32.xlu0 %v2747, 32
      %v3425 = vpop.permute.xlu0 %3424
      %3426 = vrot.lane.b32.xlu0 %v3007, 32
      %v3427 = vpop.permute.xlu0 %3426
      %3428 = vrot.lane.b32.xlu0 %v3219, 32
      %v3429 = vpop.permute.xlu0 %3428
      %3430 = vrot.lane.b32.xlu0 %v3397, 32
      %v3431 = vpop.permute.xlu0 %3430
      %3449 = vst.msk [vmem:[#allocation9 + $0x8] sm:$0xff] %vm2011, %v3399
      %3450 = vst.msk [vmem:[#allocation9 + $0x18] sm:$0xff] %vm2011, %v3401
      %3451 = vst.msk [vmem:[#allocation9 + $0x28] sm:$0xff] %vm2011, %v3403
      %3452 = vst.msk [vmem:[#allocation9 + $0x38] sm:$0xff] %vm2011, %v3405
      %3453 = vst.msk [vmem:[#allocation9 + $0x48] sm:$0xff] %vm2011, %v3407
      %3454 = vst.msk [vmem:[#allocation9 + $0x58] sm:$0xff] %vm2011, %v3409
      %3455 = vst.msk [vmem:[#allocation9 + $0x68] sm:$0xff] %vm2011, %v3411
      %3456 = vst.msk [vmem:[#allocation9 + $0x78] sm:$0xff] %vm2011, %v3413
      %3457 = vst.msk [vmem:[#allocation9 + $0x88] sm:$0xff] %vm2011, %v3415
      %3458 = vst.msk [vmem:[#allocation9 + $0x98] sm:$0xff] %vm2011, %v3417
      %3459 = vst.msk [vmem:[#allocation9 + $0xa8] sm:$0xff] %vm2011, %v3419
      %3460 = vst.msk [vmem:[#allocation9 + $0xb8] sm:$0xff] %vm2011, %v3421
      %3461 = vst.msk [vmem:[#allocation9 + $0xc8] sm:$0xff] %vm2011, %v3423
      %3462 = vst.msk [vmem:[#allocation9 + $0xd8] sm:$0xff] %vm2011, %v3425
      %3463 = vst.msk [vmem:[#allocation9 + $0xe8] sm:$0xff] %vm2011, %v3427
      %3464 = vst.msk [vmem:[#allocation9 + $0xf8] sm:$0xff] %vm2011, %v3429
      %3465 = vst.msk [vmem:[#allocation9 + $0x108] sm:$0xff] %vm2011, %v3431
      %v3466 = vrot.slane %v2642, 2
      %v3467 = vrot.slane %v2643, 2
      %v3468 = vsel %vm602, %v3466, %v3467
      %3469 = vrot.lane.b32.xlu0 %v2827, 48
      %v3470 = vpop.permute.xlu0 %3469
      %3471 = vrot.lane.b32.xlu0 %v2830, 48
      %v3472 = vpop.permute.xlu0 %3471
      %3473 = vrot.lane.b32.xlu0 %v2833, 48
      %v3474 = vpop.permute.xlu0 %3473
      %3475 = vrot.lane.b32.xlu0 %v2836, 48
      %v3476 = vpop.permute.xlu0 %3475
      %3477 = vrot.lane.b32.xlu0 %v2839, 48
      %v3478 = vpop.permute.xlu0 %3477
      %3479 = vrot.lane.b32.xlu0 %v2842, 48
      %v3480 = vpop.permute.xlu0 %3479
      %3481 = vrot.lane.b32.xlu0 %v2845, 48
      %v3482 = vpop.permute.xlu0 %3481
      %3483 = vrot.lane.b32.xlu0 %v2848, 48
      %v3484 = vpop.permute.xlu0 %3483
      %3485 = vrot.lane.b32.xlu0 %v2851, 48
      %v3486 = vpop.permute.xlu0 %3485
      %3487 = vrot.lane.b32.xlu0 %v2854, 48
      %v3488 = vpop.permute.xlu0 %3487
      %3489 = vrot.lane.b32.xlu0 %v2857, 48
      %v3490 = vpop.permute.xlu0 %3489
      %3491 = vrot.lane.b32.xlu0 %v2860, 48
      %v3492 = vpop.permute.xlu0 %3491
      %3493 = vrot.lane.b32.xlu0 %v2863, 48
      %v3494 = vpop.permute.xlu0 %3493
      %3495 = vrot.lane.b32.xlu0 %v2866, 48
      %v3496 = vpop.permute.xlu0 %3495
      %3497 = vrot.lane.b32.xlu0 %v3078, 48
      %v3498 = vpop.permute.xlu0 %3497
      %3499 = vrot.lane.b32.xlu0 %v3290, 48
      %v3500 = vpop.permute.xlu0 %3499
      %3501 = vrot.lane.b32.xlu0 %v3468, 48
      %v3502 = vpop.permute.xlu0 %3501
      %3520 = vst.msk [vmem:[#allocation9 + $0x8] sm:$0xff] %vm2045, %v3470
      %3521 = vst.msk [vmem:[#allocation9 + $0x18] sm:$0xff] %vm2045, %v3472
      %3522 = vst.msk [vmem:[#allocation9 + $0x28] sm:$0xff] %vm2045, %v3474
      %3523 = vst.msk [vmem:[#allocation9 + $0x38] sm:$0xff] %vm2045, %v3476
      %3524 = vst.msk [vmem:[#allocation9 + $0x48] sm:$0xff] %vm2045, %v3478
      %3525 = vst.msk [vmem:[#allocation9 + $0x58] sm:$0xff] %vm2045, %v3480
      %3526 = vst.msk [vmem:[#allocation9 + $0x68] sm:$0xff] %vm2045, %v3482
      %3527 = vst.msk [vmem:[#allocation9 + $0x78] sm:$0xff] %vm2045, %v3484
      %3528 = vst.msk [vmem:[#allocation9 + $0x88] sm:$0xff] %vm2045, %v3486
      %3529 = vst.msk [vmem:[#allocation9 + $0x98] sm:$0xff] %vm2045, %v3488
      %3530 = vst.msk [vmem:[#allocation9 + $0xa8] sm:$0xff] %vm2045, %v3490
      %3531 = vst.msk [vmem:[#allocation9 + $0xb8] sm:$0xff] %vm2045, %v3492
      %3532 = vst.msk [vmem:[#allocation9 + $0xc8] sm:$0xff] %vm2045, %v3494
      %3533 = vst.msk [vmem:[#allocation9 + $0xd8] sm:$0xff] %vm2045, %v3496
      %3534 = vst.msk [vmem:[#allocation9 + $0xe8] sm:$0xff] %vm2045, %v3498
      %3535 = vst.msk [vmem:[#allocation9 + $0xf8] sm:$0xff] %vm2045, %v3500
      %3536 = vst.msk [vmem:[#allocation9 + $0x108] sm:$0xff] %vm2045, %v3502
      %3538 = vrot.lane.b32.xlu0 %v2612, 64
      %v3539 = vpop.permute.xlu0 %3538
      %3540 = vrot.lane.b32.xlu0 %v2614, 64
      %v3541 = vpop.permute.xlu0 %3540
      %3542 = vrot.lane.b32.xlu0 %v2616, 64
      %v3543 = vpop.permute.xlu0 %3542
      %3544 = vrot.lane.b32.xlu0 %v2618, 64
      %v3545 = vpop.permute.xlu0 %3544
      %3546 = vrot.lane.b32.xlu0 %v2620, 64
      %v3547 = vpop.permute.xlu0 %3546
      %3548 = vrot.lane.b32.xlu0 %v2622, 64
      %v3549 = vpop.permute.xlu0 %3548
      %3550 = vrot.lane.b32.xlu0 %v2624, 64
      %v3551 = vpop.permute.xlu0 %3550
      %3552 = vrot.lane.b32.xlu0 %v2626, 64
      %v3553 = vpop.permute.xlu0 %3552
      %3554 = vrot.lane.b32.xlu0 %v2628, 64
      %v3555 = vpop.permute.xlu0 %3554
      %3556 = vrot.lane.b32.xlu0 %v2630, 64
      %v3557 = vpop.permute.xlu0 %3556
      %3558 = vrot.lane.b32.xlu0 %v2632, 64
      %v3559 = vpop.permute.xlu0 %3558
      %3560 = vrot.lane.b32.xlu0 %v2634, 64
      %v3561 = vpop.permute.xlu0 %3560
      %3562 = vrot.lane.b32.xlu0 %v2636, 64
      %v3563 = vpop.permute.xlu0 %3562
      %3564 = vrot.lane.b32.xlu0 %v2638, 64
      %v3565 = vpop.permute.xlu0 %3564
      %3566 = vrot.lane.b32.xlu0 %v2640, 64
      %v3567 = vpop.permute.xlu0 %3566
      %3568 = vrot.lane.b32.xlu0 %v2642, 64
      %v3569 = vpop.permute.xlu0 %3568
      %3570 = vrot.lane.b32.xlu0 %v2644, 64
      %v3571 = vpop.permute.xlu0 %3570
      %3589 = vst.msk [vmem:[#allocation9 + $0x8] sm:$0xff] %vm2082, %v3539
      %3590 = vst.msk [vmem:[#allocation9 + $0x18] sm:$0xff] %vm2082, %v3541
      %3591 = vst.msk [vmem:[#allocation9 + $0x28] sm:$0xff] %vm2082, %v3543
      %3592 = vst.msk [vmem:[#allocation9 + $0x38] sm:$0xff] %vm2082, %v3545
      %3593 = vst.msk [vmem:[#allocation9 + $0x48] sm:$0xff] %vm2082, %v3547
      %3594 = vst.msk [vmem:[#allocation9 + $0x58] sm:$0xff] %vm2082, %v3549
      %3595 = vst.msk [vmem:[#allocation9 + $0x68] sm:$0xff] %vm2082, %v3551
      %3596 = vst.msk [vmem:[#allocation9 + $0x78] sm:$0xff] %vm2082, %v3553
      %3597 = vst.msk [vmem:[#allocation9 + $0x88] sm:$0xff] %vm2082, %v3555
      %3598 = vst.msk [vmem:[#allocation9 + $0x98] sm:$0xff] %vm2082, %v3557
      %3599 = vst.msk [vmem:[#allocation9 + $0xa8] sm:$0xff] %vm2082, %v3559
      %3600 = vst.msk [vmem:[#allocation9 + $0xb8] sm:$0xff] %vm2082, %v3561
      %3601 = vst.msk [vmem:[#allocation9 + $0xc8] sm:$0xff] %vm2082, %v3563
      %3602 = vst.msk [vmem:[#allocation9 + $0xd8] sm:$0xff] %vm2082, %v3565
      %3603 = vst.msk [vmem:[#allocation9 + $0xe8] sm:$0xff] %vm2082, %v3567
      %3604 = vst.msk [vmem:[#allocation9 + $0xf8] sm:$0xff] %vm2082, %v3569
      %3605 = vst.msk [vmem:[#allocation9 + $0x108] sm:$0xff] %vm2082, %v3571
      %v3607 = vrot.slane %v2644, 1
      %v3608 = vrot.slane %v2645, 1
      %v3609 = vsel %vm544, %v3607, %v3608
      %3610 = vrot.lane.b32.xlu0 %v2711, 80
      %v3611 = vpop.permute.xlu0 %3610
      %3612 = vrot.lane.b32.xlu0 %v2714, 80
      %v3613 = vpop.permute.xlu0 %3612
      %3614 = vrot.lane.b32.xlu0 %v2717, 80
      %v3615 = vpop.permute.xlu0 %3614
      %3616 = vrot.lane.b32.xlu0 %v2720, 80
      %v3617 = vpop.permute.xlu0 %3616
      %3618 = vrot.lane.b32.xlu0 %v2723, 80
      %v3619 = vpop.permute.xlu0 %3618
      %3620 = vrot.lane.b32.xlu0 %v2726, 80
      %v3621 = vpop.permute.xlu0 %3620
      %3622 = vrot.lane.b32.xlu0 %v2729, 80
      %v3623 = vpop.permute.xlu0 %3622
      %3624 = vrot.lane.b32.xlu0 %v2732, 80
      %v3625 = vpop.permute.xlu0 %3624
      %3626 = vrot.lane.b32.xlu0 %v2735, 80
      %v3627 = vpop.permute.xlu0 %3626
      %3628 = vrot.lane.b32.xlu0 %v2738, 80
      %v3629 = vpop.permute.xlu0 %3628
      %3630 = vrot.lane.b32.xlu0 %v2741, 80
      %v3631 = vpop.permute.xlu0 %3630
      %3632 = vrot.lane.b32.xlu0 %v2744, 80
      %v3633 = vpop.permute.xlu0 %3632
      %3634 = vrot.lane.b32.xlu0 %v2747, 80
      %v3635 = vpop.permute.xlu0 %3634
      %3636 = vrot.lane.b32.xlu0 %v3007, 80
      %v3637 = vpop.permute.xlu0 %3636
      %3638 = vrot.lane.b32.xlu0 %v3219, 80
      %v3639 = vpop.permute.xlu0 %3638
      %3640 = vrot.lane.b32.xlu0 %v3397, 80
      %v3641 = vpop.permute.xlu0 %3640
      %3642 = vrot.lane.b32.xlu0 %v3609, 80
      %v3643 = vpop.permute.xlu0 %3642
      %3661 = vst.msk [vmem:[#allocation9 + $0x8] sm:$0xff] %vm2118, %v3611
      %3662 = vst.msk [vmem:[#allocation9 + $0x18] sm:$0xff] %vm2118, %v3613
      %3663 = vst.msk [vmem:[#allocation9 + $0x28] sm:$0xff] %vm2118, %v3615
      %3664 = vst.msk [vmem:[#allocation9 + $0x38] sm:$0xff] %vm2118, %v3617
      %3665 = vst.msk [vmem:[#allocation9 + $0x48] sm:$0xff] %vm2118, %v3619
      %3666 = vst.msk [vmem:[#allocation9 + $0x58] sm:$0xff] %vm2118, %v3621
      %3667 = vst.msk [vmem:[#allocation9 + $0x68] sm:$0xff] %vm2118, %v3623
      %3668 = vst.msk [vmem:[#allocation9 + $0x78] sm:$0xff] %vm2118, %v3625
      %3669 = vst.msk [vmem:[#allocation9 + $0x88] sm:$0xff] %vm2118, %v3627
      %3670 = vst.msk [vmem:[#allocation9 + $0x98] sm:$0xff] %vm2118, %v3629
      %3671 = vst.msk [vmem:[#allocation9 + $0xa8] sm:$0xff] %vm2118, %v3631
      %3672 = vst.msk [vmem:[#allocation9 + $0xb8] sm:$0xff] %vm2118, %v3633
      %3673 = vst.msk [vmem:[#allocation9 + $0xc8] sm:$0xff] %vm2118, %v3635
      %3674 = vst.msk [vmem:[#allocation9 + $0xd8] sm:$0xff] %vm2118, %v3637
      %3675 = vst.msk [vmem:[#allocation9 + $0xe8] sm:$0xff] %vm2118, %v3639
      %3676 = vst.msk [vmem:[#allocation9 + $0xf8] sm:$0xff] %vm2118, %v3641
      %3677 = vst.msk [vmem:[#allocation9 + $0x108] sm:$0xff] %vm2118, %v3643
      %v3678 = vrot.slane %v2644, 2
      %v3679 = vrot.slane %v2645, 2
      %v3680 = vsel %vm602, %v3678, %v3679
      %3681 = vrot.lane.b32.xlu0 %v2830, 96
      %v3682 = vpop.permute.xlu0 %3681
      %3683 = vrot.lane.b32.xlu0 %v2833, 96
      %v3684 = vpop.permute.xlu0 %3683
      %3685 = vrot.lane.b32.xlu0 %v2836, 96
      %v3686 = vpop.permute.xlu0 %3685
      %3687 = vrot.lane.b32.xlu0 %v2839, 96
      %v3688 = vpop.permute.xlu0 %3687
      %3689 = vrot.lane.b32.xlu0 %v2842, 96
      %v3690 = vpop.permute.xlu0 %3689
      %3691 = vrot.lane.b32.xlu0 %v2845, 96
      %v3692 = vpop.permute.xlu0 %3691
      %3693 = vrot.lane.b32.xlu0 %v2848, 96
      %v3694 = vpop.permute.xlu0 %3693
      %3695 = vrot.lane.b32.xlu0 %v2851, 96
      %v3696 = vpop.permute.xlu0 %3695
      %3697 = vrot.lane.b32.xlu0 %v2854, 96
      %v3698 = vpop.permute.xlu0 %3697
      %3699 = vrot.lane.b32.xlu0 %v2857, 96
      %v3700 = vpop.permute.xlu0 %3699
      %3701 = vrot.lane.b32.xlu0 %v2860, 96
      %v3702 = vpop.permute.xlu0 %3701
      %3703 = vrot.lane.b32.xlu0 %v2863, 96
      %v3704 = vpop.permute.xlu0 %3703
      %3705 = vrot.lane.b32.xlu0 %v2866, 96
      %v3706 = vpop.permute.xlu0 %3705
      %3707 = vrot.lane.b32.xlu0 %v3078, 96
      %v3708 = vpop.permute.xlu0 %3707
      %3709 = vrot.lane.b32.xlu0 %v3290, 96
      %v3710 = vpop.permute.xlu0 %3709
      %3711 = vrot.lane.b32.xlu0 %v3468, 96
      %v3712 = vpop.permute.xlu0 %3711
      %3713 = vrot.lane.b32.xlu0 %v3680, 96
      %v3714 = vpop.permute.xlu0 %3713
      %3732 = vst.msk [vmem:[#allocation9 + $0x8] sm:$0xff] %vm2152, %v3682
      %3733 = vst.msk [vmem:[#allocation9 + $0x18] sm:$0xff] %vm2152, %v3684
      %3734 = vst.msk [vmem:[#allocation9 + $0x28] sm:$0xff] %vm2152, %v3686
      %3735 = vst.msk [vmem:[#allocation9 + $0x38] sm:$0xff] %vm2152, %v3688
      %3736 = vst.msk [vmem:[#allocation9 + $0x48] sm:$0xff] %vm2152, %v3690
      %3737 = vst.msk [vmem:[#allocation9 + $0x58] sm:$0xff] %vm2152, %v3692
      %3738 = vst.msk [vmem:[#allocation9 + $0x68] sm:$0xff] %vm2152, %v3694
      %3739 = vst.msk [vmem:[#allocation9 + $0x78] sm:$0xff] %vm2152, %v3696
      %3740 = vst.msk [vmem:[#allocation9 + $0x88] sm:$0xff] %vm2152, %v3698
      %3741 = vst.msk [vmem:[#allocation9 + $0x98] sm:$0xff] %vm2152, %v3700
      %3742 = vst.msk [vmem:[#allocation9 + $0xa8] sm:$0xff] %vm2152, %v3702
      %3743 = vst.msk [vmem:[#allocation9 + $0xb8] sm:$0xff] %vm2152, %v3704
      %3744 = vst.msk [vmem:[#allocation9 + $0xc8] sm:$0xff] %vm2152, %v3706
      %3745 = vst.msk [vmem:[#allocation9 + $0xd8] sm:$0xff] %vm2152, %v3708
      %3746 = vst.msk [vmem:[#allocation9 + $0xe8] sm:$0xff] %vm2152, %v3710
      %3747 = vst.msk [vmem:[#allocation9 + $0xf8] sm:$0xff] %vm2152, %v3712
      %3748 = vst.msk [vmem:[#allocation9 + $0x108] sm:$0xff] %vm2152, %v3714
      %v3749 = vld [vmem:[#allocation9] sm:$0xff]
      %v3750 = vld [vmem:[#allocation9 + $0x8] sm:$0xff]
      %v3751 = vld [vmem:[#allocation9 + $0x10] sm:$0xff]
      %v3752 = vld [vmem:[#allocation9 + $0x18] sm:$0xff]
      %v3753 = vld [vmem:[#allocation9 + $0x20] sm:$0xff]
      %v3754 = vld [vmem:[#allocation9 + $0x28] sm:$0xff]
      %v3755 = vld [vmem:[#allocation9 + $0x30] sm:$0xff]
      %v3756 = vld [vmem:[#allocation9 + $0x38] sm:$0xff]
      %v3757 = vld [vmem:[#allocation9 + $0x40] sm:$0xff]
      %v3758 = vld [vmem:[#allocation9 + $0x48] sm:$0xff]
      %v3759 = vld [vmem:[#allocation9 + $0x50] sm:$0xff]
      %v3760 = vld [vmem:[#allocation9 + $0x58] sm:$0xff]
      %v3761 = vld [vmem:[#allocation9 + $0x60] sm:$0xff]
      %v3762 = vld [vmem:[#allocation9 + $0x68] sm:$0xff]
      %v3763 = vld [vmem:[#allocation9 + $0x70] sm:$0xff]
      %v3764 = vld [vmem:[#allocation9 + $0x78] sm:$0xff]
      %v3765 = vld [vmem:[#allocation9 + $0x80] sm:$0xff]
      %v3766 = vld [vmem:[#allocation9 + $0x88] sm:$0xff]
      %v3767 = vld [vmem:[#allocation9 + $0x90] sm:$0xff]
      %v3768 = vld [vmem:[#allocation9 + $0x98] sm:$0xff]
      %v3769 = vld [vmem:[#allocation9 + $0xa0] sm:$0xff]
      %v3770 = vld [vmem:[#allocation9 + $0xa8] sm:$0xff]
      %v3771 = vld [vmem:[#allocation9 + $0xb0] sm:$0xff]
      %v3772 = vld [vmem:[#allocation9 + $0xb8] sm:$0xff]
      %v3773 = vld [vmem:[#allocation9 + $0xc0] sm:$0xff]
      %v3774 = vld [vmem:[#allocation9 + $0xc8] sm:$0xff]
      %v3775 = vld [vmem:[#allocation9 + $0xd0] sm:$0xff]
      %v3776 = vld [vmem:[#allocation9 + $0xd8] sm:$0xff]
      %v3777 = vld [vmem:[#allocation9 + $0xe0] sm:$0xff]
      %v3778 = vld [vmem:[#allocation9 + $0xe8] sm:$0xff]
      %v3779 = vld [vmem:[#allocation9 + $0xf0] sm:$0xff]
      %v3780 = vld [vmem:[#allocation9 + $0xf8] sm:$0xff]
      %v3781 = vld [vmem:[#allocation9 + $0x100] sm:$0xff]
      %v3782 = vld [vmem:[#allocation9 + $0x108] sm:$0xff]
      %v3783 = vld [vmem:[%s7] sm:$0xff]
      %v3784 = vld [vmem:[%s7 + $0x8] sm:$0xff]
      %v3785 = vld [vmem:[%s7 + $0x10] sm:$0xff]
      %v3786 = vld [vmem:[%s7 + $0x18] sm:$0xff]
      %v3787 = vld [vmem:[%s7 + $0x20] sm:$0xff]
      %v3788 = vld [vmem:[%s7 + $0x28] sm:$0xff]
      %v3789 = vld [vmem:[%s7 + $0x30] sm:$0xff]
      %v3790 = vld [vmem:[%s7 + $0x38] sm:$0xff]
      %v3791 = vld [vmem:[%s7 + $0x40] sm:$0xff]
      %v3792 = vld [vmem:[%s7 + $0x48] sm:$0xff]
      %v3793 = vld [vmem:[%s7 + $0x50] sm:$0xff]
      %v3794 = vld [vmem:[%s7 + $0x58] sm:$0xff]
      %v3795 = vld [vmem:[%s7 + $0x60] sm:$0xff]
      %v3796 = vld [vmem:[%s7 + $0x68] sm:$0xff]
      %v3797 = vld [vmem:[%s7 + $0x70] sm:$0xff]
      %v3798 = vld [vmem:[%s7 + $0x78] sm:$0xff]
      %v3799 = vld [vmem:[%s7 + $0x80] sm:$0xff]
      %v3800 = vld [vmem:[%s7 + $0x88] sm:$0xff]
      %v3801 = vld [vmem:[%s7 + $0x90] sm:$0xff]
      %v3802 = vld [vmem:[%s7 + $0x98] sm:$0xff]
      %v3803 = vld [vmem:[%s7 + $0xa0] sm:$0xff]
      %v3804 = vld [vmem:[%s7 + $0xa8] sm:$0xff]
      %v3805 = vld [vmem:[%s7 + $0xb0] sm:$0xff]
      %v3806 = vld [vmem:[%s7 + $0xb8] sm:$0xff]
      %v3807 = vld [vmem:[%s7 + $0xc0] sm:$0xff]
      %v3808 = vld [vmem:[%s7 + $0xc8] sm:$0xff]
      %v3809 = vld [vmem:[%s7 + $0xd0] sm:$0xff]
      %v3810 = vld [vmem:[%s7 + $0xd8] sm:$0xff]
      %v3811 = vld [vmem:[%s7 + $0xe0] sm:$0xff]
      %v3812 = vld [vmem:[%s7 + $0xe8] sm:$0xff]
      %v3813 = vld [vmem:[%s8] sm:$0x1]
      %v3815 = vlaneseq
      %v3816 = vshrl.u32 %v3815, 7
      %v3817 = vsub.s32 0, %v3816
      %v3818 = vrot.slane %v3813, %v3817
      %vm3820 = vcmask 916480
      %v3822 = vsel %vm3820, %v3750, 0
      %v3825 = vsel %vm3820, %v3752, 0
      %v3828 = vsel %vm3820, %v3754, 0
      %v3831 = vsel %vm3820, %v3756, 0
      %v3834 = vsel %vm3820, %v3758, 0
      %v3837 = vsel %vm3820, %v3760, 0
      %v3840 = vsel %vm3820, %v3762, 0
      %v3843 = vsel %vm3820, %v3764, 0
      %v3846 = vsel %vm3820, %v3766, 0
      %v3849 = vsel %vm3820, %v3768, 0
      %v3852 = vsel %vm3820, %v3770, 0
      %v3855 = vsel %vm3820, %v3772, 0
      %v3858 = vsel %vm3820, %v3774, 0
      %v3861 = vsel %vm3820, %v3776, 0
      %v3864 = vsel %vm3820, %v3778, 0
      %v3867 = vsel %vm3820, %v3780, 0
      %v3870 = vsel %vm3820, %v3782, 0
      %3872 = vmatprep.subr.mxu0 0.0
      %3873 = vmatpush1.msra.mxu0 %v3783
      %3874 = vmatprep.subr.mxu0 0.0
      %3875 = vmatpush1.msra.mxu0 %v3784
      %3876 = vmatprep.subr.mxu0 0.0
      %3877 = vmatpush1.msra.mxu0 %v3785
      %3878 = vmatprep.subr.mxu0 0.0
      %3879 = vmatpush1.msra.mxu0 %v3786
      %3880 = vmatprep.subr.mxu0 0.0
      %3881 = vmatpush1.msra.mxu0 %v3787
      %3882 = vmatprep.subr.mxu0 0.0
      %3883 = vmatpush1.msra.mxu0 %v3788
      %3884 = vmatprep.subr.mxu0 0.0
      %3885 = vmatpush1.msra.mxu0 %v3789
      %3886 = vmatprep.subr.mxu0 0.0
      %3887 = vmatpush1.msra.mxu0 %v3790
      %3888 = vmatprep.subr.mxu0 0.0
      %3889 = vmatpush1.msra.mxu0 %v3791
      %3890 = vmatprep.subr.mxu0 0.0
      %3891 = vmatpush1.msra.mxu0 %v3792
      %3892 = vmatprep.subr.mxu0 0.0
      %3893 = vmatpush1.msra.mxu0 %v3793
      %3894 = vmatprep.subr.mxu0 0.0
      %3895 = vmatpush1.msra.mxu0 %v3794
      %3896 = vmatprep.subr.mxu0 0.0
      %3897 = vmatpush1.msra.mxu0 %v3795
      %3898 = vmatprep.subr.mxu0 0.0
      %3899 = vmatpush1.msra.mxu0 %v3796
      %3900 = vmatprep.subr.mxu0 0.0
      %3901 = vmatpush1.msra.mxu0 %v3797
      %3902 = vmatprep.subr.mxu0 0.0
      %3903 = vmatpush1.msra.mxu0 %v3798
      %3904 = vmatprep.subr.mxu0 0.0
      %3905 = vmatpush1.msra.mxu0 %v3799
      %3906 = vmatprep.subr.mxu0 0.0
      %3907 = vmatpush1.msra.mxu0 %v3800
      %3908 = vmatprep.subr.mxu0 0.0
      %3909 = vmatpush1.msra.mxu0 %v3801
      %3910 = vmatprep.subr.mxu0 0.0
      %3911 = vmatpush1.msra.mxu0 %v3802
      %3912 = vmatprep.subr.mxu0 0.0
      %3913 = vmatpush1.msra.mxu0 %v3803
      %3914 = vmatprep.subr.mxu0 0.0
      %3915 = vmatpush1.msra.mxu0 %v3804
      %3916 = vmatprep.subr.mxu0 0.0
      %3917 = vmatpush1.msra.mxu0 %v3805
      %3918 = vmatprep.subr.mxu0 0.0
      %3919 = vmatpush1.msra.mxu0 %v3806
      %3920 = vmatprep.subr.mxu0 0.0
      %3921 = vmatpush1.msra.mxu0 %v3807
      %3922 = vmatprep.subr.mxu0 0.0
      %3923 = vmatpush1.msra.mxu0 %v3808
      %3924 = vmatprep.subr.mxu0 0.0
      %3925 = vmatpush1.msra.mxu0 %v3809
      %3926 = vmatprep.subr.mxu0 0.0
      %3927 = vmatpush1.msra.mxu0 %v3810
      %3928 = vmatprep.subr.mxu0 0.0
      %3929 = vmatpush1.msra.mxu0 %v3811
      %3930 = vmatprep.subr.mxu0 0.0
      %3931 = vmatpush1.msra.mxu0 %v3812
      %3932 = vmatprep.subr.mxu0 0.0
      %3933 = vmatpush1.msra.mxu0 0.0
      %3934 = vmatprep.subr.mxu0 0.0
      %3935 = vmatpush1.msra.mxu0 0.0
      %3936 = vmatprep.mubr.f32.mxu0 %v3822
      %3937 = vmatmul.mubr.f32.gmra.mrb[0].mxu0 %v3749
      %v3938 = vpop.f32.mrb[0].mxu0
      %v3939 = vadd.f32 %v3818, %v3938
      %v3940 = vpop.f32.mrb[0].mxu0
      %3941 = vmatprep.mubr.f32.mxu0 %v3825
      %3942 = vmatmul.mubr.f32.gmra.mrb[0].mxu0 %v3751
      %v3943 = vpop.f32.mrb[0].mxu0
      %v3944 = vadd.f32 %v3818, %v3943
      %v3945 = vpop.f32.mrb[0].mxu0
      %3946 = vmatprep.mubr.f32.mxu0 %v3828
      %3947 = vmatmul.mubr.f32.gmra.mrb[0].mxu0 %v3753
      %v3948 = vpop.f32.mrb[0].mxu0
      %v3949 = vadd.f32 %v3818, %v3948
      %v3950 = vpop.f32.mrb[0].mxu0
      %3951 = vmatprep.mubr.f32.mxu0 %v3831
      %3952 = vmatmul.mubr.f32.gmra.mrb[0].mxu0 %v3755
      %v3953 = vpop.f32.mrb[0].mxu0
      %v3954 = vadd.f32 %v3818, %v3953
      %v3955 = vpop.f32.mrb[0].mxu0
      %3956 = vmatprep.mubr.f32.mxu0 %v3834
      %3957 = vmatmul.mubr.f32.gmra.mrb[0].mxu0 %v3757
      %v3958 = vpop.f32.mrb[0].mxu0
      %v3959 = vadd.f32 %v3818, %v3958
      %v3960 = vpop.f32.mrb[0].mxu0
      %3961 = vmatprep.mubr.f32.mxu0 %v3837
      %3962 = vmatmul.mubr.f32.gmra.mrb[0].mxu0 %v3759
      %v3963 = vpop.f32.mrb[0].mxu0
      %v3964 = vadd.f32 %v3818, %v3963
      %v3965 = vpop.f32.mrb[0].mxu0
      %3966 = vmatprep.mubr.f32.mxu0 %v3840
      %3967 = vmatmul.mubr.f32.gmra.mrb[0].mxu0 %v3761
      %v3968 = vpop.f32.mrb[0].mxu0
      %v3969 = vadd.f32 %v3818, %v3968
      %v3970 = vpop.f32.mrb[0].mxu0
      %3971 = vmatprep.mubr.f32.mxu0 %v3843
      %3972 = vmatmul.mubr.f32.gmra.mrb[0].mxu0 %v3763
      %v3973 = vpop.f32.mrb[0].mxu0
      %v3974 = vadd.f32 %v3818, %v3973
      %v3975 = vpop.f32.mrb[0].mxu0
      %3976 = vmatprep.mubr.f32.mxu0 %v3846
      %3977 = vmatmul.mubr.f32.gmra.mrb[0].mxu0 %v3765
      %v3978 = vpop.f32.mrb[0].mxu0
      %v3979 = vadd.f32 %v3818, %v3978
      %v3980 = vpop.f32.mrb[0].mxu0
      %3981 = vmatprep.mubr.f32.mxu0 %v3849
      %3982 = vmatmul.mubr.f32.gmra.mrb[0].mxu0 %v3767
      %v3983 = vpop.f32.mrb[0].mxu0
      %v3984 = vadd.f32 %v3818, %v3983
      %v3985 = vpop.f32.mrb[0].mxu0
      %3986 = vmatprep.mubr.f32.mxu0 %v3852
      %3987 = vmatmul.mubr.f32.gmra.mrb[0].mxu0 %v3769
      %v3988 = vpop.f32.mrb[0].mxu0
      %v3989 = vadd.f32 %v3818, %v3988
      %v3990 = vpop.f32.mrb[0].mxu0
      %3991 = vmatprep.mubr.f32.mxu0 %v3855
      %3992 = vmatmul.mubr.f32.gmra.mrb[0].mxu0 %v3771
      %v3993 = vpop.f32.mrb[0].mxu0
      %v3994 = vadd.f32 %v3818, %v3993
      %v3995 = vpop.f32.mrb[0].mxu0
      %3996 = vmatprep.mubr.f32.mxu0 %v3858
      %3997 = vmatmul.mubr.f32.gmra.mrb[0].mxu0 %v3773
      %v3998 = vpop.f32.mrb[0].mxu0
      %v3999 = vadd.f32 %v3818, %v3998
      %v4000 = vpop.f32.mrb[0].mxu0
      %4001 = vmatprep.mubr.f32.mxu0 %v3861
      %4002 = vmatmul.mubr.f32.gmra.mrb[0].mxu0 %v3775
      %v4003 = vpop.f32.mrb[0].mxu0
      %v4004 = vadd.f32 %v3818, %v4003
      %v4005 = vpop.f32.mrb[0].mxu0
      %4006 = vmatprep.mubr.f32.mxu0 %v3864
      %4007 = vmatmul.mubr.f32.gmra.mrb[0].mxu0 %v3777
      %v4008 = vpop.f32.mrb[0].mxu0
      %v4009 = vadd.f32 %v3818, %v4008
      %v4010 = vpop.f32.mrb[0].mxu0
      %4011 = vmatprep.mubr.f32.mxu0 %v3867
      %4012 = vmatmul.mubr.f32.gmra.mrb[0].mxu0 %v3779
      %v4013 = vpop.f32.mrb[0].mxu0
      %v4014 = vadd.f32 %v3818, %v4013
      %v4015 = vpop.f32.mrb[0].mxu0
      %4016 = vmatprep.mubr.f32.mxu0 %v3870
      %4017 = vmatmul.mubr.f32.gmra.mrb[0].mxu0 %v3781
      %v4018 = vpop.f32.mrb[0].mxu0
      %v4019 = vadd.f32 %v3818, %v4018
      %v4020 = vpop.f32.mrb[0].mxu0
      %4021 = vdwg.mxu0
      %v4022 = vld [vmem:[%s9] sm:$0xff]
      %v4023 = vld [vmem:[%s9 + $0x8] sm:$0xff]
      %v4024 = vld [vmem:[%s9 + $0x10] sm:$0xff]
      %v4025 = vld [vmem:[%s9 + $0x18] sm:$0xff]
      %v4026 = vld [vmem:[%s9 + $0x20] sm:$0xff]
      %v4027 = vld [vmem:[%s9 + $0x28] sm:$0xff]
      %v4028 = vld [vmem:[%s9 + $0x30] sm:$0xff]
      %v4029 = vld [vmem:[%s9 + $0x38] sm:$0xff]
      %v4030 = vld [vmem:[%s9 + $0x40] sm:$0xff]
      %v4031 = vld [vmem:[%s9 + $0x48] sm:$0xff]
      %v4032 = vld [vmem:[%s9 + $0x50] sm:$0xff]
      %v4033 = vld [vmem:[%s9 + $0x58] sm:$0xff]
      %v4034 = vld [vmem:[%s9 + $0x60] sm:$0xff]
      %v4035 = vld [vmem:[%s9 + $0x68] sm:$0xff]
      %v4036 = vld [vmem:[%s9 + $0x70] sm:$0xff]
      %v4037 = vld [vmem:[%s9 + $0x78] sm:$0xff]
      %v4038 = vld [vmem:[%s9 + $0x80] sm:$0xff]
      %4040 = vset.pattern.permute.xlu0 0
      %4041 = vperm.xlu0 %4040, %v4022
      %v4042 = vpop.permute.xlu0 %4041
      %4045 = vset.pattern.permute.xlu0 0
      %4046 = vperm.xlu0 %4045, %v4023
      %v4047 = vpop.permute.xlu0 %4046
      %4050 = vset.pattern.permute.xlu0 0
      %4051 = vperm.xlu0 %4050, %v4024
      %v4052 = vpop.permute.xlu0 %4051
      %4055 = vset.pattern.permute.xlu0 0
      %4056 = vperm.xlu0 %4055, %v4025
      %v4057 = vpop.permute.xlu0 %4056
      %4060 = vset.pattern.permute.xlu0 0
      %4061 = vperm.xlu0 %4060, %v4026
      %v4062 = vpop.permute.xlu0 %4061
      %4065 = vset.pattern.permute.xlu0 0
      %4066 = vperm.xlu0 %4065, %v4027
      %v4067 = vpop.permute.xlu0 %4066
      %4070 = vset.pattern.permute.xlu0 0
      %4071 = vperm.xlu0 %4070, %v4028
      %v4072 = vpop.permute.xlu0 %4071
      %4075 = vset.pattern.permute.xlu0 0
      %4076 = vperm.xlu0 %4075, %v4029
      %v4077 = vpop.permute.xlu0 %4076
      %4080 = vset.pattern.permute.xlu0 0
      %4081 = vperm.xlu0 %4080, %v4030
      %v4082 = vpop.permute.xlu0 %4081
      %4085 = vset.pattern.permute.xlu0 0
      %4086 = vperm.xlu0 %4085, %v4031
      %v4087 = vpop.permute.xlu0 %4086
      %4090 = vset.pattern.permute.xlu0 0
      %4091 = vperm.xlu0 %4090, %v4032
      %v4092 = vpop.permute.xlu0 %4091
      %4095 = vset.pattern.permute.xlu0 0
      %4096 = vperm.xlu0 %4095, %v4033
      %v4097 = vpop.permute.xlu0 %4096
      %4100 = vset.pattern.permute.xlu0 0
      %4101 = vperm.xlu0 %4100, %v4034
      %v4102 = vpop.permute.xlu0 %4101
      %4105 = vset.pattern.permute.xlu0 0
      %4106 = vperm.xlu0 %4105, %v4035
      %v4107 = vpop.permute.xlu0 %4106
      %4110 = vset.pattern.permute.xlu0 0
      %4111 = vperm.xlu0 %4110, %v4036
      %v4112 = vpop.permute.xlu0 %4111
      %4115 = vset.pattern.permute.xlu0 0
      %4116 = vperm.xlu0 %4115, %v4037
      %v4117 = vpop.permute.xlu0 %4116
      %4120 = vset.pattern.permute.xlu0 0
      %4121 = vperm.xlu0 %4120, %v4038
      %v4122 = vpop.permute.xlu0 %4121
      %v4124 = vmul.f32 %v3939, %v4042
      %v4125 = vmul.f32 %v3944, %v4047
      %v4126 = vmul.f32 %v3949, %v4052
      %v4127 = vmul.f32 %v3954, %v4057
      %v4128 = vmul.f32 %v3959, %v4062
      %v4129 = vmul.f32 %v3964, %v4067
      %v4130 = vmul.f32 %v3969, %v4072
      %v4131 = vmul.f32 %v3974, %v4077
      %v4132 = vmul.f32 %v3979, %v4082
      %v4133 = vmul.f32 %v3984, %v4087
      %v4134 = vmul.f32 %v3989, %v4092
      %v4135 = vmul.f32 %v3994, %v4097
      %v4136 = vmul.f32 %v3999, %v4102
      %v4137 = vmul.f32 %v4004, %v4107
      %v4138 = vmul.f32 %v4009, %v4112
      %v4139 = vmul.f32 %v4014, %v4117
      %v4140 = vmul.f32 %v4019, %v4122
      %vm4141 = vcmask 15360
      %4142 = vst.msk [vmem:[%s359] sm:$0xff] %vm4141, %v4124
      %4143 = vst.msk [vmem:[%s359 + $0x8] sm:$0xff] %vm4141, %v4125
      %4144 = vst.msk [vmem:[%s359 + $0x10] sm:$0xff] %vm4141, %v4126
      %4145 = vst.msk [vmem:[%s359 + $0x18] sm:$0xff] %vm4141, %v4127
      %4146 = vst.msk [vmem:[%s359 + $0x20] sm:$0xff] %vm4141, %v4128
      %4147 = vst.msk [vmem:[%s359 + $0x28] sm:$0xff] %vm4141, %v4129
      %4148 = vst.msk [vmem:[%s359 + $0x30] sm:$0xff] %vm4141, %v4130
      %4149 = vst.msk [vmem:[%s359 + $0x38] sm:$0xff] %vm4141, %v4131
      %4150 = vst.msk [vmem:[%s359 + $0x40] sm:$0xff] %vm4141, %v4132
      %4151 = vst.msk [vmem:[%s359 + $0x48] sm:$0xff] %vm4141, %v4133
      %4152 = vst.msk [vmem:[%s359 + $0x50] sm:$0xff] %vm4141, %v4134
      %4153 = vst.msk [vmem:[%s359 + $0x58] sm:$0xff] %vm4141, %v4135
      %4154 = vst.msk [vmem:[%s359 + $0x60] sm:$0xff] %vm4141, %v4136
      %4155 = vst.msk [vmem:[%s359 + $0x68] sm:$0xff] %vm4141, %v4137
      %4156 = vst.msk [vmem:[%s359 + $0x70] sm:$0xff] %vm4141, %v4138
      %4157 = vst.msk [vmem:[%s359 + $0x78] sm:$0xff] %vm4141, %v4139
      %4158 = vst.msk [vmem:[%s359 + $0x80] sm:$0xff] %vm4141, %v4140
      %p4159 = scmp.lt.s32.totalorder %s21, 1
      %s4160 = scalar_select %p4159, %s21, 1
      %s4161 = smul.addr %s4160, 17
      %s4162 = smul.addr %s4161, 8
      %s4163 = scalar_lea.vmem %s10, %s4162
      // Predicated region
      $region61: #{degli_ed_forward.1} parent=59 // pred_check
        %p4164 = pneg %p254
      $region62: #{degli_ed_forward.1} parent=59 // pred_check_branch
        %4166 = sbr.rel (%p4164) target = $region64
      $region63: #{degli_ed_forward.1} parent=59 // pred_region
        _
      $region64: #{degli_ed_forward.1} parent=59 // pred_fallthru
        _
    $region60: #{degli_ed_forward.1} parent=5 // pred_fallthru
      _
    %p4167 = scmp.le.s32.totalorder 2, %s16
    // Predicated region
    $region65: #{degli_ed_forward.1} parent=5 // pred_check
      %p4168 = pneg %p4167
    $region66: #{degli_ed_forward.1} parent=5 // pred_check_branch
      %4170 = sbr.rel (%p4168) target = $region68
    $region67: #{degli_ed_forward.1} parent=5 // pred_region
      %s4171 = ssub.s32 %s16, 2
      // Predicated region
      $region69: #{degli_ed_forward.1} parent=67 // pred_check
        %p4172 = pneg %p260
      $region70: #{degli_ed_forward.1} parent=67 // pred_check_branch
        %4174 = sbr.rel (%p4172) target = $region72
      $region71: #{degli_ed_forward.1} parent=67 // pred_region
        %p4175 = scmp.lt.s32.totalorder %s22, 1
        %s4176 = scalar_select %p4175, %s22, 1
        %s4177 = smul.addr %s4176, 17
        %s4178 = smul.addr %s4177, 8
        %s4179 = scalar_lea.vmem %s10, %s4178
      $region72: #{degli_ed_forward.1} parent=67 // pred_fallthru
        _
    $region68: #{degli_ed_forward.1} parent=5 // pred_fallthru
      _
  $region6: #{degli_ed_forward.1} parent=0 // loop_footer
    %s20 = sadd.s32 1, %s16
  $region7: #{degli_ed_forward.1} parent=0 // loop_footer_branch
    %15 = sbr.rel target = $region3
  $region8: #{degli_ed_forward.1} parent=0 // loop_exit
    _

</llo_original>
